<compile_context>
chip_gen: v6e
topology: v6e:2x2x1
jax: 0.10.0
libtpu: 0.0.40
codegen_flags: <defaults>
</compile_context>

<pallas_src>
import jax
import jax.numpy as jnp
from jax.experimental import pallas as pl
from jax.experimental.pallas import tpu as pltpu


def _round_up(v, m):
    return (v + m - 1) // m * m


def _default_vmem_limit():
    try:
        kind = jax.devices()[0].device_kind.lower()
    except Exception:  # pragma: no cover
        kind = ""
    if "v7" in kind:
        return 48 * 1024 * 1024   # v7x: 64 MiB physical VMEM, leave headroom
    return 96 * 1024 * 1024       # v5e / v6e: 128 MiB physical VMEM


def _bottleneck_kernel(x_ref, w1_ref, b1_ref, w2c_ref, b2_ref, w3_ref, b3_ref,
                       o_ref, pad_ref):
    """Fused bottleneck for a block of Nb images; everything stays in VMEM.

    x_ref  : (Nb, H, W, Cp)        bf16 input (channels padded to Cp, mult. 128)
    w1_ref : (Cp, Pp)              bf16 1x1 conv weight (BN1 scale folded in)
    w2c_ref: (3, 3*Pp, Pp)         bf16 3x3 conv weight, per-kx [ky-stacked] rows
    w3_ref : (Pp, Cp)              bf16 1x1 conv weight (BN3 scale folded in)
    b*_ref : (1, C)                f32 folded BatchNorm biases
    o_ref  : (Nb, H, W, Cp)        bf16 output (lane-dense)
    pad_ref: (Nb, H+2, Wpad, Pp)   bf16 scratch; 3x3 interior at columns [8, 8+W)
    """
    Nb, H, W, Cp = x_ref.shape
    Pp = w1_ref.shape[1]
    Wpad = pad_ref.shape[2]
    M = Nb * H * W

    # ---- conv1 (1x1, BN1 scale folded into w1) + bias + relu ----
    x_bf = x_ref[...].reshape(M, Cp)                      # bf16, no f32 copy kept
    h1 = jnp.dot(x_bf, w1_ref[...], preferred_element_type=jnp.float32)
    h1 = jnp.maximum(h1 + b1_ref[...], 0.0)

    # ---- conv2 (3x3, stride=1, pad=1) + bias + relu ----
    # bf16 zero-padded h1 in VMEM scratch, sublane-aligned layout:
    #   columns [0, 8)        : zero (covers left border at column 7)
    #   columns [8, 8+W)      : h1 interior (aligned store)
    #   columns [8+W, Wpad)   : zero (covers right border at column 8+W)
    # Per-step zeroing is kept (megacore-safe: do NOT gate on program_id==0);
    # the border stores are full-width / block stores, so they are cheap.
    zrow = jnp.zeros((Nb, 1, Wpad, Pp), jnp.bfloat16)
    pad_ref[:, 0:1, :, :] = zrow
    pad_ref[:, H + 1:H + 2, :, :] = zrow
    pad_ref[:, 1:H + 1, 0:8, :] = jnp.zeros((Nb, H, 8, Pp), jnp.bfloat16)
    pad_ref[:, 1:H + 1, 8 + W:Wpad, :] = jnp.zeros(
        (Nb, H, Wpad - (8 + W), Pp), jnp.bfloat16)
    pad_ref[:, 1:H + 1, 8:8 + W, :] = h1.astype(jnp.bfloat16).reshape(Nb, H, W, Pp)

    # Per-kx im2col: one shifted read per kx (offsets 7/8/9; the center tap is
    # aligned), the three ky-shifted slices are free leading-axis views and
    # concatenate along 128-aligned channels, so each kx is a single matmul
    # with contraction width 3*Pp.  Scratch is already bf16 — no casts here.
    acc = None
    for kx in range(3):
        sl = pad_ref[:, :, 7 + kx:7 + kx + W, :]          # (Nb, H+2, W, Pp) bf16
        cat = jnp.concatenate(
            [sl[:, 0:H], sl[:, 1:H + 1], sl[:, 2:H + 2]],
            axis=-1).reshape(M, 3 * Pp)                   # (M, 3*Pp) bf16
        d = jnp.dot(cat, w2c_ref[kx], preferred_element_type=jnp.float32)
        acc = d if acc is None else acc + d
    h2 = jnp.maximum(acc + b2_ref[...], 0.0)

    # ---- conv3 (1x1) + bias + identity residual + relu ----
    h3 = jnp.dot(h2.astype(jnp.bfloat16), w3_ref[...],
                 preferred_element_type=jnp.float32)
    res = x_ref[...].reshape(M, Cp).astype(jnp.float32)   # re-read; f32 for the add
    h3 = h3 + b3_ref[...] + res
    o_ref[...] = jnp.maximum(h3, 0.0).astype(jnp.bfloat16).reshape(Nb, H, W, Cp)


def fold_bn(gamma, beta, running_mean, running_var, eps=1e-5):
    scale = gamma / jnp.sqrt(running_var + eps)
    bias = beta - running_mean * scale
    return scale.reshape(1, -1), bias.reshape(1, -1)


def pack_bottleneck_params(params):
    """Fold BN scales into conv weights, pad channels to 128, cast to bf16."""
    w1, (s1, b1), w2, (s2, b2), w3, (s3, b3) = params
    Cin, P = w1.shape
    Cp = _round_up(Cin, 128)
    Pp = _round_up(P, 128)

    s1f, s2f, s3f = s1.reshape(-1), s2.reshape(-1), s3.reshape(-1)
    w1f = w1 * s1f[None, :]
    w2f = w2 * s2f[None, None, None, :]
    w3f = w3 * s3f[None, :]

    w1p = jnp.zeros((Cp, Pp), jnp.float32).at[:Cin, :P].set(w1f).astype(jnp.bfloat16)
    w3p = jnp.zeros((Pp, Cp), jnp.float32).at[:P, :Cin].set(w3f).astype(jnp.bfloat16)
    w2p = jnp.zeros((3, 3, Pp, Pp), jnp.float32).at[:, :, :P, :P].set(w2f)
    # w2cat[kx] = rows [w2[ky=0,kx]; w2[ky=1,kx]; w2[ky=2,kx]]  -> (3*Pp, Pp)
    w2cat = jnp.transpose(w2p, (1, 0, 2, 3)).reshape(3, 3 * Pp, Pp).astype(jnp.bfloat16)

    b1p = jnp.zeros((1, Pp), jnp.float32).at[:, :P].set(b1.reshape(1, -1))
    b2p = jnp.zeros((1, Pp), jnp.float32).at[:, :P].set(b2.reshape(1, -1))
    b3p = jnp.zeros((1, Cp), jnp.float32).at[:, :Cin].set(b3.reshape(1, -1))
    return (w1p, b1p, w2cat, b2p, w3p, b3p), (Cin, P, Cp, Pp)


def my_bottleneck_pallas_nhwc(x_nhwc_bf16, packed, *, images_per_step=1,
                              vmem_limit_bytes=None):
    """Core entry: x is NHWC, channels already padded to Cp, dtype bf16.

    Use this directly in an NHWC / padded-channel model to avoid any HBM
    round-trips for layout changes at the kernel boundary.
    """
    w1p, b1p, w2cat, b2p, w3p, b3p = packed
    N, H, W, Cp = x_nhwc_bf16.shape
    Pp = w1p.shape[1]
    Nb = images_per_step
    assert N % Nb == 0, "N must be divisible by images_per_step"
    Wpad = _round_up(W, 8) + 16           # 8-col left pad + interior + zero tail
    if vmem_limit_bytes is None:
        vmem_limit_bytes = _default_vmem_limit()

    return pl.pallas_call(
        _bottleneck_kernel,
        out_shape=jax.ShapeDtypeStruct((N, H, W, Cp), jnp.bfloat16),
        grid_spec=pltpu.PrefetchScalarGridSpec(
            num_scalar_prefetch=0,
            grid=(N // Nb,),
            in_specs=[
                pl.BlockSpec((Nb, H, W, Cp), lambda n: (n, 0, 0, 0)),
                pl.BlockSpec((Cp, Pp), lambda n: (0, 0)),
                pl.BlockSpec((1, Pp), lambda n: (0, 0)),
                pl.BlockSpec((3, 3 * Pp, Pp), lambda n: (0, 0, 0)),
                pl.BlockSpec((1, Pp), lambda n: (0, 0)),
                pl.BlockSpec((Pp, Cp), lambda n: (0, 0)),
                pl.BlockSpec((1, Cp), lambda n: (0, 0)),
            ],
            out_specs=pl.BlockSpec((Nb, H, W, Cp), lambda n: (n, 0, 0, 0)),
            scratch_shapes=[pltpu.VMEM((Nb, H + 2, Wpad, Pp), jnp.bfloat16)],
        ),
        compiler_params=pltpu.CompilerParams(
            dimension_semantics=("parallel",),
            vmem_limit_bytes=vmem_limit_bytes,
        ),
    )(x_nhwc_bf16, w1p, b1p, w2cat, b2p, w3p, b3p)


def my_bottleneck_pallas(x_nchw, params, *, images_per_step=1,
                         vmem_limit_bytes=None):
    """PyTorch-layout wrapper: x_nchw (N, Cin, H, W) f32 -> (N, Cin, H, W) f32.

    TODO(synk): keep the surrounding model in NHWC / Cp-padded bf16 end-to-end
    (use my_bottleneck_pallas_nhwc) to avoid these boundary transposes/pads.
    """
    w1, _, _, _, w3, _ = params
    N, Cin, H, W = x_nchw.shape
    P = w1.shape[1]
    # Identity residual path requires stride=1 / no-downsample geometry.
    assert w1.shape[0] == Cin and w3.shape == (P, Cin), \
        "identity residual requires inplanes == planes * expansion"

    packed, (_, _, Cp, _) = pack_bottleneck_params(params)

    # NCHW -> NHWC, pad channels to Cp, cast to bf16 (I/O is half the HBM bytes).
    x = jnp.transpose(x_nchw, (0, 2, 3, 1))
    if Cp != Cin:
        x = jnp.pad(x, ((0, 0), (0, 0), (0, 0), (0, Cp - Cin)))
    x = x.astype(jnp.bfloat16)

    out_nhwc = my_bottleneck_pallas_nhwc(
        x, packed, images_per_step=images_per_step,
        vmem_limit_bytes=vmem_limit_bytes)

    out = out_nhwc[..., :Cin].astype(jnp.float32)
    return jnp.transpose(out, (0, 3, 1, 2))  # -> NCHW


def my_bottleneck_ref(x_nchw, params):
    """Plain-JAX NHWC reference for the same forward pass (f32 everywhere)."""
    w1, (s1, b1), w2, (s2, b2), w3, (s3, b3) = params
    x = jnp.transpose(x_nchw, (0, 2, 3, 1))
    dn = ('NHWC', 'HWIO', 'NHWC')

    h = jax.lax.conv_general_dilated(x, w1[None, None], (1, 1), 'VALID',
                                     dimension_numbers=dn)
    h = jnp.maximum(h * s1 + b1, 0.0)
    h = jax.lax.conv_general_dilated(h, w2, (1, 1), [(1, 1), (1, 1)],
                                     dimension_numbers=dn)
    h = jnp.maximum(h * s2 + b2, 0.0)
    h = jax.lax.conv_general_dilated(h, w3[None, None], (1, 1), 'VALID',
                                     dimension_numbers=dn)
    h = jnp.maximum(h * s3 + b3 + x, 0.0)
    return jnp.transpose(h, (0, 3, 1, 2))


if __name__ == "__main__":
    # Small shapes: planes=8, expansion=4 -> inplanes = 32, spatial 8x8, batch 4.
    N, planes, H, W = 4, 8, 8, 8
    expansion = 4
    inplanes = planes * expansion  # 32 (identity add works w/o downsample)

    key = jax.random.PRNGKey(0)
    ks = jax.random.split(key, 16)

    x = jax.random.normal(ks[0], (N, inplanes, H, W), jnp.float32)

    # Deterministic synthetic parameters (conv weights stored in matmul layout).
    w1 = 0.1 * jax.random.normal(ks[1], (inplanes, planes), jnp.float32)      # 1x1
    w2 = 0.1 * jax.random.normal(ks[2], (3, 3, planes, planes), jnp.float32)  # 3x3 (kh,kw,in,out)
    w3 = 0.1 * jax.random.normal(ks[3], (planes, inplanes), jnp.float32)      # 1x1

    def bn_params(k, c):
        k1, k2, k3, k4 = jax.random.split(k, 4)
        gamma = jax.random.uniform(k1, (c,), jnp.float32, 0.5, 1.5)
        beta = 0.1 * jax.random.normal(k2, (c,), jnp.float32)
        rmean = 0.1 * jax.random.normal(k3, (c,), jnp.float32)
        rvar = jax.random.uniform(k4, (c,), jnp.float32, 0.5, 1.5)
        return fold_bn(gamma, beta, rmean, rvar)

    bn1 = bn_params(ks[4], planes)
    bn2 = bn_params(ks[5], planes)
    bn3 = bn_params(ks[6], inplanes)

    params = (w1, bn1, w2, bn2, w3, bn3)

    # Two images per grid step (amortizes per-step overhead at tiny spatial
    # sizes) while keeping 2 parallel grid steps for v7x's two TensorCores.
    out = my_bottleneck_pallas(x, params, images_per_step=2)
    out = jax.block_until_ready(out)

    ref = my_bottleneck_ref(x, params)
    assert out.shape == (N, inplanes, H, W)
    assert jnp.allclose(out, ref, rtol=5e-2, atol=5e-2), "mismatch vs JAX reference"

    print("KERNEL_OK")
</pallas_src>

<mosaic_0001>
module attributes {stable_mosaic.version = 11 : i64} {
  func.func @_bottleneck_kernel(%arg0: i32, %arg1: memref<2x8x8x128xbf16, #tpu.memory_space<vmem>>, %arg2: memref<128x128xbf16, #tpu.memory_space<vmem>>, %arg3: memref<1x128xf32, #tpu.memory_space<vmem>>, %arg4: memref<3x384x128xbf16, #tpu.memory_space<vmem>>, %arg5: memref<1x128xf32, #tpu.memory_space<vmem>>, %arg6: memref<128x128xbf16, #tpu.memory_space<vmem>>, %arg7: memref<1x128xf32, #tpu.memory_space<vmem>>, %arg8: memref<2x8x8x128xbf16, #tpu.memory_space<vmem>>, %arg9: memref<2x10x24x128xbf16, #tpu.memory_space<vmem>>) attributes {dimension_semantics = [#tpu.dimension_semantics<parallel>], iteration_bounds = array<i64: 2>, scalar_prefetch = 0 : i64, scratch_operands = 1 : i64, tpu.core_type = #tpu.core_type<tc>, window_params = [{transform_indices = @transform_0, window_bounds = array<i64: 2, 8, 8, 128>}, {pipeline_mode = #tpu.pipeline_mode<synchronous>, transform_indices = @transform_1, window_bounds = array<i64: 128, 128>}, {pipeline_mode = #tpu.pipeline_mode<synchronous>, transform_indices = @transform_2, window_bounds = array<i64: 1, 128>}, {pipeline_mode = #tpu.pipeline_mode<synchronous>, transform_indices = @transform_3, window_bounds = array<i64: 3, 384, 128>}, {pipeline_mode = #tpu.pipeline_mode<synchronous>, transform_indices = @transform_4, window_bounds = array<i64: 1, 128>}, {pipeline_mode = #tpu.pipeline_mode<synchronous>, transform_indices = @transform_5, window_bounds = array<i64: 128, 128>}, {pipeline_mode = #tpu.pipeline_mode<synchronous>, transform_indices = @transform_6, window_bounds = array<i64: 1, 128>}, {transform_indices = @transform_7, window_bounds = array<i64: 2, 8, 8, 128>}]} {
    %c0 = arith.constant 0 : index
    %c0_0 = arith.constant 0 : index
    %c0_1 = arith.constant 0 : index
    %c0_2 = arith.constant 0 : index
    %0 = vector.load %arg1[%c0, %c0_0, %c0_1, %c0_2] : memref<2x8x8x128xbf16, #tpu.memory_space<vmem>>, vector<2x8x8x128xbf16>
    %1 = vector.shape_cast %0 : vector<2x8x8x128xbf16> to vector<128x128xbf16>
    %c0_3 = arith.constant 0 : index
    %c0_4 = arith.constant 0 : index
    %2 = vector.load %arg2[%c0_3, %c0_4] : memref<128x128xbf16, #tpu.memory_space<vmem>>, vector<128x128xbf16>
    %cst = arith.constant dense<0.000000e+00> : vector<128x128xf32>
    %3 = tpu.matmul %1, %2, %cst {dimension_numbers = #tpu.dot_dimension_numbers<[1], [0], [0], [1], [0, 0, 1, 1], [], []>} : vector<128x128xbf16>, vector<128x128xbf16>, vector<128x128xf32> -> vector<128x128xf32>
    %c0_5 = arith.constant 0 : index
    %c0_6 = arith.constant 0 : index
    %4 = vector.load %arg3[%c0_5, %c0_6] : memref<1x128xf32, #tpu.memory_space<vmem>>, vector<1x128xf32>
    %5 = vector.broadcast %4 : vector<1x128xf32> to vector<128x128xf32>
    %6 = arith.addf %3, %5 : vector<128x128xf32>
    %cst_7 = arith.constant 0.000000e+00 : f32
    %7 = vector.broadcast %cst_7 : f32 to vector<128x128xf32>
    %8 = arith.maximumf %6, %7 : vector<128x128xf32>
    %cst_8 = arith.constant 0.000000e+00 : bf16
    %9 = vector.broadcast %cst_8 : bf16 to vector<2x1x24x128xbf16>
    %c0_9 = arith.constant 0 : index
    %c0_10 = arith.constant 0 : index
    %c0_11 = arith.constant 0 : index
    %c0_12 = arith.constant 0 : index
    %10 = vector.load %arg9[%c0_9, %c0_10, %c0_11, %c0_12] : memref<2x10x24x128xbf16, #tpu.memory_space<vmem>>, vector<2x1x24x128xbf16>
    tpu.vector_store %arg9[%c0_9, %c0_10, %c0_11, %c0_12], %9 {strides = array<i32>} : memref<2x10x24x128xbf16, #tpu.memory_space<vmem>>, vector<2x1x24x128xbf16>,
    %c0_13 = arith.constant 0 : index
    %c9 = arith.constant 9 : index
    %c0_14 = arith.constant 0 : index
    %c0_15 = arith.constant 0 : index
    %11 = vector.load %arg9[%c0_13, %c9, %c0_14, %c0_15] : memref<2x10x24x128xbf16, #tpu.memory_space<vmem>>, vector<2x1x24x128xbf16>
    tpu.vector_store %arg9[%c0_13, %c9, %c0_14, %c0_15], %9 {strides = array<i32>} : memref<2x10x24x128xbf16, #tpu.memory_space<vmem>>, vector<2x1x24x128xbf16>,
    %cst_16 = arith.constant 0.000000e+00 : bf16
    %12 = vector.broadcast %cst_16 : bf16 to vector<2x8x8x128xbf16>
    %c0_17 = arith.constant 0 : index
    %c1 = arith.constant 1 : index
    %c0_18 = arith.constant 0 : index
    %c0_19 = arith.constant 0 : index
    %13 = vector.load %arg9[%c0_17, %c1, %c0_18, %c0_19] : memref<2x10x24x128xbf16, #tpu.memory_space<vmem>>, vector<2x8x8x128xbf16>
    tpu.vector_store %arg9[%c0_17, %c1, %c0_18, %c0_19], %12 {strides = array<i32>} : memref<2x10x24x128xbf16, #tpu.memory_space<vmem>>, vector<2x8x8x128xbf16>,
    %cst_20 = arith.constant 0.000000e+00 : bf16
    %14 = vector.broadcast %cst_20 : bf16 to vector<2x8x8x128xbf16>
    %c0_21 = arith.constant 0 : index
    %c1_22 = arith.constant 1 : index
    %c16 = arith.constant 16 : index
    %c0_23 = arith.constant 0 : index
    %15 = vector.load %arg9[%c0_21, %c1_22, %c16, %c0_23] : memref<2x10x24x128xbf16, #tpu.memory_space<vmem>>, vector<2x8x8x128xbf16>
    tpu.vector_store %arg9[%c0_21, %c1_22, %c16, %c0_23], %14 {strides = array<i32>} : memref<2x10x24x128xbf16, #tpu.memory_space<vmem>>, vector<2x8x8x128xbf16>,
    %16 = arith.truncf %8 : vector<128x128xf32> to vector<128x128xbf16>
    %17 = vector.shape_cast %16 : vector<128x128xbf16> to vector<2x8x8x128xbf16>
    %c0_24 = arith.constant 0 : index
    %c1_25 = arith.constant 1 : index
    %c8 = arith.constant 8 : index
    %c0_26 = arith.constant 0 : index
    %18 = vector.load %arg9[%c0_24, %c1_25, %c8, %c0_26] : memref<2x10x24x128xbf16, #tpu.memory_space<vmem>>, vector<2x8x8x128xbf16>
    tpu.vector_store %arg9[%c0_24, %c1_25, %c8, %c0_26], %17 {strides = array<i32>} : memref<2x10x24x128xbf16, #tpu.memory_space<vmem>>, vector<2x8x8x128xbf16>,
    %c0_27 = arith.constant 0 : index
    %c0_28 = arith.constant 0 : index
    %c7 = arith.constant 7 : index
    %c0_29 = arith.constant 0 : index
    %19 = vector.load %arg9[%c0_27, %c0_28, %c7, %c0_29] : memref<2x10x24x128xbf16, #tpu.memory_space<vmem>>, vector<2x10x8x128xbf16>
    %20 = vector.extract_strided_slice %19 {offsets = [0, 0, 0, 0], sizes = [2, 8, 8, 128], strides = [1, 1, 1, 1]} : vector<2x10x8x128xbf16> to vector<2x8x8x128xbf16>
    %21 = vector.extract_strided_slice %19 {offsets = [0, 1, 0, 0], sizes = [2, 8, 8, 128], strides = [1, 1, 1, 1]} : vector<2x10x8x128xbf16> to vector<2x8x8x128xbf16>
    %22 = vector.extract_strided_slice %19 {offsets = [0, 2, 0, 0], sizes = [2, 8, 8, 128], strides = [1, 1, 1, 1]} : vector<2x10x8x128xbf16> to vector<2x8x8x128xbf16>
    %23 = tpu.concatenate %20, %21, %22 in 3 : vector<2x8x8x128xbf16>, vector<2x8x8x128xbf16>, vector<2x8x8x128xbf16> -> vector<2x8x8x384xbf16>
    %24 = vector.shape_cast %23 : vector<2x8x8x384xbf16> to vector<128x384xbf16>
    %c0_30 = arith.constant 0 : index
    %c0_31 = arith.constant 0 : index
    %c0_32 = arith.constant 0 : index
    %25 = vector.load %arg4[%c0_30, %c0_31, %c0_32] : memref<3x384x128xbf16, #tpu.memory_space<vmem>>, vector<1x384x128xbf16>
    %26 = vector.shape_cast %25 : vector<1x384x128xbf16> to vector<384x128xbf16>
    %cst_33 = arith.constant dense<0.000000e+00> : vector<128x128xf32>
    %27 = tpu.matmul %24, %26, %cst_33 {dimension_numbers = #tpu.dot_dimension_numbers<[1], [0], [0], [1], [0, 0, 1, 1], [], []>} : vector<128x384xbf16>, vector<384x128xbf16>, vector<128x128xf32> -> vector<128x128xf32>
    %c0_34 = arith.constant 0 : index
    %c0_35 = arith.constant 0 : index
    %c8_36 = arith.constant 8 : index
    %c0_37 = arith.constant 0 : index
    %28 = vector.load %arg9[%c0_34, %c0_35, %c8_36, %c0_37] : memref<2x10x24x128xbf16, #tpu.memory_space<vmem>>, vector<2x10x8x128xbf16>
    %29 = vector.extract_strided_slice %28 {offsets = [0, 0, 0, 0], sizes = [2, 8, 8, 128], strides = [1, 1, 1, 1]} : vector<2x10x8x128xbf16> to vector<2x8x8x128xbf16>
    %30 = vector.extract_strided_slice %28 {offsets = [0, 1, 0, 0], sizes = [2, 8, 8, 128], strides = [1, 1, 1, 1]} : vector<2x10x8x128xbf16> to vector<2x8x8x128xbf16>
    %31 = vector.extract_strided_slice %28 {offsets = [0, 2, 0, 0], sizes = [2, 8, 8, 128], strides = [1, 1, 1, 1]} : vector<2x10x8x128xbf16> to vector<2x8x8x128xbf16>
    %32 = tpu.concatenate %29, %30, %31 in 3 : vector<2x8x8x128xbf16>, vector<2x8x8x128xbf16>, vector<2x8x8x128xbf16> -> vector<2x8x8x384xbf16>
    %33 = vector.shape_cast %32 : vector<2x8x8x384xbf16> to vector<128x384xbf16>
    %c1_38 = arith.constant 1 : index
    %c0_39 = arith.constant 0 : index
    %c0_40 = arith.constant 0 : index
    %34 = vector.load %arg4[%c1_38, %c0_39, %c0_40] : memref<3x384x128xbf16, #tpu.memory_space<vmem>>, vector<1x384x128xbf16>
    %35 = vector.shape_cast %34 : vector<1x384x128xbf16> to vector<384x128xbf16>
    %cst_41 = arith.constant dense<0.000000e+00> : vector<128x128xf32>
    %36 = tpu.matmul %33, %35, %cst_41 {dimension_numbers = #tpu.dot_dimension_numbers<[1], [0], [0], [1], [0, 0, 1, 1], [], []>} : vector<128x384xbf16>, vector<384x128xbf16>, vector<128x128xf32> -> vector<128x128xf32>
    %37 = arith.addf %27, %36 : vector<128x128xf32>
    %c0_42 = arith.constant 0 : index
    %c0_43 = arith.constant 0 : index
    %c9_44 = arith.constant 9 : index
    %c0_45 = arith.constant 0 : index
    %38 = vector.load %arg9[%c0_42, %c0_43, %c9_44, %c0_45] : memref<2x10x24x128xbf16, #tpu.memory_space<vmem>>, vector<2x10x8x128xbf16>
    %39 = vector.extract_strided_slice %38 {offsets = [0, 0, 0, 0], sizes = [2, 8, 8, 128], strides = [1, 1, 1, 1]} : vector<2x10x8x128xbf16> to vector<2x8x8x128xbf16>
    %40 = vector.extract_strided_slice %38 {offsets = [0, 1, 0, 0], sizes = [2, 8, 8, 128], strides = [1, 1, 1, 1]} : vector<2x10x8x128xbf16> to vector<2x8x8x128xbf16>
    %41 = vector.extract_strided_slice %38 {offsets = [0, 2, 0, 0], sizes = [2, 8, 8, 128], strides = [1, 1, 1, 1]} : vector<2x10x8x128xbf16> to vector<2x8x8x128xbf16>
    %42 = tpu.concatenate %39, %40, %41 in 3 : vector<2x8x8x128xbf16>, vector<2x8x8x128xbf16>, vector<2x8x8x128xbf16> -> vector<2x8x8x384xbf16>
    %43 = vector.shape_cast %42 : vector<2x8x8x384xbf16> to vector<128x384xbf16>
    %c2 = arith.constant 2 : index
    %c0_46 = arith.constant 0 : index
    %c0_47 = arith.constant 0 : index
    %44 = vector.load %arg4[%c2, %c0_46, %c0_47] : memref<3x384x128xbf16, #tpu.memory_space<vmem>>, vector<1x384x128xbf16>
    %45 = vector.shape_cast %44 : vector<1x384x128xbf16> to vector<384x128xbf16>
    %cst_48 = arith.constant dense<0.000000e+00> : vector<128x128xf32>
    %46 = tpu.matmul %43, %45, %cst_48 {dimension_numbers = #tpu.dot_dimension_numbers<[1], [0], [0], [1], [0, 0, 1, 1], [], []>} : vector<128x384xbf16>, vector<384x128xbf16>, vector<128x128xf32> -> vector<128x128xf32>
    %47 = arith.addf %37, %46 : vector<128x128xf32>
    %c0_49 = arith.constant 0 : index
    %c0_50 = arith.constant 0 : index
    %48 = vector.load %arg5[%c0_49, %c0_50] : memref<1x128xf32, #tpu.memory_space<vmem>>, vector<1x128xf32>
    %49 = vector.broadcast %48 : vector<1x128xf32> to vector<128x128xf32>
    %50 = arith.addf %47, %49 : vector<128x128xf32>
    %cst_51 = arith.constant 0.000000e+00 : f32
    %51 = vector.broadcast %cst_51 : f32 to vector<128x128xf32>
    %52 = arith.maximumf %50, %51 : vector<128x128xf32>
    %53 = arith.truncf %52 : vector<128x128xf32> to vector<128x128xbf16>
    %c0_52 = arith.constant 0 : index
    %c0_53 = arith.constant 0 : index
    %54 = vector.load %arg6[%c0_52, %c0_53] : memref<128x128xbf16, #tpu.memory_space<vmem>>, vector<128x128xbf16>
    %cst_54 = arith.constant dense<0.000000e+00> : vector<128x128xf32>
    %55 = tpu.matmul %53, %54, %cst_54 {dimension_numbers = #tpu.dot_dimension_numbers<[1], [0], [0], [1], [0, 0, 1, 1], [], []>} : vector<128x128xbf16>, vector<128x128xbf16>, vector<128x128xf32> -> vector<128x128xf32>
    %c0_55 = arith.constant 0 : index
    %c0_56 = arith.constant 0 : index
    %c0_57 = arith.constant 0 : index
    %c0_58 = arith.constant 0 : index
    %56 = vector.load %arg1[%c0_55, %c0_56, %c0_57, %c0_58] : memref<2x8x8x128xbf16, #tpu.memory_space<vmem>>, vector<2x8x8x128xbf16>
    %57 = vector.shape_cast %56 : vector<2x8x8x128xbf16> to vector<128x128xbf16>
    %58 = arith.extf %57 : vector<128x128xbf16> to vector<128x128xf32>
    %c0_59 = arith.constant 0 : index
    %c0_60 = arith.constant 0 : index
    %59 = vector.load %arg7[%c0_59, %c0_60] : memref<1x128xf32, #tpu.memory_space<vmem>>, vector<1x128xf32>
    %60 = vector.broadcast %59 : vector<1x128xf32> to vector<128x128xf32>
    %61 = arith.addf %55, %60 : vector<128x128xf32>
    %62 = arith.addf %61, %58 : vector<128x128xf32>
    %cst_61 = arith.constant 0.000000e+00 : f32
    %63 = vector.broadcast %cst_61 : f32 to vector<128x128xf32>
    %64 = arith.maximumf %62, %63 : vector<128x128xf32>
    %65 = arith.truncf %64 : vector<128x128xf32> to vector<128x128xbf16>
    %66 = vector.shape_cast %65 : vector<128x128xbf16> to vector<2x8x8x128xbf16>
    %c0_62 = arith.constant 0 : index
    %c0_63 = arith.constant 0 : index
    %c0_64 = arith.constant 0 : index
    %c0_65 = arith.constant 0 : index
    %67 = vector.load %arg8[%c0_62, %c0_63, %c0_64, %c0_65] : memref<2x8x8x128xbf16, #tpu.memory_space<vmem>>, vector<2x8x8x128xbf16>
    tpu.vector_store %arg8[%c0_62, %c0_63, %c0_64, %c0_65], %66 {strides = array<i32>} : memref<2x8x8x128xbf16, #tpu.memory_space<vmem>>, vector<2x8x8x128xbf16>,
    return
  }
  func.func @transform_0(%arg0: i32) -> (i32, i32, i32, i32) {
    %c0_i32 = arith.constant 0 : i32
    %c0_i32_0 = arith.constant 0 : i32
    %c0_i32_1 = arith.constant 0 : i32
    %c0_i32_2 = arith.constant 0 : i32
    return %arg0, %c0_i32, %c0_i32_0, %c0_i32_1 : i32, i32, i32, i32
  }
  func.func @transform_1(%arg0: i32) -> (i32, i32) {
    %c0_i32 = arith.constant 0 : i32
    %c0_i32_0 = arith.constant 0 : i32
    %c0_i32_1 = arith.constant 0 : i32
    return %c0_i32, %c0_i32_0 : i32, i32
  }
  func.func @transform_2(%arg0: i32) -> (i32, i32) {
    %c0_i32 = arith.constant 0 : i32
    %c0_i32_0 = arith.constant 0 : i32
    %c0_i32_1 = arith.constant 0 : i32
    return %c0_i32, %c0_i32_0 : i32, i32
  }
  func.func @transform_3(%arg0: i32) -> (i32, i32, i32) {
    %c0_i32 = arith.constant 0 : i32
    %c0_i32_0 = arith.constant 0 : i32
    %c0_i32_1 = arith.constant 0 : i32
    %c0_i32_2 = arith.constant 0 : i32
    return %c0_i32, %c0_i32_0, %c0_i32_1 : i32, i32, i32
  }
  func.func @transform_4(%arg0: i32) -> (i32, i32) {
    %c0_i32 = arith.constant 0 : i32
    %c0_i32_0 = arith.constant 0 : i32
    %c0_i32_1 = arith.constant 0 : i32
    return %c0_i32, %c0_i32_0 : i32, i32
  }
  func.func @transform_5(%arg0: i32) -> (i32, i32) {
    %c0_i32 = arith.constant 0 : i32
    %c0_i32_0 = arith.constant 0 : i32
    %c0_i32_1 = arith.constant 0 : i32
    return %c0_i32, %c0_i32_0 : i32, i32
  }
  func.func @transform_6(%arg0: i32) -> (i32, i32) {
    %c0_i32 = arith.constant 0 : i32
    %c0_i32_0 = arith.constant 0 : i32
    %c0_i32_1 = arith.constant 0 : i32
    return %c0_i32, %c0_i32_0 : i32, i32
  }
  func.func @transform_7(%arg0: i32) -> (i32, i32, i32, i32) {
    %c0_i32 = arith.constant 0 : i32
    %c0_i32_0 = arith.constant 0 : i32
    %c0_i32_1 = arith.constant 0 : i32
    %c0_i32_2 = arith.constant 0 : i32
    return %arg0, %c0_i32, %c0_i32_0, %c0_i32_1 : i32, i32, i32, i32
  }
}

</mosaic_0001>

<llo_original>
// kernel: tpu_custom_call.1
$region0: #{tpu_custom_call.1}
  #allocation0 [shape = 'u32[]', space=smem, size = 0x4, offset = 0x4, fixed_abs, tag = 'smem constant byte address 0x4 - core index']
  #allocation1 [shape = 'u32[144,128]{1,0:T(1,128)}', space=vmem, size = 0x12000, scoped, tag = 'internal scratch']
  #allocation2 [shape = 'bf16[2,10,24,128]{3,2,1,0:T(8,128)(2,1)}', space=vmem, size = 0x1e000, scoped, tag = 'scratch operand']
  %s0 = inlined_call_operand.hbm [shape: bf16[4,8,8,128], index: 0, kind: input, shape index: {}]
  %s1 = inlined_call_operand.hbm [shape: bf16[128,128], index: 1, kind: input, shape index: {}]
  %s2 = inlined_call_operand.vmem [shape: f32[1,128], index: 2, kind: input, shape index: {}]
  %s3 = inlined_call_operand.hbm [shape: bf16[3,384,128], index: 3, kind: input, shape index: {}]
  %s4 = inlined_call_operand.vmem [shape: f32[1,128], index: 4, kind: input, shape index: {}]
  %s5 = inlined_call_operand.hbm [shape: bf16[128,128], index: 5, kind: input, shape index: {}]
  %s6 = inlined_call_operand.vmem [shape: f32[1,128], index: 6, kind: input, shape index: {}]
  %s7 = inlined_call_operand.hbm [shape: bf16[4,8,8,128], index: 7, kind: output, shape index: {}]
  %s8 = sld [smem:[#allocation0]]
  $region77: #{tpu_custom_call.1} parent=0
    _
  %s10 = ssub.s32 1, %s8
  %s11 = scalar_select 0, %s10, %s8
  $region1: #{tpu_custom_call.1} parent=0
    #allocation3 [shape = 'u8[65536]{0}', space=vmem, size = 0x10000, scoped, tag = 'input window, operand 0']
    #allocation4 [shape = 's32[2]{0}', space=sflag, size = 0x8, scoped, tag = 'scoped memory for tpu_custom_call.1']
    #allocation5 [shape = 's32[2]{0}', space=sflag, size = 0x8, scoped, tag = 'scoped memory for tpu_custom_call.1']
    #allocation6 [shape = 'u8[32768]{0}', space=vmem, size = 0x8000, scoped, tag = 'input window, operand 1, single buffered']
    #allocation7 [shape = 's32[1]{0}', space=sflag, size = 0x4, scoped, tag = 'scoped memory for tpu_custom_call.1']
    #allocation8 [shape = 'u8[294912]{0}', space=vmem, size = 0x48000, scoped, tag = 'input window, operand 3, single buffered']
    #allocation9 [shape = 'u8[32768]{0}', space=vmem, size = 0x8000, scoped, tag = 'input window, operand 5, single buffered']
    #allocation10 [shape = 's32[1]{0}', space=sflag, size = 0x4, scoped, tag = 'scoped memory for tpu_custom_call.1']
    #allocation11 [shape = 'u8[65536]{0}', space=vmem, size = 0x10000, scoped, tag = 'output window, operand 0']
    %12 = vsyncpa [#allocation4], 0
    %s13 = scalar_lea.sflag [#allocation4], 1
    %14 = vsyncpa %s13, 0
    %15 = vsyncpa [#allocation7], 0
    %16 = vsyncpa [#allocation10], 0
    %17 = vsyncpa [#allocation5], 0
    %s18 = scalar_lea.sflag [#allocation5], 1
    %19 = vsyncpa %s18, 0
    loop: start=0, step=1, limit=4
    $region2: #{tpu_custom_call.1} parent=1 // loop_pre_header
      _
    $region3: #{tpu_custom_call.1} parent=1 // loop_header
      %s21 = sphi 0, %s25
      %p22 = scmp.ge.s32.totalorder %s21, 4
      %s31 = sphi 0, %s33
      %s34 = sphi 0, %s31
      %s35 = sphi 0, %s34
      %s51 = sphi 0, %s35
      %s55 = sphi 0, %s55
      %s57 = sphi 0, %s55
      %s58 = sphi 0, %s57
      %s72 = sphi 0, %s58
      %s76 = sphi 0, %s76
      %s78 = sphi 0, %s76
      %s79 = sphi 0, %s78
      %s93 = sphi 0, %s79
      %s97 = sphi 0, %s97
      %s99 = sphi 0, %s97
      %s100 = sphi 0, %s99
      %s114 = sphi 0, %s100
      %s118 = sphi 0, %s118
      %s120 = sphi 0, %s118
      %s121 = sphi 0, %s120
      %s135 = sphi 0, %s121
      %s139 = sphi 0, %s139
      %s141 = sphi 0, %s139
      %s142 = sphi 0, %s141
      %s156 = sphi 0, %s142
      %s160 = sphi 0, %s160
      %s162 = sphi 0, %s160
      %s163 = sphi 0, %s162
      %s177 = sphi 0, %s163
      %s183 = sphi 0, %s185
      %s186 = sphi 0, %s183
      %s187 = sphi 0, %s186
      %s203 = sphi 0, %s187
    $region4: #{tpu_custom_call.1} parent=1 // loop_header_branch
      %24 = sbr.rel (%p22) target = $region8
    $region5: #{tpu_custom_call.1} parent=1 // loop_body
      %s26 = ssub.s32 %s21, 1
      %s27 = ssub.s32 %s21, 2
      %s28 = sadd.s32 %s21, 1
      %s29 = ssub.s32 %s21, %s28
      %p30 = scmp.eq.s32.totalorder %s29, 0
      %s32 = sadd.s32 %s31, 1
      %s33 = scalar_select %p30, %s31, %s32
      %p36 = pneg %p30
      %p37 = scmp.eq.s32.totalorder %s21, 1
      %p38 = por %p36, %p37
      %p39 = scmp.ne.s32.totalorder %s31, %s34
      %p40 = scmp.eq.s32.totalorder %s21, 0
      %p41 = por %p39, %p40
      %p42 = scmp.ne.s32.totalorder %s31, %s34
      %p43 = scmp.eq.s32.totalorder %s26, 1
      %p44 = por %p42, %p43
      %p45 = scmp.ne.s32.totalorder %s34, %s35
      %p46 = scmp.eq.s32.totalorder %s26, 0
      %p47 = por %p45, %p46
      %p48 = scmp.ne.s32.totalorder %s34, %s35
      %p49 = scmp.eq.s32.totalorder %s27, 1
      %p50 = por %p48, %p49
      %p52 = scmp.ne.s32.totalorder %s35, %s51
      %p53 = scmp.eq.s32.totalorder %s27, 0
      %p54 = por %p52, %p53
      %s56 = sadd.s32 %s55, 1
      %p59 = scmp.eq.s32.totalorder %s21, 1
      %p60 = scmp.ne.s32.totalorder %s55, %s57
      %p61 = scmp.eq.s32.totalorder %s21, 0
      %p62 = por %p60, %p61
      %p63 = scmp.ne.s32.totalorder %s55, %s57
      %p64 = scmp.eq.s32.totalorder %s26, 1
      %p65 = por %p63, %p64
      %p66 = scmp.ne.s32.totalorder %s57, %s58
      %p67 = scmp.eq.s32.totalorder %s26, 0
      %p68 = por %p66, %p67
      %p69 = scmp.ne.s32.totalorder %s57, %s58
      %p70 = scmp.eq.s32.totalorder %s27, 1
      %p71 = por %p69, %p70
      %p73 = scmp.ne.s32.totalorder %s58, %s72
      %p74 = scmp.eq.s32.totalorder %s27, 0
      %p75 = por %p73, %p74
      %s77 = sadd.s32 %s76, 1
      %p80 = scmp.eq.s32.totalorder %s21, 1
      %p81 = scmp.ne.s32.totalorder %s76, %s78
      %p82 = scmp.eq.s32.totalorder %s21, 0
      %p83 = por %p81, %p82
      %p84 = scmp.ne.s32.totalorder %s76, %s78
      %p85 = scmp.eq.s32.totalorder %s26, 1
      %p86 = por %p84, %p85
      %p87 = scmp.ne.s32.totalorder %s78, %s79
      %p88 = scmp.eq.s32.totalorder %s26, 0
      %p89 = por %p87, %p88
      %p90 = scmp.ne.s32.totalorder %s78, %s79
      %p91 = scmp.eq.s32.totalorder %s27, 1
      %p92 = por %p90, %p91
      %p94 = scmp.ne.s32.totalorder %s79, %s93
      %p95 = scmp.eq.s32.totalorder %s27, 0
      %p96 = por %p94, %p95
      %s98 = sadd.s32 %s97, 1
      %p101 = scmp.eq.s32.totalorder %s21, 1
      %p102 = scmp.ne.s32.totalorder %s97, %s99
      %p103 = scmp.eq.s32.totalorder %s21, 0
      %p104 = por %p102, %p103
      %p105 = scmp.ne.s32.totalorder %s97, %s99
      %p106 = scmp.eq.s32.totalorder %s26, 1
      %p107 = por %p105, %p106
      %p108 = scmp.ne.s32.totalorder %s99, %s100
      %p109 = scmp.eq.s32.totalorder %s26, 0
      %p110 = por %p108, %p109
      %p111 = scmp.ne.s32.totalorder %s99, %s100
      %p112 = scmp.eq.s32.totalorder %s27, 1
      %p113 = por %p111, %p112
      %p115 = scmp.ne.s32.totalorder %s100, %s114
      %p116 = scmp.eq.s32.totalorder %s27, 0
      %p117 = por %p115, %p116
      %s119 = sadd.s32 %s118, 1
      %p122 = scmp.eq.s32.totalorder %s21, 1
      %p123 = scmp.ne.s32.totalorder %s118, %s120
      %p124 = scmp.eq.s32.totalorder %s21, 0
      %p125 = por %p123, %p124
      %p126 = scmp.ne.s32.totalorder %s118, %s120
      %p127 = scmp.eq.s32.totalorder %s26, 1
      %p128 = por %p126, %p127
      %p129 = scmp.ne.s32.totalorder %s120, %s121
      %p130 = scmp.eq.s32.totalorder %s26, 0
      %p131 = por %p129, %p130
      %p132 = scmp.ne.s32.totalorder %s120, %s121
      %p133 = scmp.eq.s32.totalorder %s27, 1
      %p134 = por %p132, %p133
      %p136 = scmp.ne.s32.totalorder %s121, %s135
      %p137 = scmp.eq.s32.totalorder %s27, 0
      %p138 = por %p136, %p137
      %s140 = sadd.s32 %s139, 1
      %p143 = scmp.eq.s32.totalorder %s21, 1
      %p144 = scmp.ne.s32.totalorder %s139, %s141
      %p145 = scmp.eq.s32.totalorder %s21, 0
      %p146 = por %p144, %p145
      %p147 = scmp.ne.s32.totalorder %s139, %s141
      %p148 = scmp.eq.s32.totalorder %s26, 1
      %p149 = por %p147, %p148
      %p150 = scmp.ne.s32.totalorder %s141, %s142
      %p151 = scmp.eq.s32.totalorder %s26, 0
      %p152 = por %p150, %p151
      %p153 = scmp.ne.s32.totalorder %s141, %s142
      %p154 = scmp.eq.s32.totalorder %s27, 1
      %p155 = por %p153, %p154
      %p157 = scmp.ne.s32.totalorder %s142, %s156
      %p158 = scmp.eq.s32.totalorder %s27, 0
      %p159 = por %p157, %p158
      %s161 = sadd.s32 %s160, 1
      %p164 = scmp.eq.s32.totalorder %s21, 1
      %p165 = scmp.ne.s32.totalorder %s160, %s162
      %p166 = scmp.eq.s32.totalorder %s21, 0
      %p167 = por %p165, %p166
      %p168 = scmp.ne.s32.totalorder %s160, %s162
      %p169 = scmp.eq.s32.totalorder %s26, 1
      %p170 = por %p168, %p169
      %p171 = scmp.ne.s32.totalorder %s162, %s163
      %p172 = scmp.eq.s32.totalorder %s26, 0
      %p173 = por %p171, %p172
      %p174 = scmp.ne.s32.totalorder %s162, %s163
      %p175 = scmp.eq.s32.totalorder %s27, 1
      %p176 = por %p174, %p175
      %p178 = scmp.ne.s32.totalorder %s163, %s177
      %p179 = scmp.eq.s32.totalorder %s27, 0
      %p180 = por %p178, %p179
      %s181 = ssub.s32 %s21, %s28
      %p182 = scmp.eq.s32.totalorder %s181, 0
      %s184 = sadd.s32 %s183, 1
      %s185 = scalar_select %p182, %s183, %s184
      %p188 = pneg %p182
      %p189 = scmp.eq.s32.totalorder %s21, 1
      %p190 = por %p188, %p189
      %p191 = scmp.ne.s32.totalorder %s183, %s186
      %p192 = scmp.eq.s32.totalorder %s21, 0
      %p193 = por %p191, %p192
      %p194 = scmp.ne.s32.totalorder %s183, %s186
      %p195 = scmp.eq.s32.totalorder %s26, 1
      %p196 = por %p194, %p195
      %p197 = scmp.ne.s32.totalorder %s186, %s187
      %p198 = scmp.eq.s32.totalorder %s26, 0
      %p199 = por %p197, %p198
      %p200 = scmp.ne.s32.totalorder %s186, %s187
      %p201 = scmp.eq.s32.totalorder %s27, 1
      %p202 = por %p200, %p201
      %p204 = scmp.ne.s32.totalorder %s187, %s203
      %p205 = scmp.eq.s32.totalorder %s27, 0
      %p206 = por %p204, %p205
      %p207 = scmp.le.s32.totalorder 1, %s21
      %p208 = scmp.lt.s32.totalorder %s21, 3
      %p209 = pnand %p207, %p208
      %p210 = pneg %p209
      // Predicated region
      $region9: #{tpu_custom_call.1} parent=5 // pred_check
        _
      $region10: #{tpu_custom_call.1} parent=5 // pred_check_branch
        %212 = sbr.rel (%p209) target = $region12
      $region11: #{tpu_custom_call.1} parent=5 // pred_region
        %s213 = ssub.s32 %s21, 1
        // Predicated region
        $region13: #{tpu_custom_call.1} parent=11 // pred_check
          %p214 = pneg %p68
        $region14: #{tpu_custom_call.1} parent=11 // pred_check_branch
          %216 = sbr.rel (%p214) target = $region16
        $region15: #{tpu_custom_call.1} parent=11 // pred_region
          %s218 = ssub.s32 1024, 1024
          %219 = vsyncadd [#allocation7], %s218
          %s220 = sshll.u32 [#allocation6], 4
          %s221 = int_to_ptr.vmem [resolvable:$true] %s220
          %226 = dma.hbm_to_vmem [thread:$0]  %s1, 1024, %s221, [#allocation7], 64, 64, 4
        $region16: #{tpu_custom_call.1} parent=11 // pred_fallthru
          _
        // Predicated region
        $region17: #{tpu_custom_call.1} parent=11 // pred_check
          %p227 = pneg %p89
        $region18: #{tpu_custom_call.1} parent=11 // pred_check_branch
          %229 = sbr.rel (%p227) target = $region20
        $region19: #{tpu_custom_call.1} parent=11 // pred_region
          _
        $region20: #{tpu_custom_call.1} parent=11 // pred_fallthru
          _
        // Predicated region
        $region21: #{tpu_custom_call.1} parent=11 // pred_check
          %p230 = pneg %p110
        $region22: #{tpu_custom_call.1} parent=11 // pred_check_branch
          %232 = sbr.rel (%p230) target = $region24
        $region23: #{tpu_custom_call.1} parent=11 // pred_region
          %s234 = ssub.s32 9216, 9216
          %235 = vsyncadd [#allocation7], %s234
          %s236 = sshll.u32 [#allocation8], 4
          %s237 = int_to_ptr.vmem [resolvable:$true] %s236
          %242 = dma.hbm_to_vmem [thread:$0]  %s3, 9216, %s237, [#allocation7], 64, 64, 4
        $region24: #{tpu_custom_call.1} parent=11 // pred_fallthru
          _
        // Predicated region
        $region25: #{tpu_custom_call.1} parent=11 // pred_check
          %p243 = pneg %p131
        $region26: #{tpu_custom_call.1} parent=11 // pred_check_branch
          %245 = sbr.rel (%p243) target = $region28
        $region27: #{tpu_custom_call.1} parent=11 // pred_region
          _
        $region28: #{tpu_custom_call.1} parent=11 // pred_fallthru
          _
        // Predicated region
        $region29: #{tpu_custom_call.1} parent=11 // pred_check
          %p246 = pneg %p152
        $region30: #{tpu_custom_call.1} parent=11 // pred_check_branch
          %248 = sbr.rel (%p246) target = $region32
        $region31: #{tpu_custom_call.1} parent=11 // pred_region
          %s250 = ssub.s32 1024, 1024
          %251 = vsyncadd [#allocation10], %s250
          %s252 = sshll.u32 [#allocation9], 4
          %s253 = int_to_ptr.vmem [resolvable:$true] %s252
          %258 = dma.hbm_to_vmem [thread:$0]  %s5, 1024, %s253, [#allocation10], 64, 64, 4
        $region32: #{tpu_custom_call.1} parent=11 // pred_fallthru
          _
        // Predicated region
        $region33: #{tpu_custom_call.1} parent=11 // pred_check
          %p259 = pneg %p173
        $region34: #{tpu_custom_call.1} parent=11 // pred_check_branch
          %261 = sbr.rel (%p259) target = $region36
        $region35: #{tpu_custom_call.1} parent=11 // pred_region
          _
        $region36: #{tpu_custom_call.1} parent=11 // pred_fallthru
          _
      $region12: #{tpu_custom_call.1} parent=5 // pred_fallthru
        _
      %p262 = scmp.lt.s32.totalorder %s21, 2
      // Predicated region
      $region37: #{tpu_custom_call.1} parent=5 // pred_check
        %p263 = pneg %p262
      $region38: #{tpu_custom_call.1} parent=5 // pred_check_branch
        %265 = sbr.rel (%p263) target = $region40
      $region39: #{tpu_custom_call.1} parent=5 // pred_region
        // Predicated region
        $region41: #{tpu_custom_call.1} parent=39 // pred_check
          %p266 = pneg %p41
        $region42: #{tpu_custom_call.1} parent=39 // pred_check_branch
          %268 = sbr.rel (%p266) target = $region44
        $region43: #{tpu_custom_call.1} parent=39 // pred_region
          %s269 = sand.u32 %s31, 1
          %s270 = scalar_lea.sflag [#allocation4], %s269
          %s271 = sand.u32 %s31, 1
          %s272 = smul.addr %s271, 64
          %s273 = scalar_lea.vmem [#allocation3], %s272
          %s274 = smul.u32 2, %s21
          %s276 = ssub.s32 1024, 1024
          %277 = vsyncadd %s270, %s276
          %s278 = smul.addr %s274, 8
          %s279 = smul.addr %s278, 64
          %s280 = scalar_lea.hbm %s0, %s279
          %s281 = sshll.u32 %s273, 4
          %s282 = int_to_ptr.vmem [resolvable:$true] %s281
          %287 = dma.hbm_to_vmem [thread:$0]  %s280, 1024, %s282, %s270, 64, 64, 4
        $region44: #{tpu_custom_call.1} parent=39 // pred_fallthru
          _
      $region40: #{tpu_custom_call.1} parent=5 // pred_fallthru
        _
      %p288 = scmp.le.s32.totalorder 1, %s21
      %p289 = scmp.lt.s32.totalorder %s21, 3
      %p290 = pnand %p288, %p289
      %p291 = pneg %p290
      // Predicated region
      $region45: #{tpu_custom_call.1} parent=5 // pred_check
        _
      $region46: #{tpu_custom_call.1} parent=5 // pred_check_branch
        %293 = sbr.rel (%p290) target = $region48
      $region47: #{tpu_custom_call.1} parent=5 // pred_region
        %s294 = ssub.s32 %s21, 1
        %s295 = sand.u32 %s34, 1
        %s296 = scalar_lea.sflag [#allocation4], %s295
        %s297 = sand.u32 %s34, 1
        %s298 = smul.addr %s297, 64
        %s299 = scalar_lea.vmem [#allocation3], %s298
        // Predicated region
        $region49: #{tpu_custom_call.1} parent=47 // pred_check
          %p300 = pneg %p47
        $region50: #{tpu_custom_call.1} parent=47 // pred_check_branch
          %302 = sbr.rel (%p300) target = $region52
        $region51: #{tpu_custom_call.1} parent=47 // pred_region
          %303 = dma.done %s296, 1024
        $region52: #{tpu_custom_call.1} parent=47 // pred_fallthru
          _
        // Predicated region
        $region53: #{tpu_custom_call.1} parent=47 // pred_check
          %p304 = pneg %p68
        $region54: #{tpu_custom_call.1} parent=47 // pred_check_branch
          %306 = sbr.rel (%p304) target = $region56
        $region55: #{tpu_custom_call.1} parent=47 // pred_region
          %307 = dma.done [#allocation7], 1024
        $region56: #{tpu_custom_call.1} parent=47 // pred_fallthru
          _
        // Predicated region
        $region57: #{tpu_custom_call.1} parent=47 // pred_check
          %p308 = pneg %p110
        $region58: #{tpu_custom_call.1} parent=47 // pred_check_branch
          %310 = sbr.rel (%p308) target = $region60
        $region59: #{tpu_custom_call.1} parent=47 // pred_region
          %311 = dma.done [#allocation7], 9216
        $region60: #{tpu_custom_call.1} parent=47 // pred_fallthru
          _
        // Predicated region
        $region61: #{tpu_custom_call.1} parent=47 // pred_check
          %p312 = pneg %p152
        $region62: #{tpu_custom_call.1} parent=47 // pred_check_branch
          %314 = sbr.rel (%p312) target = $region64
        $region63: #{tpu_custom_call.1} parent=47 // pred_region
          %315 = dma.done [#allocation10], 1024
        $region64: #{tpu_custom_call.1} parent=47 // pred_fallthru
          _
        %s316 = sand.u32 %s34, 1
        %s317 = scalar_lea.sflag [#allocation4], %s316
        %s318 = sand.u32 %s34, 1
        %s319 = smul.addr %s318, 64
        %s320 = scalar_lea.vmem [#allocation3], %s319
        %p321 = pneg %p47
        %p322 = pneg %p44
        %p323 = pneg %p68
        %p324 = pneg %p65
        %p325 = pneg %p89
        %p326 = pneg %p86
        %p327 = pneg %p110
        %p328 = pneg %p107
        %p329 = pneg %p131
        %p330 = pneg %p128
        %p331 = pneg %p152
        %p332 = pneg %p149
        %p333 = pneg %p173
        %p334 = pneg %p170
        %p335 = pneg %p199
        %p336 = pneg %p196
        %s337 = sand.u32 %s186, 1
        %s338 = scalar_lea.sflag [#allocation5], %s337
        %s339 = sand.u32 %s186, 1
        %s340 = smul.addr %s339, 64
        %s341 = scalar_lea.vmem [#allocation11], %s340
        %s342 = smul.u32 2, %s26
        %s343 = smul.u32 2, %s26
        %v345 = vld [vmem:[%s299] sm:$0xf]
        %v346 = vld [vmem:[%s299 + $0x4] sm:$0xf]
        %v347 = vld [vmem:[%s299 + $0x8] sm:$0xf]
        %v348 = vld [vmem:[%s299 + $0xc] sm:$0xf]
        %v349 = vld [vmem:[%s299 + $0x10] sm:$0xf]
        %v350 = vld [vmem:[%s299 + $0x14] sm:$0xf]
        %v351 = vld [vmem:[%s299 + $0x18] sm:$0xf]
        %v352 = vld [vmem:[%s299 + $0x1c] sm:$0xf]
        %v353 = vld [vmem:[%s299 + $0x20] sm:$0xf]
        %v354 = vld [vmem:[%s299 + $0x24] sm:$0xf]
        %v355 = vld [vmem:[%s299 + $0x28] sm:$0xf]
        %v356 = vld [vmem:[%s299 + $0x2c] sm:$0xf]
        %v357 = vld [vmem:[%s299 + $0x30] sm:$0xf]
        %v358 = vld [vmem:[%s299 + $0x34] sm:$0xf]
        %v359 = vld [vmem:[%s299 + $0x38] sm:$0xf]
        %v360 = vld [vmem:[%s299 + $0x3c] sm:$0xf]
        %v361 = vld [vmem:[#allocation6] sm:$0xf]
        %v362 = vld [vmem:[#allocation6 + $0x4] sm:$0xf]
        %v363 = vld [vmem:[#allocation6 + $0x8] sm:$0xf]
        %v364 = vld [vmem:[#allocation6 + $0xc] sm:$0xf]
        %v365 = vld [vmem:[#allocation6 + $0x10] sm:$0xf]
        %v366 = vld [vmem:[#allocation6 + $0x14] sm:$0xf]
        %v367 = vld [vmem:[#allocation6 + $0x18] sm:$0xf]
        %v368 = vld [vmem:[#allocation6 + $0x1c] sm:$0xf]
        %v369 = vld [vmem:[#allocation6 + $0x20] sm:$0xf]
        %v370 = vld [vmem:[#allocation6 + $0x24] sm:$0xf]
        %v371 = vld [vmem:[#allocation6 + $0x28] sm:$0xf]
        %v372 = vld [vmem:[#allocation6 + $0x2c] sm:$0xf]
        %v373 = vld [vmem:[#allocation6 + $0x30] sm:$0xf]
        %v374 = vld [vmem:[#allocation6 + $0x34] sm:$0xf]
        %v375 = vld [vmem:[#allocation6 + $0x38] sm:$0xf]
        %v376 = vld [vmem:[#allocation6 + $0x3c] sm:$0xf]
        %v377 = vld [vmem:[%s2] sm:$0x1]
        %v379 = vlaneseq
        %v380 = vshrl.u32 %v379, 7
        %v381 = vsub.s32 0, %v380
        %v382 = vrot.slane %v377, %v381
        %v400 = vunpack.c.l.b16 %v345
        %v401 = vunpack.c.l.b16 %v346
        %v402 = vunpack.c.l.b16 %v347
        %v403 = vunpack.c.l.b16 %v348
        %v404 = vunpack.c.l.b16 %v349
        %v405 = vunpack.c.l.b16 %v350
        %v406 = vunpack.c.l.b16 %v351
        %v407 = vunpack.c.l.b16 %v352
        %v408 = vunpack.c.l.b16 %v353
        %v409 = vunpack.c.l.b16 %v354
        %v410 = vunpack.c.l.b16 %v355
        %v411 = vunpack.c.l.b16 %v356
        %v412 = vunpack.c.l.b16 %v357
        %v413 = vunpack.c.l.b16 %v358
        %v414 = vunpack.c.l.b16 %v359
        %v415 = vunpack.c.l.b16 %v360
        %v416 = vpack.c.b16 %v401, %v400
        %v417 = vpack.c.b16 %v403, %v402
        %v418 = vpack.c.b16 %v405, %v404
        %v419 = vpack.c.b16 %v407, %v406
        %v420 = vpack.c.b16 %v409, %v408
        %v421 = vpack.c.b16 %v411, %v410
        %v422 = vpack.c.b16 %v413, %v412
        %v423 = vpack.c.b16 %v415, %v414
        %v448 = vunpack.c.l.b16 %v361
        %v449 = vunpack.c.l.b16 %v362
        %v450 = vunpack.c.l.b16 %v363
        %v451 = vunpack.c.l.b16 %v364
        %v452 = vunpack.c.l.b16 %v365
        %v453 = vunpack.c.l.b16 %v366
        %v454 = vunpack.c.l.b16 %v367
        %v455 = vunpack.c.l.b16 %v368
        %v456 = vunpack.c.l.b16 %v369
        %v457 = vunpack.c.l.b16 %v370
        %v458 = vunpack.c.l.b16 %v371
        %v459 = vunpack.c.l.b16 %v372
        %v460 = vunpack.c.l.b16 %v373
        %v461 = vunpack.c.l.b16 %v374
        %v462 = vunpack.c.l.b16 %v375
        %v463 = vunpack.c.l.b16 %v376
        %v464 = vpack.c.b16 %v449, %v448
        %v465 = vpack.c.b16 %v451, %v450
        %v466 = vpack.c.b16 %v453, %v452
        %v467 = vpack.c.b16 %v455, %v454
        %v468 = vpack.c.b16 %v457, %v456
        %v469 = vpack.c.b16 %v459, %v458
        %v470 = vpack.c.b16 %v461, %v460
        %v471 = vpack.c.b16 %v463, %v462
        %480 = vmatprep.subr.bf16.mxu0 0
        %481 = vmatpush1.bf16.msra.mxu0 %v471
        %482 = vmatprep.subr.bf16.mxu0 0
        %483 = vmatpush1.bf16.msra.mxu0 %v470
        %484 = vmatprep.subr.bf16.mxu0 0
        %485 = vmatpush1.bf16.msra.mxu0 %v469
        %486 = vmatprep.subr.bf16.mxu0 0
        %487 = vmatpush1.bf16.msra.mxu0 %v468
        %488 = vmatprep.subr.bf16.mxu0 0
        %489 = vmatpush1.bf16.msra.mxu0 %v467
        %490 = vmatprep.subr.bf16.mxu0 0
        %491 = vmatpush1.bf16.msra.mxu0 %v466
        %492 = vmatprep.subr.bf16.mxu0 0
        %493 = vmatpush1.bf16.msra.mxu0 %v465
        %494 = vmatprep.subr.bf16.mxu0 0
        %495 = vmatpush1.bf16.msra.mxu0 %v464
        %496 = vmatprep.subr.bf16.mxu0 0
        %497 = vmatpush2.bf16.msra.mxu0 0
        %498 = vmatprep.subr.bf16.mxu0 0
        %499 = vmatpush2.bf16.msra.mxu0 0
        %500 = vmatprep.subr.bf16.mxu0 0
        %501 = vmatpush2.bf16.msra.mxu0 0
        %502 = vmatprep.subr.bf16.mxu0 0
        %503 = vmatpush2.bf16.msra.mxu0 0
        %504 = vmatprep.subr.bf16.mxu0 0
        %505 = vmatpush2.bf16.msra.mxu0 0
        %506 = vmatprep.subr.bf16.mxu0 0
        %507 = vmatpush2.bf16.msra.mxu0 0
        %508 = vmatprep.subr.bf16.mxu0 0
        %509 = vmatpush2.bf16.msra.mxu0 0
        %510 = vmatprep.subr.bf16.mxu0 0
        %511 = vmatpush2.bf16.msra.mxu0 0
        %512 = vmatprep.mubr.bf16.mxu0 0
        %513 = vmatmul.mubr.bf16.gmra.mxu0 %v416
        %v514 = vpop.f32.mrf.mxu0
        %v515 = vadd.f32 %v382, %v514
        %v516 = vpop.f32.mrf.mxu0
        %v517 = vpop.f32.mrf.mxu0
        %v518 = vadd.f32 %v382, %v517
        %v519 = vpop.f32.mrf.mxu0
        %520 = vmatprep.mubr.bf16.mxu0 0
        %521 = vmatmul.mubr.bf16.gmra.mxu0 %v417
        %v522 = vpop.f32.mrf.mxu0
        %v523 = vadd.f32 %v382, %v522
        %v524 = vpop.f32.mrf.mxu0
        %v525 = vpop.f32.mrf.mxu0
        %v526 = vadd.f32 %v382, %v525
        %v527 = vpop.f32.mrf.mxu0
        %528 = vmatprep.mubr.bf16.mxu0 0
        %529 = vmatmul.mubr.bf16.gmra.mxu0 %v418
        %v530 = vpop.f32.mrf.mxu0
        %v531 = vadd.f32 %v382, %v530
        %v532 = vpop.f32.mrf.mxu0
        %v533 = vpop.f32.mrf.mxu0
        %v534 = vadd.f32 %v382, %v533
        %v535 = vpop.f32.mrf.mxu0
        %536 = vmatprep.mubr.bf16.mxu0 0
        %537 = vmatmul.mubr.bf16.gmra.mxu0 %v419
        %v538 = vpop.f32.mrf.mxu0
        %v539 = vadd.f32 %v382, %v538
        %v540 = vpop.f32.mrf.mxu0
        %v541 = vpop.f32.mrf.mxu0
        %v542 = vadd.f32 %v382, %v541
        %v543 = vpop.f32.mrf.mxu0
        %544 = vmatprep.mubr.bf16.mxu0 0
        %545 = vmatmul.mubr.bf16.gmra.mxu0 %v420
        %v546 = vpop.f32.mrf.mxu0
        %v547 = vadd.f32 %v382, %v546
        %v548 = vpop.f32.mrf.mxu0
        %v549 = vpop.f32.mrf.mxu0
        %v550 = vadd.f32 %v382, %v549
        %v551 = vpop.f32.mrf.mxu0
        %552 = vmatprep.mubr.bf16.mxu0 0
        %553 = vmatmul.mubr.bf16.gmra.mxu0 %v421
        %v554 = vpop.f32.mrf.mxu0
        %v555 = vadd.f32 %v382, %v554
        %v556 = vpop.f32.mrf.mxu0
        %v557 = vpop.f32.mrf.mxu0
        %v558 = vadd.f32 %v382, %v557
        %v559 = vpop.f32.mrf.mxu0
        %560 = vmatprep.mubr.bf16.mxu0 0
        %561 = vmatmul.mubr.bf16.gmra.mxu0 %v422
        %v562 = vpop.f32.mrf.mxu0
        %v563 = vadd.f32 %v382, %v562
        %v564 = vpop.f32.mrf.mxu0
        %v565 = vpop.f32.mrf.mxu0
        %v566 = vadd.f32 %v382, %v565
        %v567 = vpop.f32.mrf.mxu0
        %568 = vmatprep.mubr.bf16.mxu0 0
        %569 = vmatmul.mubr.bf16.gmra.mxu0 %v423
        %v570 = vpop.f32.mrf.mxu0
        %v571 = vadd.f32 %v382, %v570
        %v572 = vpop.f32.mrf.mxu0
        %v573 = vpop.f32.mrf.mxu0
        %v574 = vadd.f32 %v382, %v573
        %v575 = vpop.f32.mrf.mxu0
        %576 = vdwg.mxu0
        %v577 = vmax.f32 %v515, 0.0
        %v578 = vmax.f32 %v518, 0.0
        %v579 = vmax.f32 %v523, 0.0
        %v580 = vmax.f32 %v526, 0.0
        %v581 = vmax.f32 %v531, 0.0
        %v582 = vmax.f32 %v534, 0.0
        %v583 = vmax.f32 %v539, 0.0
        %v584 = vmax.f32 %v542, 0.0
        %v585 = vmax.f32 %v547, 0.0
        %v586 = vmax.f32 %v550, 0.0
        %v587 = vmax.f32 %v555, 0.0
        %v588 = vmax.f32 %v558, 0.0
        %v589 = vmax.f32 %v563, 0.0
        %v590 = vmax.f32 %v566, 0.0
        %v591 = vmax.f32 %v571, 0.0
        %v592 = vmax.f32 %v574, 0.0
        %593 = vst [vmem:[#allocation2] sm:$0xf] 0
        %594 = vst [vmem:[#allocation2 + $0x4] sm:$0xf] 0
        %595 = vst [vmem:[#allocation2 + $0x8] sm:$0xf] 0
        %596 = vst [vmem:[#allocation2 + $0x78] sm:$0xf] 0
        %597 = vst [vmem:[#allocation2 + $0x7c] sm:$0xf] 0
        %598 = vst [vmem:[#allocation2 + $0x80] sm:$0xf] 0
        %s599 = scalar_lea.vmem [#allocation2], 108
        %600 = vst [vmem:[%s599] sm:$0xf] 0
        %601 = vst [vmem:[%s599 + $0x4] sm:$0xf] 0
        %602 = vst [vmem:[%s599 + $0x8] sm:$0xf] 0
        %603 = vst [vmem:[%s599 + $0x78] sm:$0xf] 0
        %604 = vst [vmem:[%s599 + $0x7c] sm:$0xf] 0
        %605 = vst [vmem:[%s599 + $0x80] sm:$0xf] 0
        %s606 = scalar_lea.vmem [#allocation2], 12
        %607 = vst [vmem:[%s606] sm:$0xf] 0
        %608 = vst [vmem:[%s606 + $0xc] sm:$0xf] 0
        %609 = vst [vmem:[%s606 + $0x18] sm:$0xf] 0
        %610 = vst [vmem:[%s606 + $0x24] sm:$0xf] 0
        %611 = vst [vmem:[%s606 + $0x30] sm:$0xf] 0
        %612 = vst [vmem:[%s606 + $0x3c] sm:$0xf] 0
        %613 = vst [vmem:[%s606 + $0x48] sm:$0xf] 0
        %614 = vst [vmem:[%s606 + $0x54] sm:$0xf] 0
        %615 = vst [vmem:[%s606 + $0x78] sm:$0xf] 0
        %616 = vst [vmem:[%s606 + $0x84] sm:$0xf] 0
        %617 = vst [vmem:[%s606 + $0x90] sm:$0xf] 0
        %618 = vst [vmem:[%s606 + $0x9c] sm:$0xf] 0
        %619 = vst [vmem:[%s606 + $0xa8] sm:$0xf] 0
        %620 = vst [vmem:[%s606 + $0xb4] sm:$0xf] 0
        %621 = vst [vmem:[%s606 + $0xc0] sm:$0xf] 0
        %622 = vst [vmem:[%s606 + $0xcc] sm:$0xf] 0
        %623 = vst [vmem:[%s606 + $0x8] sm:$0xf] 0
        %624 = vst [vmem:[%s606 + $0x14] sm:$0xf] 0
        %625 = vst [vmem:[%s606 + $0x20] sm:$0xf] 0
        %626 = vst [vmem:[%s606 + $0x2c] sm:$0xf] 0
        %627 = vst [vmem:[%s606 + $0x38] sm:$0xf] 0
        %628 = vst [vmem:[%s606 + $0x44] sm:$0xf] 0
        %629 = vst [vmem:[%s606 + $0x50] sm:$0xf] 0
        %630 = vst [vmem:[%s606 + $0x5c] sm:$0xf] 0
        %631 = vst [vmem:[%s606 + $0x80] sm:$0xf] 0
        %632 = vst [vmem:[%s606 + $0x8c] sm:$0xf] 0
        %633 = vst [vmem:[%s606 + $0x98] sm:$0xf] 0
        %634 = vst [vmem:[%s606 + $0xa4] sm:$0xf] 0
        %635 = vst [vmem:[%s606 + $0xb0] sm:$0xf] 0
        %636 = vst [vmem:[%s606 + $0xbc] sm:$0xf] 0
        %637 = vst [vmem:[%s606 + $0xc8] sm:$0xf] 0
        %638 = vst [vmem:[%s606 + $0xd4] sm:$0xf] 0
        %v639 = vpack.c.bf16 %v578, %v577
        %v640 = vpack.c.bf16 %v580, %v579
        %v641 = vpack.c.bf16 %v582, %v581
        %v642 = vpack.c.bf16 %v584, %v583
        %v643 = vpack.c.bf16 %v586, %v585
        %v644 = vpack.c.bf16 %v588, %v587
        %v645 = vpack.c.bf16 %v590, %v589
        %v646 = vpack.c.bf16 %v592, %v591
        %v655 = vunpack.c.l.b16 %v639
        %v656 = vunpack.c.h.b16 %v639
        %v657 = vunpack.c.l.b16 %v640
        %v658 = vunpack.c.h.b16 %v640
        %v659 = vunpack.c.l.b16 %v641
        %v660 = vunpack.c.h.b16 %v641
        %v661 = vunpack.c.l.b16 %v642
        %v662 = vunpack.c.h.b16 %v642
        %v663 = vunpack.c.l.b16 %v643
        %v664 = vunpack.c.h.b16 %v643
        %v665 = vunpack.c.l.b16 %v644
        %v666 = vunpack.c.h.b16 %v644
        %v667 = vunpack.c.l.b16 %v645
        %v668 = vunpack.c.h.b16 %v645
        %v669 = vunpack.c.l.b16 %v646
        %v670 = vunpack.c.h.b16 %v646
        %v671 = vpack.c.b16 %v655, %v655
        %v672 = vpack.c.b16 %v656, %v656
        %v673 = vpack.c.b16 %v657, %v657
        %v674 = vpack.c.b16 %v658, %v658
        %v675 = vpack.c.b16 %v659, %v659
        %v676 = vpack.c.b16 %v660, %v660
        %v677 = vpack.c.b16 %v661, %v661
        %v678 = vpack.c.b16 %v662, %v662
        %v679 = vpack.c.b16 %v663, %v663
        %v680 = vpack.c.b16 %v664, %v664
        %v681 = vpack.c.b16 %v665, %v665
        %v682 = vpack.c.b16 %v666, %v666
        %v683 = vpack.c.b16 %v667, %v667
        %v684 = vpack.c.b16 %v668, %v668
        %v685 = vpack.c.b16 %v669, %v669
        %v686 = vpack.c.b16 %v670, %v670
        %703 = vst [vmem:[%s606 + $0x4] sm:$0xf] %v671
        %704 = vst [vmem:[%s606 + $0x10] sm:$0xf] %v672
        %705 = vst [vmem:[%s606 + $0x1c] sm:$0xf] %v673
        %706 = vst [vmem:[%s606 + $0x28] sm:$0xf] %v674
        %707 = vst [vmem:[%s606 + $0x34] sm:$0xf] %v675
        %708 = vst [vmem:[%s606 + $0x40] sm:$0xf] %v676
        %709 = vst [vmem:[%s606 + $0x4c] sm:$0xf] %v677
        %710 = vst [vmem:[%s606 + $0x58] sm:$0xf] %v678
        %711 = vst [vmem:[%s606 + $0x7c] sm:$0xf] %v679
        %712 = vst [vmem:[%s606 + $0x88] sm:$0xf] %v680
        %713 = vst [vmem:[%s606 + $0x94] sm:$0xf] %v681
        %714 = vst [vmem:[%s606 + $0xa0] sm:$0xf] %v682
        %715 = vst [vmem:[%s606 + $0xac] sm:$0xf] %v683
        %716 = vst [vmem:[%s606 + $0xb8] sm:$0xf] %v684
        %717 = vst [vmem:[%s606 + $0xc4] sm:$0xf] %v685
        %718 = vst [vmem:[%s606 + $0xd0] sm:$0xf] %v686
        %v719 = vld [vmem:[#allocation2] sm:$0x8]
        %v720 = vld [vmem:[#allocation2 + $0x4] sm:$0xf]
        %v721 = vld [vmem:[#allocation2 + $0xc] sm:$0x8]
        %v722 = vld [vmem:[#allocation2 + $0x10] sm:$0xf]
        %v723 = vld [vmem:[#allocation2 + $0x18] sm:$0x8]
        %v724 = vld [vmem:[#allocation2 + $0x1c] sm:$0xf]
        %v725 = vld [vmem:[#allocation2 + $0x24] sm:$0x8]
        %v726 = vld [vmem:[#allocation2 + $0x28] sm:$0xf]
        %v727 = vld [vmem:[#allocation2 + $0x30] sm:$0x8]
        %v728 = vld [vmem:[#allocation2 + $0x34] sm:$0xf]
        %v729 = vld [vmem:[#allocation2 + $0x3c] sm:$0x8]
        %v730 = vld [vmem:[#allocation2 + $0x40] sm:$0xf]
        %v731 = vld [vmem:[#allocation2 + $0x48] sm:$0x8]
        %v732 = vld [vmem:[#allocation2 + $0x4c] sm:$0xf]
        %v733 = vld [vmem:[#allocation2 + $0x54] sm:$0x8]
        %v734 = vld [vmem:[#allocation2 + $0x58] sm:$0xf]
        %v735 = vld [vmem:[#allocation2 + $0x60] sm:$0x8]
        %v736 = vld [vmem:[#allocation2 + $0x64] sm:$0xf]
        %v737 = vld [vmem:[#allocation2 + $0x6c] sm:$0x8]
        %v738 = vld [vmem:[#allocation2 + $0x70] sm:$0xf]
        %v739 = vld [vmem:[#allocation2 + $0x78] sm:$0x8]
        %v740 = vld [vmem:[#allocation2 + $0x7c] sm:$0xf]
        %v741 = vld [vmem:[#allocation2 + $0x84] sm:$0x8]
        %v742 = vld [vmem:[#allocation2 + $0x88] sm:$0xf]
        %v743 = vld [vmem:[#allocation2 + $0x90] sm:$0x8]
        %v744 = vld [vmem:[#allocation2 + $0x94] sm:$0xf]
        %v745 = vld [vmem:[#allocation2 + $0x9c] sm:$0x8]
        %v746 = vld [vmem:[#allocation2 + $0xa0] sm:$0xf]
        %v747 = vld [vmem:[#allocation2 + $0xa8] sm:$0x8]
        %v748 = vld [vmem:[#allocation2 + $0xac] sm:$0xf]
        %v749 = vld [vmem:[#allocation2 + $0xb4] sm:$0x8]
        %v750 = vld [vmem:[#allocation2 + $0xb8] sm:$0xf]
        %v751 = vld [vmem:[#allocation2 + $0xc0] sm:$0x8]
        %v752 = vld [vmem:[#allocation2 + $0xc4] sm:$0xf]
        %v753 = vld [vmem:[#allocation2 + $0xcc] sm:$0x8]
        %v754 = vld [vmem:[#allocation2 + $0xd0] sm:$0xf]
        %v755 = vld [vmem:[#allocation2 + $0xd8] sm:$0x8]
        %v756 = vld [vmem:[#allocation2 + $0xdc] sm:$0xf]
        %v757 = vld [vmem:[#allocation2 + $0xe4] sm:$0x8]
        %v758 = vld [vmem:[#allocation2 + $0xe8] sm:$0xf]
        %v791 = vunpack.c.l.b16 %v719
        %v792 = vunpack.c.l.b16 %v720
        %v793 = vunpack.c.l.b16 %v721
        %v794 = vunpack.c.l.b16 %v722
        %v795 = vunpack.c.l.b16 %v723
        %v796 = vunpack.c.l.b16 %v724
        %v797 = vunpack.c.l.b16 %v725
        %v798 = vunpack.c.l.b16 %v726
        %v799 = vunpack.c.l.b16 %v727
        %v800 = vunpack.c.l.b16 %v728
        %v801 = vunpack.c.l.b16 %v729
        %v802 = vunpack.c.l.b16 %v730
        %v803 = vunpack.c.l.b16 %v731
        %v804 = vunpack.c.l.b16 %v732
        %v805 = vunpack.c.l.b16 %v733
        %v806 = vunpack.c.l.b16 %v734
        %v807 = vunpack.c.l.b16 %v739
        %v808 = vunpack.c.l.b16 %v740
        %v809 = vunpack.c.l.b16 %v741
        %v810 = vunpack.c.l.b16 %v742
        %v811 = vunpack.c.l.b16 %v743
        %v812 = vunpack.c.l.b16 %v744
        %v813 = vunpack.c.l.b16 %v745
        %v814 = vunpack.c.l.b16 %v746
        %v815 = vunpack.c.l.b16 %v747
        %v816 = vunpack.c.l.b16 %v748
        %v817 = vunpack.c.l.b16 %v749
        %v818 = vunpack.c.l.b16 %v750
        %v819 = vunpack.c.l.b16 %v751
        %v820 = vunpack.c.l.b16 %v752
        %v821 = vunpack.c.l.b16 %v753
        %v822 = vunpack.c.l.b16 %v754
        %v827 = vunpack.c.l.b16 %v735
        %v828 = vunpack.c.l.b16 %v736
        %v829 = vunpack.c.l.b16 %v755
        %v830 = vunpack.c.l.b16 %v756
        %v835 = vunpack.c.l.b16 %v737
        %v836 = vunpack.c.l.b16 %v738
        %v837 = vunpack.c.l.b16 %v757
        %v838 = vunpack.c.l.b16 %v758
        %v839 = vpack.c.b16 %v793, %v791
        %v840 = vpack.c.b16 %v795, %v795
        %v841 = vpack.c.b16 %v794, %v792
        %v842 = vpack.c.b16 %v796, %v796
        %v843 = vpack.c.b16 %v795, %v793
        %v844 = vpack.c.b16 %v797, %v797
        %v845 = vpack.c.b16 %v796, %v794
        %v846 = vpack.c.b16 %v798, %v798
        %v847 = vpack.c.b16 %v797, %v795
        %v848 = vpack.c.b16 %v799, %v799
        %v849 = vpack.c.b16 %v798, %v796
        %v850 = vpack.c.b16 %v800, %v800
        %v851 = vpack.c.b16 %v799, %v797
        %v852 = vpack.c.b16 %v801, %v801
        %v853 = vpack.c.b16 %v800, %v798
        %v854 = vpack.c.b16 %v802, %v802
        %v855 = vpack.c.b16 %v801, %v799
        %v856 = vpack.c.b16 %v803, %v803
        %v857 = vpack.c.b16 %v802, %v800
        %v858 = vpack.c.b16 %v804, %v804
        %v859 = vpack.c.b16 %v803, %v801
        %v860 = vpack.c.b16 %v805, %v805
        %v861 = vpack.c.b16 %v804, %v802
        %v862 = vpack.c.b16 %v806, %v806
        %v863 = vpack.c.b16 %v805, %v803
        %v864 = vpack.c.b16 %v827, %v827
        %v865 = vpack.c.b16 %v806, %v804
        %v866 = vpack.c.b16 %v828, %v828
        %v867 = vpack.c.b16 %v827, %v805
        %v868 = vpack.c.b16 %v835, %v835
        %v869 = vpack.c.b16 %v828, %v806
        %v870 = vpack.c.b16 %v836, %v836
        %v871 = vpack.c.b16 %v809, %v807
        %v872 = vpack.c.b16 %v811, %v811
        %v873 = vpack.c.b16 %v810, %v808
        %v874 = vpack.c.b16 %v812, %v812
        %v875 = vpack.c.b16 %v811, %v809
        %v876 = vpack.c.b16 %v813, %v813
        %v877 = vpack.c.b16 %v812, %v810
        %v878 = vpack.c.b16 %v814, %v814
        %v879 = vpack.c.b16 %v813, %v811
        %v880 = vpack.c.b16 %v815, %v815
        %v881 = vpack.c.b16 %v814, %v812
        %v882 = vpack.c.b16 %v816, %v816
        %v883 = vpack.c.b16 %v815, %v813
        %v884 = vpack.c.b16 %v817, %v817
        %v885 = vpack.c.b16 %v816, %v814
        %v886 = vpack.c.b16 %v818, %v818
        %v887 = vpack.c.b16 %v817, %v815
        %v888 = vpack.c.b16 %v819, %v819
        %v889 = vpack.c.b16 %v818, %v816
        %v890 = vpack.c.b16 %v820, %v820
        %v891 = vpack.c.b16 %v819, %v817
        %v892 = vpack.c.b16 %v821, %v821
        %v893 = vpack.c.b16 %v820, %v818
        %v894 = vpack.c.b16 %v822, %v822
        %v895 = vpack.c.b16 %v821, %v819
        %v896 = vpack.c.b16 %v829, %v829
        %v897 = vpack.c.b16 %v822, %v820
        %v898 = vpack.c.b16 %v830, %v830
        %v899 = vpack.c.b16 %v829, %v821
        %v900 = vpack.c.b16 %v837, %v837
        %v901 = vpack.c.b16 %v830, %v822
        %v902 = vpack.c.b16 %v838, %v838
        %vm903 = vsmask.f32 256
        %vm904 = vsmask.f32 4368
        %vm905 = vmor %vm903, %vm904
        %v907 = vshrl.u32 %v839, 16
        %v909 = vrot.slane %v907, 7
        %v910 = vrot.slane %v909, 4
        %v912 = vshrl.u32 %v841, 16
        %v914 = vrot.slane %v912, 7
        %v915 = vshll.u32 %v841, 16
        %v917 = vor.u32 %v914, %v915
        %v918 = vsel %vm905, %v910, %v917
        %v920 = vshrl.u32 %v840, 16
        %v922 = vrot.slane %v920, 7
        %v923 = vrot.slane %v922, 4
        %v925 = vshrl.u32 %v842, 16
        %v927 = vrot.slane %v925, 7
        %v928 = vshll.u32 %v842, 16
        %v930 = vor.u32 %v927, %v928
        %v931 = vsel %vm905, %v923, %v930
        %v933 = vshrl.u32 %v843, 16
        %v935 = vrot.slane %v933, 7
        %v936 = vrot.slane %v935, 4
        %v938 = vshrl.u32 %v845, 16
        %v940 = vrot.slane %v938, 7
        %v941 = vshll.u32 %v845, 16
        %v943 = vor.u32 %v940, %v941
        %v944 = vsel %vm905, %v936, %v943
        %v946 = vshrl.u32 %v844, 16
        %v948 = vrot.slane %v946, 7
        %v949 = vrot.slane %v948, 4
        %v951 = vshrl.u32 %v846, 16
        %v953 = vrot.slane %v951, 7
        %v954 = vshll.u32 %v846, 16
        %v956 = vor.u32 %v953, %v954
        %v957 = vsel %vm905, %v949, %v956
        %v959 = vshrl.u32 %v847, 16
        %v961 = vrot.slane %v959, 7
        %v962 = vrot.slane %v961, 4
        %v964 = vshrl.u32 %v849, 16
        %v966 = vrot.slane %v964, 7
        %v967 = vshll.u32 %v849, 16
        %v969 = vor.u32 %v966, %v967
        %v970 = vsel %vm905, %v962, %v969
        %v972 = vshrl.u32 %v848, 16
        %v974 = vrot.slane %v972, 7
        %v975 = vrot.slane %v974, 4
        %v977 = vshrl.u32 %v850, 16
        %v979 = vrot.slane %v977, 7
        %v980 = vshll.u32 %v850, 16
        %v982 = vor.u32 %v979, %v980
        %v983 = vsel %vm905, %v975, %v982
        %v985 = vshrl.u32 %v851, 16
        %v987 = vrot.slane %v985, 7
        %v988 = vrot.slane %v987, 4
        %v990 = vshrl.u32 %v853, 16
        %v992 = vrot.slane %v990, 7
        %v993 = vshll.u32 %v853, 16
        %v995 = vor.u32 %v992, %v993
        %v996 = vsel %vm905, %v988, %v995
        %v998 = vshrl.u32 %v852, 16
        %v1000 = vrot.slane %v998, 7
        %v1001 = vrot.slane %v1000, 4
        %v1003 = vshrl.u32 %v854, 16
        %v1005 = vrot.slane %v1003, 7
        %v1006 = vshll.u32 %v854, 16
        %v1008 = vor.u32 %v1005, %v1006
        %v1009 = vsel %vm905, %v1001, %v1008
        %v1011 = vshrl.u32 %v855, 16
        %v1013 = vrot.slane %v1011, 7
        %v1014 = vrot.slane %v1013, 4
        %v1016 = vshrl.u32 %v857, 16
        %v1018 = vrot.slane %v1016, 7
        %v1019 = vshll.u32 %v857, 16
        %v1021 = vor.u32 %v1018, %v1019
        %v1022 = vsel %vm905, %v1014, %v1021
        %v1024 = vshrl.u32 %v856, 16
        %v1026 = vrot.slane %v1024, 7
        %v1027 = vrot.slane %v1026, 4
        %v1029 = vshrl.u32 %v858, 16
        %v1031 = vrot.slane %v1029, 7
        %v1032 = vshll.u32 %v858, 16
        %v1034 = vor.u32 %v1031, %v1032
        %v1035 = vsel %vm905, %v1027, %v1034
        %v1037 = vshrl.u32 %v859, 16
        %v1039 = vrot.slane %v1037, 7
        %v1040 = vrot.slane %v1039, 4
        %v1042 = vshrl.u32 %v861, 16
        %v1044 = vrot.slane %v1042, 7
        %v1045 = vshll.u32 %v861, 16
        %v1047 = vor.u32 %v1044, %v1045
        %v1048 = vsel %vm905, %v1040, %v1047
        %v1050 = vshrl.u32 %v860, 16
        %v1052 = vrot.slane %v1050, 7
        %v1053 = vrot.slane %v1052, 4
        %v1055 = vshrl.u32 %v862, 16
        %v1057 = vrot.slane %v1055, 7
        %v1058 = vshll.u32 %v862, 16
        %v1060 = vor.u32 %v1057, %v1058
        %v1061 = vsel %vm905, %v1053, %v1060
        %v1063 = vshrl.u32 %v863, 16
        %v1065 = vrot.slane %v1063, 7
        %v1066 = vrot.slane %v1065, 4
        %v1068 = vshrl.u32 %v865, 16
        %v1070 = vrot.slane %v1068, 7
        %v1071 = vshll.u32 %v865, 16
        %v1073 = vor.u32 %v1070, %v1071
        %v1074 = vsel %vm905, %v1066, %v1073
        %v1076 = vshrl.u32 %v864, 16
        %v1078 = vrot.slane %v1076, 7
        %v1079 = vrot.slane %v1078, 4
        %v1081 = vshrl.u32 %v866, 16
        %v1083 = vrot.slane %v1081, 7
        %v1084 = vshll.u32 %v866, 16
        %v1086 = vor.u32 %v1083, %v1084
        %v1087 = vsel %vm905, %v1079, %v1086
        %v1089 = vshrl.u32 %v867, 16
        %v1091 = vrot.slane %v1089, 7
        %v1092 = vrot.slane %v1091, 4
        %v1094 = vshrl.u32 %v869, 16
        %v1096 = vrot.slane %v1094, 7
        %v1097 = vshll.u32 %v869, 16
        %v1099 = vor.u32 %v1096, %v1097
        %v1100 = vsel %vm905, %v1092, %v1099
        %v1102 = vshrl.u32 %v868, 16
        %v1104 = vrot.slane %v1102, 7
        %v1105 = vrot.slane %v1104, 4
        %v1107 = vshrl.u32 %v870, 16
        %v1109 = vrot.slane %v1107, 7
        %v1110 = vshll.u32 %v870, 16
        %v1112 = vor.u32 %v1109, %v1110
        %v1113 = vsel %vm905, %v1105, %v1112
        %v1115 = vshrl.u32 %v871, 16
        %v1117 = vrot.slane %v1115, 7
        %v1118 = vrot.slane %v1117, 4
        %v1120 = vshrl.u32 %v873, 16
        %v1122 = vrot.slane %v1120, 7
        %v1123 = vshll.u32 %v873, 16
        %v1125 = vor.u32 %v1122, %v1123
        %v1126 = vsel %vm905, %v1118, %v1125
        %v1128 = vshrl.u32 %v872, 16
        %v1130 = vrot.slane %v1128, 7
        %v1131 = vrot.slane %v1130, 4
        %v1133 = vshrl.u32 %v874, 16
        %v1135 = vrot.slane %v1133, 7
        %v1136 = vshll.u32 %v874, 16
        %v1138 = vor.u32 %v1135, %v1136
        %v1139 = vsel %vm905, %v1131, %v1138
        %v1141 = vshrl.u32 %v875, 16
        %v1143 = vrot.slane %v1141, 7
        %v1144 = vrot.slane %v1143, 4
        %v1146 = vshrl.u32 %v877, 16
        %v1148 = vrot.slane %v1146, 7
        %v1149 = vshll.u32 %v877, 16
        %v1151 = vor.u32 %v1148, %v1149
        %v1152 = vsel %vm905, %v1144, %v1151
        %v1154 = vshrl.u32 %v876, 16
        %v1156 = vrot.slane %v1154, 7
        %v1157 = vrot.slane %v1156, 4
        %v1159 = vshrl.u32 %v878, 16
        %v1161 = vrot.slane %v1159, 7
        %v1162 = vshll.u32 %v878, 16
        %v1164 = vor.u32 %v1161, %v1162
        %v1165 = vsel %vm905, %v1157, %v1164
        %v1167 = vshrl.u32 %v879, 16
        %v1169 = vrot.slane %v1167, 7
        %v1170 = vrot.slane %v1169, 4
        %v1172 = vshrl.u32 %v881, 16
        %v1174 = vrot.slane %v1172, 7
        %v1175 = vshll.u32 %v881, 16
        %v1177 = vor.u32 %v1174, %v1175
        %v1178 = vsel %vm905, %v1170, %v1177
        %v1180 = vshrl.u32 %v880, 16
        %v1182 = vrot.slane %v1180, 7
        %v1183 = vrot.slane %v1182, 4
        %v1185 = vshrl.u32 %v882, 16
        %v1187 = vrot.slane %v1185, 7
        %v1188 = vshll.u32 %v882, 16
        %v1190 = vor.u32 %v1187, %v1188
        %v1191 = vsel %vm905, %v1183, %v1190
        %v1193 = vshrl.u32 %v883, 16
        %v1195 = vrot.slane %v1193, 7
        %v1196 = vrot.slane %v1195, 4
        %v1198 = vshrl.u32 %v885, 16
        %v1200 = vrot.slane %v1198, 7
        %v1201 = vshll.u32 %v885, 16
        %v1203 = vor.u32 %v1200, %v1201
        %v1204 = vsel %vm905, %v1196, %v1203
        %v1206 = vshrl.u32 %v884, 16
        %v1208 = vrot.slane %v1206, 7
        %v1209 = vrot.slane %v1208, 4
        %v1211 = vshrl.u32 %v886, 16
        %v1213 = vrot.slane %v1211, 7
        %v1214 = vshll.u32 %v886, 16
        %v1216 = vor.u32 %v1213, %v1214
        %v1217 = vsel %vm905, %v1209, %v1216
        %v1219 = vshrl.u32 %v887, 16
        %v1221 = vrot.slane %v1219, 7
        %v1222 = vrot.slane %v1221, 4
        %v1224 = vshrl.u32 %v889, 16
        %v1226 = vrot.slane %v1224, 7
        %v1227 = vshll.u32 %v889, 16
        %v1229 = vor.u32 %v1226, %v1227
        %v1230 = vsel %vm905, %v1222, %v1229
        %v1232 = vshrl.u32 %v888, 16
        %v1234 = vrot.slane %v1232, 7
        %v1235 = vrot.slane %v1234, 4
        %v1237 = vshrl.u32 %v890, 16
        %v1239 = vrot.slane %v1237, 7
        %v1240 = vshll.u32 %v890, 16
        %v1242 = vor.u32 %v1239, %v1240
        %v1243 = vsel %vm905, %v1235, %v1242
        %v1245 = vshrl.u32 %v891, 16
        %v1247 = vrot.slane %v1245, 7
        %v1248 = vrot.slane %v1247, 4
        %v1250 = vshrl.u32 %v893, 16
        %v1252 = vrot.slane %v1250, 7
        %v1253 = vshll.u32 %v893, 16
        %v1255 = vor.u32 %v1252, %v1253
        %v1256 = vsel %vm905, %v1248, %v1255
        %v1258 = vshrl.u32 %v892, 16
        %v1260 = vrot.slane %v1258, 7
        %v1261 = vrot.slane %v1260, 4
        %v1263 = vshrl.u32 %v894, 16
        %v1265 = vrot.slane %v1263, 7
        %v1266 = vshll.u32 %v894, 16
        %v1268 = vor.u32 %v1265, %v1266
        %v1269 = vsel %vm905, %v1261, %v1268
        %v1271 = vshrl.u32 %v895, 16
        %v1273 = vrot.slane %v1271, 7
        %v1274 = vrot.slane %v1273, 4
        %v1276 = vshrl.u32 %v897, 16
        %v1278 = vrot.slane %v1276, 7
        %v1279 = vshll.u32 %v897, 16
        %v1281 = vor.u32 %v1278, %v1279
        %v1282 = vsel %vm905, %v1274, %v1281
        %v1284 = vshrl.u32 %v896, 16
        %v1286 = vrot.slane %v1284, 7
        %v1287 = vrot.slane %v1286, 4
        %v1289 = vshrl.u32 %v898, 16
        %v1291 = vrot.slane %v1289, 7
        %v1292 = vshll.u32 %v898, 16
        %v1294 = vor.u32 %v1291, %v1292
        %v1295 = vsel %vm905, %v1287, %v1294
        %v1297 = vshrl.u32 %v899, 16
        %v1299 = vrot.slane %v1297, 7
        %v1300 = vrot.slane %v1299, 4
        %v1302 = vshrl.u32 %v901, 16
        %v1304 = vrot.slane %v1302, 7
        %v1305 = vshll.u32 %v901, 16
        %v1307 = vor.u32 %v1304, %v1305
        %v1308 = vsel %vm905, %v1300, %v1307
        %v1310 = vshrl.u32 %v900, 16
        %v1312 = vrot.slane %v1310, 7
        %v1313 = vrot.slane %v1312, 4
        %v1315 = vshrl.u32 %v902, 16
        %v1317 = vrot.slane %v1315, 7
        %v1318 = vshll.u32 %v902, 16
        %v1320 = vor.u32 %v1317, %v1318
        %v1321 = vsel %vm905, %v1313, %v1320
        %v1322 = vld [vmem:[#allocation8] sm:$0xf]
        %v1323 = vld [vmem:[#allocation8 + $0x4] sm:$0xf]
        %v1324 = vld [vmem:[#allocation8 + $0x8] sm:$0xf]
        %v1325 = vld [vmem:[#allocation8 + $0xc] sm:$0xf]
        %v1326 = vld [vmem:[#allocation8 + $0x10] sm:$0xf]
        %v1327 = vld [vmem:[#allocation8 + $0x14] sm:$0xf]
        %v1328 = vld [vmem:[#allocation8 + $0x18] sm:$0xf]
        %v1329 = vld [vmem:[#allocation8 + $0x1c] sm:$0xf]
        %v1330 = vld [vmem:[#allocation8 + $0x20] sm:$0xf]
        %v1331 = vld [vmem:[#allocation8 + $0x24] sm:$0xf]
        %v1332 = vld [vmem:[#allocation8 + $0x28] sm:$0xf]
        %v1333 = vld [vmem:[#allocation8 + $0x2c] sm:$0xf]
        %v1334 = vld [vmem:[#allocation8 + $0x30] sm:$0xf]
        %v1335 = vld [vmem:[#allocation8 + $0x34] sm:$0xf]
        %v1336 = vld [vmem:[#allocation8 + $0x38] sm:$0xf]
        %v1337 = vld [vmem:[#allocation8 + $0x3c] sm:$0xf]
        %v1338 = vld [vmem:[#allocation8 + $0x40] sm:$0xf]
        %v1339 = vld [vmem:[#allocation8 + $0x44] sm:$0xf]
        %v1340 = vld [vmem:[#allocation8 + $0x48] sm:$0xf]
        %v1341 = vld [vmem:[#allocation8 + $0x4c] sm:$0xf]
        %v1342 = vld [vmem:[#allocation8 + $0x50] sm:$0xf]
        %v1343 = vld [vmem:[#allocation8 + $0x54] sm:$0xf]
        %v1344 = vld [vmem:[#allocation8 + $0x58] sm:$0xf]
        %v1345 = vld [vmem:[#allocation8 + $0x5c] sm:$0xf]
        %v1346 = vld [vmem:[#allocation8 + $0x60] sm:$0xf]
        %v1347 = vld [vmem:[#allocation8 + $0x64] sm:$0xf]
        %v1348 = vld [vmem:[#allocation8 + $0x68] sm:$0xf]
        %v1349 = vld [vmem:[#allocation8 + $0x6c] sm:$0xf]
        %v1350 = vld [vmem:[#allocation8 + $0x70] sm:$0xf]
        %v1351 = vld [vmem:[#allocation8 + $0x74] sm:$0xf]
        %v1352 = vld [vmem:[#allocation8 + $0x78] sm:$0xf]
        %v1353 = vld [vmem:[#allocation8 + $0x7c] sm:$0xf]
        %v1354 = vld [vmem:[#allocation8 + $0x80] sm:$0xf]
        %v1355 = vld [vmem:[#allocation8 + $0x84] sm:$0xf]
        %v1356 = vld [vmem:[#allocation8 + $0x88] sm:$0xf]
        %v1357 = vld [vmem:[#allocation8 + $0x8c] sm:$0xf]
        %v1358 = vld [vmem:[#allocation8 + $0x90] sm:$0xf]
        %v1359 = vld [vmem:[#allocation8 + $0x94] sm:$0xf]
        %v1360 = vld [vmem:[#allocation8 + $0x98] sm:$0xf]
        %v1361 = vld [vmem:[#allocation8 + $0x9c] sm:$0xf]
        %v1362 = vld [vmem:[#allocation8 + $0xa0] sm:$0xf]
        %v1363 = vld [vmem:[#allocation8 + $0xa4] sm:$0xf]
        %v1364 = vld [vmem:[#allocation8 + $0xa8] sm:$0xf]
        %v1365 = vld [vmem:[#allocation8 + $0xac] sm:$0xf]
        %v1366 = vld [vmem:[#allocation8 + $0xb0] sm:$0xf]
        %v1367 = vld [vmem:[#allocation8 + $0xb4] sm:$0xf]
        %v1368 = vld [vmem:[#allocation8 + $0xb8] sm:$0xf]
        %v1369 = vld [vmem:[#allocation8 + $0xbc] sm:$0xf]
        %s1370 = scalar_lea.vmem [#allocation8], 192
        %v1371 = vld [vmem:[%s1370] sm:$0xf]
        %v1372 = vld [vmem:[%s1370 + $0x4] sm:$0xf]
        %v1373 = vld [vmem:[%s1370 + $0x8] sm:$0xf]
        %v1374 = vld [vmem:[%s1370 + $0xc] sm:$0xf]
        %v1375 = vld [vmem:[%s1370 + $0x10] sm:$0xf]
        %v1376 = vld [vmem:[%s1370 + $0x14] sm:$0xf]
        %v1377 = vld [vmem:[%s1370 + $0x18] sm:$0xf]
        %v1378 = vld [vmem:[%s1370 + $0x1c] sm:$0xf]
        %v1379 = vld [vmem:[%s1370 + $0x20] sm:$0xf]
        %v1380 = vld [vmem:[%s1370 + $0x24] sm:$0xf]
        %v1381 = vld [vmem:[%s1370 + $0x28] sm:$0xf]
        %v1382 = vld [vmem:[%s1370 + $0x2c] sm:$0xf]
        %v1383 = vld [vmem:[%s1370 + $0x30] sm:$0xf]
        %v1384 = vld [vmem:[%s1370 + $0x34] sm:$0xf]
        %v1385 = vld [vmem:[%s1370 + $0x38] sm:$0xf]
        %v1386 = vld [vmem:[%s1370 + $0x3c] sm:$0xf]
        %v1387 = vld [vmem:[%s1370 + $0x40] sm:$0xf]
        %v1388 = vld [vmem:[%s1370 + $0x44] sm:$0xf]
        %v1389 = vld [vmem:[%s1370 + $0x48] sm:$0xf]
        %v1390 = vld [vmem:[%s1370 + $0x4c] sm:$0xf]
        %v1391 = vld [vmem:[%s1370 + $0x50] sm:$0xf]
        %v1392 = vld [vmem:[%s1370 + $0x54] sm:$0xf]
        %v1393 = vld [vmem:[%s1370 + $0x58] sm:$0xf]
        %v1394 = vld [vmem:[%s1370 + $0x5c] sm:$0xf]
        %v1395 = vld [vmem:[%s1370 + $0x60] sm:$0xf]
        %v1396 = vld [vmem:[%s1370 + $0x64] sm:$0xf]
        %v1397 = vld [vmem:[%s1370 + $0x68] sm:$0xf]
        %v1398 = vld [vmem:[%s1370 + $0x6c] sm:$0xf]
        %v1399 = vld [vmem:[%s1370 + $0x70] sm:$0xf]
        %v1400 = vld [vmem:[%s1370 + $0x74] sm:$0xf]
        %v1401 = vld [vmem:[%s1370 + $0x78] sm:$0xf]
        %v1402 = vld [vmem:[%s1370 + $0x7c] sm:$0xf]
        %v1403 = vld [vmem:[%s1370 + $0x80] sm:$0xf]
        %v1404 = vld [vmem:[%s1370 + $0x84] sm:$0xf]
        %v1405 = vld [vmem:[%s1370 + $0x88] sm:$0xf]
        %v1406 = vld [vmem:[%s1370 + $0x8c] sm:$0xf]
        %v1407 = vld [vmem:[%s1370 + $0x90] sm:$0xf]
        %v1408 = vld [vmem:[%s1370 + $0x94] sm:$0xf]
        %v1409 = vld [vmem:[%s1370 + $0x98] sm:$0xf]
        %v1410 = vld [vmem:[%s1370 + $0x9c] sm:$0xf]
        %v1411 = vld [vmem:[%s1370 + $0xa0] sm:$0xf]
        %v1412 = vld [vmem:[%s1370 + $0xa4] sm:$0xf]
        %v1413 = vld [vmem:[%s1370 + $0xa8] sm:$0xf]
        %v1414 = vld [vmem:[%s1370 + $0xac] sm:$0xf]
        %v1415 = vld [vmem:[%s1370 + $0xb0] sm:$0xf]
        %v1416 = vld [vmem:[%s1370 + $0xb4] sm:$0xf]
        %v1417 = vld [vmem:[%s1370 + $0xb8] sm:$0xf]
        %v1418 = vld [vmem:[%s1370 + $0xbc] sm:$0xf]
        %v1419 = vpack.c.b16 %v836, %v828
        %v1420 = vpack.c.b16 %v838, %v830
        %v1487 = vunpack.c.l.b16 %v1371
        %v1488 = vunpack.c.l.b16 %v1372
        %v1489 = vunpack.c.l.b16 %v1373
        %v1490 = vunpack.c.l.b16 %v1374
        %v1491 = vunpack.c.l.b16 %v1375
        %v1492 = vunpack.c.l.b16 %v1376
        %v1493 = vunpack.c.l.b16 %v1377
        %v1494 = vunpack.c.l.b16 %v1378
        %v1495 = vunpack.c.l.b16 %v1379
        %v1496 = vunpack.c.l.b16 %v1380
        %v1497 = vunpack.c.l.b16 %v1381
        %v1498 = vunpack.c.l.b16 %v1382
        %v1499 = vunpack.c.l.b16 %v1383
        %v1500 = vunpack.c.l.b16 %v1384
        %v1501 = vunpack.c.l.b16 %v1385
        %v1502 = vunpack.c.l.b16 %v1386
        %v1503 = vunpack.c.l.b16 %v1387
        %v1504 = vunpack.c.l.b16 %v1388
        %v1505 = vunpack.c.l.b16 %v1389
        %v1506 = vunpack.c.l.b16 %v1390
        %v1507 = vunpack.c.l.b16 %v1391
        %v1508 = vunpack.c.l.b16 %v1392
        %v1509 = vunpack.c.l.b16 %v1393
        %v1510 = vunpack.c.l.b16 %v1394
        %v1511 = vunpack.c.l.b16 %v1395
        %v1512 = vunpack.c.l.b16 %v1396
        %v1513 = vunpack.c.l.b16 %v1397
        %v1514 = vunpack.c.l.b16 %v1398
        %v1515 = vunpack.c.l.b16 %v1399
        %v1516 = vunpack.c.l.b16 %v1400
        %v1517 = vunpack.c.l.b16 %v1401
        %v1518 = vunpack.c.l.b16 %v1402
        %v1519 = vunpack.c.l.b16 %v1403
        %v1520 = vunpack.c.l.b16 %v1404
        %v1521 = vunpack.c.l.b16 %v1405
        %v1522 = vunpack.c.l.b16 %v1406
        %v1523 = vunpack.c.l.b16 %v1407
        %v1524 = vunpack.c.l.b16 %v1408
        %v1525 = vunpack.c.l.b16 %v1409
        %v1526 = vunpack.c.l.b16 %v1410
        %v1527 = vunpack.c.l.b16 %v1411
        %v1528 = vunpack.c.l.b16 %v1412
        %v1529 = vunpack.c.l.b16 %v1413
        %v1530 = vunpack.c.l.b16 %v1414
        %v1531 = vunpack.c.l.b16 %v1415
        %v1532 = vunpack.c.l.b16 %v1416
        %v1533 = vunpack.c.l.b16 %v1417
        %v1534 = vunpack.c.l.b16 %v1418
        %v1535 = vpack.c.b16 %v1488, %v1487
        %v1536 = vpack.c.b16 %v1490, %v1489
        %v1537 = vpack.c.b16 %v1492, %v1491
        %v1538 = vpack.c.b16 %v1494, %v1493
        %v1539 = vpack.c.b16 %v1496, %v1495
        %v1540 = vpack.c.b16 %v1498, %v1497
        %v1541 = vpack.c.b16 %v1500, %v1499
        %v1542 = vpack.c.b16 %v1502, %v1501
        %v1543 = vpack.c.b16 %v1504, %v1503
        %v1544 = vpack.c.b16 %v1506, %v1505
        %v1545 = vpack.c.b16 %v1508, %v1507
        %v1546 = vpack.c.b16 %v1510, %v1509
        %v1547 = vpack.c.b16 %v1512, %v1511
        %v1548 = vpack.c.b16 %v1514, %v1513
        %v1549 = vpack.c.b16 %v1516, %v1515
        %v1550 = vpack.c.b16 %v1518, %v1517
        %v1551 = vpack.c.b16 %v1520, %v1519
        %v1552 = vpack.c.b16 %v1522, %v1521
        %v1553 = vpack.c.b16 %v1524, %v1523
        %v1554 = vpack.c.b16 %v1526, %v1525
        %v1555 = vpack.c.b16 %v1528, %v1527
        %v1556 = vpack.c.b16 %v1530, %v1529
        %v1557 = vpack.c.b16 %v1532, %v1531
        %v1558 = vpack.c.b16 %v1534, %v1533
        %1583 = vmatprep.subr.bf16.mxu0 0
        %1584 = vmatpush1.bf16.msra.mxu0 %v1542
        %1585 = vmatprep.subr.bf16.mxu0 0
        %1586 = vmatpush1.bf16.msra.mxu0 %v1541
        %1587 = vmatprep.subr.bf16.mxu0 0
        %1588 = vmatpush1.bf16.msra.mxu0 %v1540
        %1589 = vmatprep.subr.bf16.mxu0 0
        %1590 = vmatpush1.bf16.msra.mxu0 %v1539
        %1591 = vmatprep.subr.bf16.mxu0 0
        %1592 = vmatpush1.bf16.msra.mxu0 %v1538
        %1593 = vmatprep.subr.bf16.mxu0 0
        %1594 = vmatpush1.bf16.msra.mxu0 %v1537
        %1595 = vmatprep.subr.bf16.mxu0 0
        %1596 = vmatpush1.bf16.msra.mxu0 %v1536
        %1597 = vmatprep.subr.bf16.mxu0 0
        %1598 = vmatpush1.bf16.msra.mxu0 %v1535
        %1599 = vmatprep.subr.bf16.mxu0 0
        %1600 = vmatpush2.bf16.msra.mxu0 %v1550
        %1601 = vmatprep.subr.bf16.mxu0 0
        %1602 = vmatpush2.bf16.msra.mxu0 %v1549
        %1603 = vmatprep.subr.bf16.mxu0 0
        %1604 = vmatpush2.bf16.msra.mxu0 %v1548
        %1605 = vmatprep.subr.bf16.mxu0 0
        %1606 = vmatpush2.bf16.msra.mxu0 %v1547
        %1607 = vmatprep.subr.bf16.mxu0 0
        %1608 = vmatpush2.bf16.msra.mxu0 %v1546
        %1609 = vmatprep.subr.bf16.mxu0 0
        %1610 = vmatpush2.bf16.msra.mxu0 %v1545
        %1611 = vmatprep.subr.bf16.mxu0 0
        %1612 = vmatpush2.bf16.msra.mxu0 %v1544
        %1613 = vmatprep.subr.bf16.mxu0 0
        %1614 = vmatpush2.bf16.msra.mxu0 %v1543
        %1615 = vmatprep.mubr.bf16.mxu0 %v845
        %1616 = vmatmul.mubr.bf16.gmra.mxu0 %v841
        %v1617 = vpop.f32.mrf.mxu0
        %v1618 = vadd.f32 0.0, %v1617
        %v1619 = vpop.f32.mrf.mxu0
        %v1620 = vpop.f32.mrf.mxu0
        %v1621 = vadd.f32 0.0, %v1620
        %v1622 = vpop.f32.mrf.mxu0
        %1623 = vmatprep.mubr.bf16.mxu0 %v853
        %1624 = vmatmul.mubr.bf16.gmra.mxu0 %v849
        %v1625 = vpop.f32.mrf.mxu0
        %v1626 = vadd.f32 0.0, %v1625
        %v1627 = vpop.f32.mrf.mxu0
        %v1628 = vpop.f32.mrf.mxu0
        %v1629 = vadd.f32 0.0, %v1628
        %v1630 = vpop.f32.mrf.mxu0
        %1631 = vmatprep.mubr.bf16.mxu0 %v861
        %1632 = vmatmul.mubr.bf16.gmra.mxu0 %v857
        %v1633 = vpop.f32.mrf.mxu0
        %v1634 = vadd.f32 0.0, %v1633
        %v1635 = vpop.f32.mrf.mxu0
        %v1636 = vpop.f32.mrf.mxu0
        %v1637 = vadd.f32 0.0, %v1636
        %v1638 = vpop.f32.mrf.mxu0
        %1639 = vmatprep.mubr.bf16.mxu0 %v869
        %1640 = vmatmul.mubr.bf16.gmra.mxu0 %v865
        %v1641 = vpop.f32.mrf.mxu0
        %v1642 = vadd.f32 0.0, %v1641
        %v1643 = vpop.f32.mrf.mxu0
        %v1644 = vpop.f32.mrf.mxu0
        %v1645 = vadd.f32 0.0, %v1644
        %v1646 = vpop.f32.mrf.mxu0
        %1647 = vmatprep.mubr.bf16.mxu0 %v877
        %1648 = vmatmul.mubr.bf16.gmra.mxu0 %v873
        %v1649 = vpop.f32.mrf.mxu0
        %v1650 = vadd.f32 0.0, %v1649
        %v1651 = vpop.f32.mrf.mxu0
        %v1652 = vpop.f32.mrf.mxu0
        %v1653 = vadd.f32 0.0, %v1652
        %v1654 = vpop.f32.mrf.mxu0
        %1655 = vmatprep.mubr.bf16.mxu0 %v885
        %1656 = vmatmul.mubr.bf16.gmra.mxu0 %v881
        %v1657 = vpop.f32.mrf.mxu0
        %v1658 = vadd.f32 0.0, %v1657
        %v1659 = vpop.f32.mrf.mxu0
        %v1660 = vpop.f32.mrf.mxu0
        %v1661 = vadd.f32 0.0, %v1660
        %v1662 = vpop.f32.mrf.mxu0
        %1663 = vmatprep.mubr.bf16.mxu0 %v893
        %1664 = vmatmul.mubr.bf16.gmra.mxu0 %v889
        %v1665 = vpop.f32.mrf.mxu0
        %v1666 = vadd.f32 0.0, %v1665
        %v1667 = vpop.f32.mrf.mxu0
        %v1668 = vpop.f32.mrf.mxu0
        %v1669 = vadd.f32 0.0, %v1668
        %v1670 = vpop.f32.mrf.mxu0
        %1671 = vmatprep.mubr.bf16.mxu0 %v901
        %1672 = vmatmul.mubr.bf16.gmra.mxu0 %v897
        %v1673 = vpop.f32.mrf.mxu0
        %v1674 = vadd.f32 0.0, %v1673
        %v1675 = vpop.f32.mrf.mxu0
        %v1676 = vpop.f32.mrf.mxu0
        %v1677 = vadd.f32 0.0, %v1676
        %v1678 = vpop.f32.mrf.mxu0
        %1679 = vdwg.mxu0
        %1680 = vmatprep.subr.bf16.mxu0 0
        %1681 = vmatpush1.bf16.msra.mxu0 %v1558
        %1682 = vmatprep.subr.bf16.mxu0 0
        %1683 = vmatpush1.bf16.msra.mxu0 %v1557
        %1684 = vmatprep.subr.bf16.mxu0 0
        %1685 = vmatpush1.bf16.msra.mxu0 %v1556
        %1686 = vmatprep.subr.bf16.mxu0 0
        %1687 = vmatpush1.bf16.msra.mxu0 %v1555
        %1688 = vmatprep.subr.bf16.mxu0 0
        %1689 = vmatpush1.bf16.msra.mxu0 %v1554
        %1690 = vmatprep.subr.bf16.mxu0 0
        %1691 = vmatpush1.bf16.msra.mxu0 %v1553
        %1692 = vmatprep.subr.bf16.mxu0 0
        %1693 = vmatpush1.bf16.msra.mxu0 %v1552
        %1694 = vmatprep.subr.bf16.mxu0 0
        %1695 = vmatpush1.bf16.msra.mxu0 %v1551
        %1696 = vmatprep.subr.bf16.mxu0 0
        %1697 = vmatpush2.bf16.msra.mxu0 0
        %1698 = vmatprep.subr.bf16.mxu0 0
        %1699 = vmatpush2.bf16.msra.mxu0 0
        %1700 = vmatprep.subr.bf16.mxu0 0
        %1701 = vmatpush2.bf16.msra.mxu0 0
        %1702 = vmatprep.subr.bf16.mxu0 0
        %1703 = vmatpush2.bf16.msra.mxu0 0
        %1704 = vmatprep.subr.bf16.mxu0 0
        %1705 = vmatpush2.bf16.msra.mxu0 0
        %1706 = vmatprep.subr.bf16.mxu0 0
        %1707 = vmatpush2.bf16.msra.mxu0 0
        %1708 = vmatprep.subr.bf16.mxu0 0
        %1709 = vmatpush2.bf16.msra.mxu0 0
        %1710 = vmatprep.subr.bf16.mxu0 0
        %1711 = vmatpush2.bf16.msra.mxu0 0
        %1712 = vmatprep.mubr.bf16.mxu0 0
        %1713 = vmatmul.mubr.bf16.gmra.mxu0 %v849
        %v1714 = vpop.f32.mrf.mxu0
        %v1715 = vadd.f32 %v1618, %v1714
        %v1716 = vpop.f32.mrf.mxu0
        %v1717 = vpop.f32.mrf.mxu0
        %v1718 = vadd.f32 %v1621, %v1717
        %v1719 = vpop.f32.mrf.mxu0
        %1720 = vmatprep.mubr.bf16.mxu0 0
        %1721 = vmatmul.mubr.bf16.gmra.mxu0 %v857
        %v1722 = vpop.f32.mrf.mxu0
        %v1723 = vadd.f32 %v1626, %v1722
        %v1724 = vpop.f32.mrf.mxu0
        %v1725 = vpop.f32.mrf.mxu0
        %v1726 = vadd.f32 %v1629, %v1725
        %v1727 = vpop.f32.mrf.mxu0
        %1728 = vmatprep.mubr.bf16.mxu0 0
        %1729 = vmatmul.mubr.bf16.gmra.mxu0 %v865
        %v1730 = vpop.f32.mrf.mxu0
        %v1731 = vadd.f32 %v1634, %v1730
        %v1732 = vpop.f32.mrf.mxu0
        %v1733 = vpop.f32.mrf.mxu0
        %v1734 = vadd.f32 %v1637, %v1733
        %v1735 = vpop.f32.mrf.mxu0
        %1736 = vmatprep.mubr.bf16.mxu0 0
        %1737 = vmatmul.mubr.bf16.gmra.mxu0 %v1419
        %v1738 = vpop.f32.mrf.mxu0
        %v1739 = vadd.f32 %v1642, %v1738
        %v1740 = vpop.f32.mrf.mxu0
        %v1741 = vpop.f32.mrf.mxu0
        %v1742 = vadd.f32 %v1645, %v1741
        %v1743 = vpop.f32.mrf.mxu0
        %1744 = vmatprep.mubr.bf16.mxu0 0
        %1745 = vmatmul.mubr.bf16.gmra.mxu0 %v881
        %v1746 = vpop.f32.mrf.mxu0
        %v1747 = vadd.f32 %v1650, %v1746
        %v1748 = vpop.f32.mrf.mxu0
        %v1749 = vpop.f32.mrf.mxu0
        %v1750 = vadd.f32 %v1653, %v1749
        %v1751 = vpop.f32.mrf.mxu0
        %1752 = vmatprep.mubr.bf16.mxu0 0
        %1753 = vmatmul.mubr.bf16.gmra.mxu0 %v889
        %v1754 = vpop.f32.mrf.mxu0
        %v1755 = vadd.f32 %v1658, %v1754
        %v1756 = vpop.f32.mrf.mxu0
        %v1757 = vpop.f32.mrf.mxu0
        %v1758 = vadd.f32 %v1661, %v1757
        %v1759 = vpop.f32.mrf.mxu0
        %1760 = vmatprep.mubr.bf16.mxu0 0
        %1761 = vmatmul.mubr.bf16.gmra.mxu0 %v897
        %v1762 = vpop.f32.mrf.mxu0
        %v1763 = vadd.f32 %v1666, %v1762
        %v1764 = vpop.f32.mrf.mxu0
        %v1765 = vpop.f32.mrf.mxu0
        %v1766 = vadd.f32 %v1669, %v1765
        %v1767 = vpop.f32.mrf.mxu0
        %1768 = vmatprep.mubr.bf16.mxu0 0
        %1769 = vmatmul.mubr.bf16.gmra.mxu0 %v1420
        %v1770 = vpop.f32.mrf.mxu0
        %v1771 = vadd.f32 %v1674, %v1770
        %v1772 = vpop.f32.mrf.mxu0
        %v1773 = vpop.f32.mrf.mxu0
        %v1774 = vadd.f32 %v1677, %v1773
        %v1775 = vpop.f32.mrf.mxu0
        %1776 = vdwg.mxu0
        %v1777 = vunpack.c.l.b16 %v918
        %v1778 = vunpack.c.h.b16 %v918
        %v1779 = vunpack.c.l.b16 %v931
        %v1780 = vunpack.c.l.b16 %v944
        %v1781 = vunpack.c.h.b16 %v944
        %v1782 = vunpack.c.l.b16 %v957
        %v1783 = vunpack.c.l.b16 %v970
        %v1784 = vunpack.c.h.b16 %v970
        %v1785 = vunpack.c.l.b16 %v983
        %v1786 = vunpack.c.l.b16 %v996
        %v1787 = vunpack.c.h.b16 %v996
        %v1788 = vunpack.c.l.b16 %v1009
        %v1789 = vunpack.c.l.b16 %v1022
        %v1790 = vunpack.c.h.b16 %v1022
        %v1791 = vunpack.c.l.b16 %v1035
        %v1792 = vunpack.c.l.b16 %v1048
        %v1793 = vunpack.c.h.b16 %v1048
        %v1794 = vunpack.c.l.b16 %v1061
        %v1795 = vunpack.c.l.b16 %v1074
        %v1796 = vunpack.c.h.b16 %v1074
        %v1797 = vunpack.c.l.b16 %v1087
        %v1798 = vunpack.c.l.b16 %v1100
        %v1799 = vunpack.c.h.b16 %v1100
        %v1800 = vunpack.c.l.b16 %v1113
        %v1801 = vunpack.c.l.b16 %v1126
        %v1802 = vunpack.c.h.b16 %v1126
        %v1803 = vunpack.c.l.b16 %v1139
        %v1804 = vunpack.c.l.b16 %v1152
        %v1805 = vunpack.c.h.b16 %v1152
        %v1806 = vunpack.c.l.b16 %v1165
        %v1807 = vunpack.c.l.b16 %v1178
        %v1808 = vunpack.c.h.b16 %v1178
        %v1809 = vunpack.c.l.b16 %v1191
        %v1810 = vunpack.c.l.b16 %v1204
        %v1811 = vunpack.c.h.b16 %v1204
        %v1812 = vunpack.c.l.b16 %v1217
        %v1813 = vunpack.c.l.b16 %v1230
        %v1814 = vunpack.c.h.b16 %v1230
        %v1815 = vunpack.c.l.b16 %v1243
        %v1816 = vunpack.c.l.b16 %v1256
        %v1817 = vunpack.c.h.b16 %v1256
        %v1818 = vunpack.c.l.b16 %v1269
        %v1819 = vunpack.c.l.b16 %v1282
        %v1820 = vunpack.c.h.b16 %v1282
        %v1821 = vunpack.c.l.b16 %v1295
        %v1822 = vunpack.c.l.b16 %v1308
        %v1823 = vunpack.c.h.b16 %v1308
        %v1824 = vunpack.c.l.b16 %v1321
        %v1825 = vpack.c.b16 %v1780, %v1777
        %v1826 = vpack.c.b16 %v1781, %v1778
        %v1827 = vpack.c.b16 %v1782, %v1779
        %v1828 = vpack.c.b16 %v1786, %v1783
        %v1829 = vpack.c.b16 %v1787, %v1784
        %v1830 = vpack.c.b16 %v1788, %v1785
        %v1831 = vpack.c.b16 %v1792, %v1789
        %v1832 = vpack.c.b16 %v1793, %v1790
        %v1833 = vpack.c.b16 %v1794, %v1791
        %v1834 = vpack.c.b16 %v1798, %v1795
        %v1835 = vpack.c.b16 %v1799, %v1796
        %v1836 = vpack.c.b16 %v1800, %v1797
        %v1837 = vpack.c.b16 %v1804, %v1801
        %v1838 = vpack.c.b16 %v1805, %v1802
        %v1839 = vpack.c.b16 %v1806, %v1803
        %v1840 = vpack.c.b16 %v1810, %v1807
        %v1841 = vpack.c.b16 %v1811, %v1808
        %v1842 = vpack.c.b16 %v1812, %v1809
        %v1843 = vpack.c.b16 %v1816, %v1813
        %v1844 = vpack.c.b16 %v1817, %v1814
        %v1845 = vpack.c.b16 %v1818, %v1815
        %v1846 = vpack.c.b16 %v1822, %v1819
        %v1847 = vpack.c.b16 %v1823, %v1820
        %v1848 = vpack.c.b16 %v1824, %v1821
        %v1921 = vunpack.c.l.b16 %v1322
        %v1922 = vunpack.c.l.b16 %v1323
        %v1923 = vunpack.c.l.b16 %v1324
        %v1924 = vunpack.c.l.b16 %v1325
        %v1925 = vunpack.c.l.b16 %v1326
        %v1926 = vunpack.c.l.b16 %v1327
        %v1927 = vunpack.c.l.b16 %v1328
        %v1928 = vunpack.c.l.b16 %v1329
        %v1929 = vunpack.c.l.b16 %v1330
        %v1930 = vunpack.c.l.b16 %v1331
        %v1931 = vunpack.c.l.b16 %v1332
        %v1932 = vunpack.c.l.b16 %v1333
        %v1933 = vunpack.c.l.b16 %v1334
        %v1934 = vunpack.c.l.b16 %v1335
        %v1935 = vunpack.c.l.b16 %v1336
        %v1936 = vunpack.c.l.b16 %v1337
        %v1937 = vunpack.c.l.b16 %v1338
        %v1938 = vunpack.c.l.b16 %v1339
        %v1939 = vunpack.c.l.b16 %v1340
        %v1940 = vunpack.c.l.b16 %v1341
        %v1941 = vunpack.c.l.b16 %v1342
        %v1942 = vunpack.c.l.b16 %v1343
        %v1943 = vunpack.c.l.b16 %v1344
        %v1944 = vunpack.c.l.b16 %v1345
        %v1945 = vunpack.c.l.b16 %v1346
        %v1946 = vunpack.c.l.b16 %v1347
        %v1947 = vunpack.c.l.b16 %v1348
        %v1948 = vunpack.c.l.b16 %v1349
        %v1949 = vunpack.c.l.b16 %v1350
        %v1950 = vunpack.c.l.b16 %v1351
        %v1951 = vunpack.c.l.b16 %v1352
        %v1952 = vunpack.c.l.b16 %v1353
        %v1953 = vunpack.c.l.b16 %v1354
        %v1954 = vunpack.c.l.b16 %v1355
        %v1955 = vunpack.c.l.b16 %v1356
        %v1956 = vunpack.c.l.b16 %v1357
        %v1957 = vunpack.c.l.b16 %v1358
        %v1958 = vunpack.c.l.b16 %v1359
        %v1959 = vunpack.c.l.b16 %v1360
        %v1960 = vunpack.c.l.b16 %v1361
        %v1961 = vunpack.c.l.b16 %v1362
        %v1962 = vunpack.c.l.b16 %v1363
        %v1963 = vunpack.c.l.b16 %v1364
        %v1964 = vunpack.c.l.b16 %v1365
        %v1965 = vunpack.c.l.b16 %v1366
        %v1966 = vunpack.c.l.b16 %v1367
        %v1967 = vunpack.c.l.b16 %v1368
        %v1968 = vunpack.c.l.b16 %v1369
        %v1969 = vpack.c.b16 %v1922, %v1921
        %v1970 = vpack.c.b16 %v1924, %v1923
        %v1971 = vpack.c.b16 %v1926, %v1925
        %v1972 = vpack.c.b16 %v1928, %v1927
        %v1973 = vpack.c.b16 %v1930, %v1929
        %v1974 = vpack.c.b16 %v1932, %v1931
        %v1975 = vpack.c.b16 %v1934, %v1933
        %v1976 = vpack.c.b16 %v1936, %v1935
        %v1977 = vpack.c.b16 %v1938, %v1937
        %v1978 = vpack.c.b16 %v1940, %v1939
        %v1979 = vpack.c.b16 %v1942, %v1941
        %v1980 = vpack.c.b16 %v1944, %v1943
        %v1981 = vpack.c.b16 %v1946, %v1945
        %v1982 = vpack.c.b16 %v1948, %v1947
        %v1983 = vpack.c.b16 %v1950, %v1949
        %v1984 = vpack.c.b16 %v1952, %v1951
        %v1985 = vpack.c.b16 %v1954, %v1953
        %v1986 = vpack.c.b16 %v1956, %v1955
        %v1987 = vpack.c.b16 %v1958, %v1957
        %v1988 = vpack.c.b16 %v1960, %v1959
        %v1989 = vpack.c.b16 %v1962, %v1961
        %v1990 = vpack.c.b16 %v1964, %v1963
        %v1991 = vpack.c.b16 %v1966, %v1965
        %v1992 = vpack.c.b16 %v1968, %v1967
        %2017 = vmatprep.subr.bf16.mxu0 0
        %2018 = vmatpush1.bf16.msra.mxu0 %v1976
        %2019 = vmatprep.subr.bf16.mxu0 0
        %2020 = vmatpush1.bf16.msra.mxu0 %v1975
        %2021 = vmatprep.subr.bf16.mxu0 0
        %2022 = vmatpush1.bf16.msra.mxu0 %v1974
        %2023 = vmatprep.subr.bf16.mxu0 0
        %2024 = vmatpush1.bf16.msra.mxu0 %v1973
        %2025 = vmatprep.subr.bf16.mxu0 0
        %2026 = vmatpush1.bf16.msra.mxu0 %v1972
        %2027 = vmatprep.subr.bf16.mxu0 0
        %2028 = vmatpush1.bf16.msra.mxu0 %v1971
        %2029 = vmatprep.subr.bf16.mxu0 0
        %2030 = vmatpush1.bf16.msra.mxu0 %v1970
        %2031 = vmatprep.subr.bf16.mxu0 0
        %2032 = vmatpush1.bf16.msra.mxu0 %v1969
        %2033 = vmatprep.subr.bf16.mxu0 0
        %2034 = vmatpush2.bf16.msra.mxu0 %v1984
        %2035 = vmatprep.subr.bf16.mxu0 0
        %2036 = vmatpush2.bf16.msra.mxu0 %v1983
        %2037 = vmatprep.subr.bf16.mxu0 0
        %2038 = vmatpush2.bf16.msra.mxu0 %v1982
        %2039 = vmatprep.subr.bf16.mxu0 0
        %2040 = vmatpush2.bf16.msra.mxu0 %v1981
        %2041 = vmatprep.subr.bf16.mxu0 0
        %2042 = vmatpush2.bf16.msra.mxu0 %v1980
        %2043 = vmatprep.subr.bf16.mxu0 0
        %2044 = vmatpush2.bf16.msra.mxu0 %v1979
        %2045 = vmatprep.subr.bf16.mxu0 0
        %2046 = vmatpush2.bf16.msra.mxu0 %v1978
        %2047 = vmatprep.subr.bf16.mxu0 0
        %2048 = vmatpush2.bf16.msra.mxu0 %v1977
        %2049 = vmatprep.mubr.bf16.mxu0 %v1826
        %2050 = vmatmul.mubr.bf16.gmra.mxu0 %v1825
        %v2051 = vpop.f32.mrf.mxu0
        %v2052 = vadd.f32 %v1715, %v2051
        %v2053 = vpop.f32.mrf.mxu0
        %v2054 = vpop.f32.mrf.mxu0
        %v2055 = vadd.f32 %v1718, %v2054
        %v2056 = vpop.f32.mrf.mxu0
        %2057 = vmatprep.mubr.bf16.mxu0 %v1829
        %2058 = vmatmul.mubr.bf16.gmra.mxu0 %v1828
        %v2059 = vpop.f32.mrf.mxu0
        %v2060 = vadd.f32 %v1723, %v2059
        %v2061 = vpop.f32.mrf.mxu0
        %v2062 = vpop.f32.mrf.mxu0
        %v2063 = vadd.f32 %v1726, %v2062
        %v2064 = vpop.f32.mrf.mxu0
        %2065 = vmatprep.mubr.bf16.mxu0 %v1832
        %2066 = vmatmul.mubr.bf16.gmra.mxu0 %v1831
        %v2067 = vpop.f32.mrf.mxu0
        %v2068 = vadd.f32 %v1731, %v2067
        %v2069 = vpop.f32.mrf.mxu0
        %v2070 = vpop.f32.mrf.mxu0
        %v2071 = vadd.f32 %v1734, %v2070
        %v2072 = vpop.f32.mrf.mxu0
        %2073 = vmatprep.mubr.bf16.mxu0 %v1835
        %2074 = vmatmul.mubr.bf16.gmra.mxu0 %v1834
        %v2075 = vpop.f32.mrf.mxu0
        %v2076 = vadd.f32 %v1739, %v2075
        %v2077 = vpop.f32.mrf.mxu0
        %v2078 = vpop.f32.mrf.mxu0
        %v2079 = vadd.f32 %v1742, %v2078
        %v2080 = vpop.f32.mrf.mxu0
        %2081 = vmatprep.mubr.bf16.mxu0 %v1838
        %2082 = vmatmul.mubr.bf16.gmra.mxu0 %v1837
        %v2083 = vpop.f32.mrf.mxu0
        %v2084 = vadd.f32 %v1747, %v2083
        %v2085 = vpop.f32.mrf.mxu0
        %v2086 = vpop.f32.mrf.mxu0
        %v2087 = vadd.f32 %v1750, %v2086
        %v2088 = vpop.f32.mrf.mxu0
        %2089 = vmatprep.mubr.bf16.mxu0 %v1841
        %2090 = vmatmul.mubr.bf16.gmra.mxu0 %v1840
        %v2091 = vpop.f32.mrf.mxu0
        %v2092 = vadd.f32 %v1755, %v2091
        %v2093 = vpop.f32.mrf.mxu0
        %v2094 = vpop.f32.mrf.mxu0
        %v2095 = vadd.f32 %v1758, %v2094
        %v2096 = vpop.f32.mrf.mxu0
        %2097 = vmatprep.mubr.bf16.mxu0 %v1844
        %2098 = vmatmul.mubr.bf16.gmra.mxu0 %v1843
        %v2099 = vpop.f32.mrf.mxu0
        %v2100 = vadd.f32 %v1763, %v2099
        %v2101 = vpop.f32.mrf.mxu0
        %v2102 = vpop.f32.mrf.mxu0
        %v2103 = vadd.f32 %v1766, %v2102
        %v2104 = vpop.f32.mrf.mxu0
        %2105 = vmatprep.mubr.bf16.mxu0 %v1847
        %2106 = vmatmul.mubr.bf16.gmra.mxu0 %v1846
        %v2107 = vpop.f32.mrf.mxu0
        %v2108 = vadd.f32 %v1771, %v2107
        %v2109 = vpop.f32.mrf.mxu0
        %v2110 = vpop.f32.mrf.mxu0
        %v2111 = vadd.f32 %v1774, %v2110
        %v2112 = vpop.f32.mrf.mxu0
        %2113 = vdwg.mxu0
        %2114 = vmatprep.subr.bf16.mxu0 0
        %2115 = vmatpush1.bf16.msra.mxu0 %v1992
        %2116 = vmatprep.subr.bf16.mxu0 0
        %2117 = vmatpush1.bf16.msra.mxu0 %v1991
        %2118 = vmatprep.subr.bf16.mxu0 0
        %2119 = vmatpush1.bf16.msra.mxu0 %v1990
        %2120 = vmatprep.subr.bf16.mxu0 0
        %2121 = vmatpush1.bf16.msra.mxu0 %v1989
        %2122 = vmatprep.subr.bf16.mxu0 0
        %2123 = vmatpush1.bf16.msra.mxu0 %v1988
        %2124 = vmatprep.subr.bf16.mxu0 0
        %2125 = vmatpush1.bf16.msra.mxu0 %v1987
        %2126 = vmatprep.subr.bf16.mxu0 0
        %2127 = vmatpush1.bf16.msra.mxu0 %v1986
        %2128 = vmatprep.subr.bf16.mxu0 0
        %2129 = vmatpush1.bf16.msra.mxu0 %v1985
        %2130 = vmatprep.subr.bf16.mxu0 0
        %2131 = vmatpush2.bf16.msra.mxu0 0
        %2132 = vmatprep.subr.bf16.mxu0 0
        %2133 = vmatpush2.bf16.msra.mxu0 0
        %2134 = vmatprep.subr.bf16.mxu0 0
        %2135 = vmatpush2.bf16.msra.mxu0 0
        %2136 = vmatprep.subr.bf16.mxu0 0
        %2137 = vmatpush2.bf16.msra.mxu0 0
        %2138 = vmatprep.subr.bf16.mxu0 0
        %2139 = vmatpush2.bf16.msra.mxu0 0
        %2140 = vmatprep.subr.bf16.mxu0 0
        %2141 = vmatpush2.bf16.msra.mxu0 0
        %2142 = vmatprep.subr.bf16.mxu0 0
        %2143 = vmatpush2.bf16.msra.mxu0 0
        %2144 = vmatprep.subr.bf16.mxu0 0
        %2145 = vmatpush2.bf16.msra.mxu0 0
        %2146 = vmatprep.mubr.bf16.mxu0 0
        %2147 = vmatmul.mubr.bf16.gmra.mxu0 %v1827
        %v2148 = vpop.f32.mrf.mxu0
        %v2149 = vadd.f32 %v2052, %v2148
        %v2150 = vpop.f32.mrf.mxu0
        %v2151 = vpop.f32.mrf.mxu0
        %v2152 = vadd.f32 %v2055, %v2151
        %v2153 = vpop.f32.mrf.mxu0
        %2154 = vmatprep.mubr.bf16.mxu0 0
        %2155 = vmatmul.mubr.bf16.gmra.mxu0 %v1830
        %v2156 = vpop.f32.mrf.mxu0
        %v2157 = vadd.f32 %v2060, %v2156
        %v2158 = vpop.f32.mrf.mxu0
        %v2159 = vpop.f32.mrf.mxu0
        %v2160 = vadd.f32 %v2063, %v2159
        %v2161 = vpop.f32.mrf.mxu0
        %2162 = vmatprep.mubr.bf16.mxu0 0
        %2163 = vmatmul.mubr.bf16.gmra.mxu0 %v1833
        %v2164 = vpop.f32.mrf.mxu0
        %v2165 = vadd.f32 %v2068, %v2164
        %v2166 = vpop.f32.mrf.mxu0
        %v2167 = vpop.f32.mrf.mxu0
        %v2168 = vadd.f32 %v2071, %v2167
        %v2169 = vpop.f32.mrf.mxu0
        %2170 = vmatprep.mubr.bf16.mxu0 0
        %2171 = vmatmul.mubr.bf16.gmra.mxu0 %v1836
        %v2172 = vpop.f32.mrf.mxu0
        %v2173 = vadd.f32 %v2076, %v2172
        %v2174 = vpop.f32.mrf.mxu0
        %v2175 = vpop.f32.mrf.mxu0
        %v2176 = vadd.f32 %v2079, %v2175
        %v2177 = vpop.f32.mrf.mxu0
        %2178 = vmatprep.mubr.bf16.mxu0 0
        %2179 = vmatmul.mubr.bf16.gmra.mxu0 %v1839
        %v2180 = vpop.f32.mrf.mxu0
        %v2181 = vadd.f32 %v2084, %v2180
        %v2182 = vpop.f32.mrf.mxu0
        %v2183 = vpop.f32.mrf.mxu0
        %v2184 = vadd.f32 %v2087, %v2183
        %v2185 = vpop.f32.mrf.mxu0
        %2186 = vmatprep.mubr.bf16.mxu0 0
        %2187 = vmatmul.mubr.bf16.gmra.mxu0 %v1842
        %v2188 = vpop.f32.mrf.mxu0
        %v2189 = vadd.f32 %v2092, %v2188
        %v2190 = vpop.f32.mrf.mxu0
        %v2191 = vpop.f32.mrf.mxu0
        %v2192 = vadd.f32 %v2095, %v2191
        %v2193 = vpop.f32.mrf.mxu0
        %2194 = vmatprep.mubr.bf16.mxu0 0
        %2195 = vmatmul.mubr.bf16.gmra.mxu0 %v1845
        %v2196 = vpop.f32.mrf.mxu0
        %v2197 = vadd.f32 %v2100, %v2196
        %v2198 = vpop.f32.mrf.mxu0
        %v2199 = vpop.f32.mrf.mxu0
        %v2200 = vadd.f32 %v2103, %v2199
        %v2201 = vpop.f32.mrf.mxu0
        %2202 = vmatprep.mubr.bf16.mxu0 0
        %2203 = vmatmul.mubr.bf16.gmra.mxu0 %v1848
        %v2204 = vpop.f32.mrf.mxu0
        %v2205 = vadd.f32 %v2108, %v2204
        %v2206 = vpop.f32.mrf.mxu0
        %v2207 = vpop.f32.mrf.mxu0
        %v2208 = vadd.f32 %v2111, %v2207
        %v2209 = vpop.f32.mrf.mxu0
        %2210 = vdwg.mxu0
        %v2211 = vld [vmem:[#allocation2 + $0x4] sm:$0xf]
        %v2212 = vld [vmem:[#allocation2 + $0x8] sm:$0x1]
        %v2213 = vld [vmem:[#allocation2 + $0x10] sm:$0xf]
        %v2214 = vld [vmem:[#allocation2 + $0x14] sm:$0x1]
        %v2215 = vld [vmem:[#allocation2 + $0x1c] sm:$0xf]
        %v2216 = vld [vmem:[#allocation2 + $0x20] sm:$0x1]
        %v2217 = vld [vmem:[#allocation2 + $0x28] sm:$0xf]
        %v2218 = vld [vmem:[#allocation2 + $0x2c] sm:$0x1]
        %v2219 = vld [vmem:[#allocation2 + $0x34] sm:$0xf]
        %v2220 = vld [vmem:[#allocation2 + $0x38] sm:$0x1]
        %v2221 = vld [vmem:[#allocation2 + $0x40] sm:$0xf]
        %v2222 = vld [vmem:[#allocation2 + $0x44] sm:$0x1]
        %v2223 = vld [vmem:[#allocation2 + $0x4c] sm:$0xf]
        %v2224 = vld [vmem:[#allocation2 + $0x50] sm:$0x1]
        %v2225 = vld [vmem:[#allocation2 + $0x58] sm:$0xf]
        %v2226 = vld [vmem:[#allocation2 + $0x5c] sm:$0x1]
        %v2227 = vld [vmem:[#allocation2 + $0x64] sm:$0xf]
        %v2228 = vld [vmem:[#allocation2 + $0x68] sm:$0x1]
        %v2229 = vld [vmem:[#allocation2 + $0x70] sm:$0xf]
        %v2230 = vld [vmem:[#allocation2 + $0x74] sm:$0x1]
        %v2231 = vld [vmem:[#allocation2 + $0x7c] sm:$0xf]
        %v2232 = vld [vmem:[#allocation2 + $0x80] sm:$0x1]
        %v2233 = vld [vmem:[#allocation2 + $0x88] sm:$0xf]
        %v2234 = vld [vmem:[#allocation2 + $0x8c] sm:$0x1]
        %v2235 = vld [vmem:[#allocation2 + $0x94] sm:$0xf]
        %v2236 = vld [vmem:[#allocation2 + $0x98] sm:$0x1]
        %v2237 = vld [vmem:[#allocation2 + $0xa0] sm:$0xf]
        %v2238 = vld [vmem:[#allocation2 + $0xa4] sm:$0x1]
        %v2239 = vld [vmem:[#allocation2 + $0xac] sm:$0xf]
        %v2240 = vld [vmem:[#allocation2 + $0xb0] sm:$0x1]
        %v2241 = vld [vmem:[#allocation2 + $0xb8] sm:$0xf]
        %v2242 = vld [vmem:[#allocation2 + $0xbc] sm:$0x1]
        %v2243 = vld [vmem:[#allocation2 + $0xc4] sm:$0xf]
        %v2244 = vld [vmem:[#allocation2 + $0xc8] sm:$0x1]
        %v2245 = vld [vmem:[#allocation2 + $0xd0] sm:$0xf]
        %v2246 = vld [vmem:[#allocation2 + $0xd4] sm:$0x1]
        %v2247 = vld [vmem:[#allocation2 + $0xdc] sm:$0xf]
        %v2248 = vld [vmem:[#allocation2 + $0xe0] sm:$0x1]
        %v2249 = vld [vmem:[#allocation2 + $0xe8] sm:$0xf]
        %v2250 = vld [vmem:[#allocation2 + $0xec] sm:$0x1]
        %v2283 = vunpack.c.l.b16 %v2211
        %v2284 = vunpack.c.l.b16 %v2212
        %v2285 = vunpack.c.l.b16 %v2213
        %v2286 = vunpack.c.l.b16 %v2214
        %v2287 = vunpack.c.l.b16 %v2215
        %v2288 = vunpack.c.l.b16 %v2216
        %v2289 = vunpack.c.l.b16 %v2217
        %v2290 = vunpack.c.l.b16 %v2218
        %v2291 = vunpack.c.l.b16 %v2219
        %v2292 = vunpack.c.l.b16 %v2220
        %v2293 = vunpack.c.l.b16 %v2221
        %v2294 = vunpack.c.l.b16 %v2222
        %v2295 = vunpack.c.l.b16 %v2223
        %v2296 = vunpack.c.l.b16 %v2224
        %v2297 = vunpack.c.l.b16 %v2225
        %v2298 = vunpack.c.l.b16 %v2226
        %v2299 = vunpack.c.l.b16 %v2231
        %v2300 = vunpack.c.l.b16 %v2232
        %v2301 = vunpack.c.l.b16 %v2233
        %v2302 = vunpack.c.l.b16 %v2234
        %v2303 = vunpack.c.l.b16 %v2235
        %v2304 = vunpack.c.l.b16 %v2236
        %v2305 = vunpack.c.l.b16 %v2237
        %v2306 = vunpack.c.l.b16 %v2238
        %v2307 = vunpack.c.l.b16 %v2239
        %v2308 = vunpack.c.l.b16 %v2240
        %v2309 = vunpack.c.l.b16 %v2241
        %v2310 = vunpack.c.l.b16 %v2242
        %v2311 = vunpack.c.l.b16 %v2243
        %v2312 = vunpack.c.l.b16 %v2244
        %v2313 = vunpack.c.l.b16 %v2245
        %v2314 = vunpack.c.l.b16 %v2246
        %v2319 = vunpack.c.l.b16 %v2227
        %v2320 = vunpack.c.l.b16 %v2228
        %v2321 = vunpack.c.l.b16 %v2247
        %v2322 = vunpack.c.l.b16 %v2248
        %v2327 = vunpack.c.l.b16 %v2229
        %v2328 = vunpack.c.l.b16 %v2230
        %v2329 = vunpack.c.l.b16 %v2249
        %v2330 = vunpack.c.l.b16 %v2250
        %v2331 = vpack.c.b16 %v2285, %v2283
        %v2332 = vpack.c.b16 %v2287, %v2287
        %v2333 = vpack.c.b16 %v2286, %v2284
        %v2334 = vpack.c.b16 %v2288, %v2288
        %v2335 = vpack.c.b16 %v2287, %v2285
        %v2336 = vpack.c.b16 %v2289, %v2289
        %v2337 = vpack.c.b16 %v2288, %v2286
        %v2338 = vpack.c.b16 %v2290, %v2290
        %v2339 = vpack.c.b16 %v2289, %v2287
        %v2340 = vpack.c.b16 %v2291, %v2291
        %v2341 = vpack.c.b16 %v2290, %v2288
        %v2342 = vpack.c.b16 %v2292, %v2292
        %v2343 = vpack.c.b16 %v2291, %v2289
        %v2344 = vpack.c.b16 %v2293, %v2293
        %v2345 = vpack.c.b16 %v2292, %v2290
        %v2346 = vpack.c.b16 %v2294, %v2294
        %v2347 = vpack.c.b16 %v2293, %v2291
        %v2348 = vpack.c.b16 %v2295, %v2295
        %v2349 = vpack.c.b16 %v2294, %v2292
        %v2350 = vpack.c.b16 %v2296, %v2296
        %v2351 = vpack.c.b16 %v2295, %v2293
        %v2352 = vpack.c.b16 %v2297, %v2297
        %v2353 = vpack.c.b16 %v2296, %v2294
        %v2354 = vpack.c.b16 %v2298, %v2298
        %v2355 = vpack.c.b16 %v2297, %v2295
        %v2356 = vpack.c.b16 %v2319, %v2319
        %v2357 = vpack.c.b16 %v2298, %v2296
        %v2358 = vpack.c.b16 %v2320, %v2320
        %v2359 = vpack.c.b16 %v2319, %v2297
        %v2360 = vpack.c.b16 %v2327, %v2327
        %v2361 = vpack.c.b16 %v2320, %v2298
        %v2362 = vpack.c.b16 %v2328, %v2328
        %v2363 = vpack.c.b16 %v2301, %v2299
        %v2364 = vpack.c.b16 %v2303, %v2303
        %v2365 = vpack.c.b16 %v2302, %v2300
        %v2366 = vpack.c.b16 %v2304, %v2304
        %v2367 = vpack.c.b16 %v2303, %v2301
        %v2368 = vpack.c.b16 %v2305, %v2305
        %v2369 = vpack.c.b16 %v2304, %v2302
        %v2370 = vpack.c.b16 %v2306, %v2306
        %v2371 = vpack.c.b16 %v2305, %v2303
        %v2372 = vpack.c.b16 %v2307, %v2307
        %v2373 = vpack.c.b16 %v2306, %v2304
        %v2374 = vpack.c.b16 %v2308, %v2308
        %v2375 = vpack.c.b16 %v2307, %v2305
        %v2376 = vpack.c.b16 %v2309, %v2309
        %v2377 = vpack.c.b16 %v2308, %v2306
        %v2378 = vpack.c.b16 %v2310, %v2310
        %v2379 = vpack.c.b16 %v2309, %v2307
        %v2380 = vpack.c.b16 %v2311, %v2311
        %v2381 = vpack.c.b16 %v2310, %v2308
        %v2382 = vpack.c.b16 %v2312, %v2312
        %v2383 = vpack.c.b16 %v2311, %v2309
        %v2384 = vpack.c.b16 %v2313, %v2313
        %v2385 = vpack.c.b16 %v2312, %v2310
        %v2386 = vpack.c.b16 %v2314, %v2314
        %v2387 = vpack.c.b16 %v2313, %v2311
        %v2388 = vpack.c.b16 %v2321, %v2321
        %v2389 = vpack.c.b16 %v2314, %v2312
        %v2390 = vpack.c.b16 %v2322, %v2322
        %v2391 = vpack.c.b16 %v2321, %v2313
        %v2392 = vpack.c.b16 %v2329, %v2329
        %v2393 = vpack.c.b16 %v2322, %v2314
        %v2394 = vpack.c.b16 %v2330, %v2330
        %vm2395 = vsmask.f32 3328
        %vm2396 = vsmask.f32 7440
        %vm2397 = vmor %vm2395, %vm2396
        %v2399 = vshrl.u32 %v2331, 16
        %v2401 = vrot.slane %v2399, 4
        %v2402 = vshll.u32 %v2331, 16
        %v2404 = vrot.slane %v2402, 5
        %v2405 = vor.u32 %v2401, %v2404
        %v2406 = vrot.slane %v2405, 4
        %v2408 = vshll.u32 %v2333, 16
        %v2410 = vrot.slane %v2408, 5
        %v2411 = vsel %vm2397, %v2406, %v2410
        %v2413 = vshrl.u32 %v2332, 16
        %v2415 = vrot.slane %v2413, 4
        %v2416 = vshll.u32 %v2332, 16
        %v2418 = vrot.slane %v2416, 5
        %v2419 = vor.u32 %v2415, %v2418
        %v2420 = vrot.slane %v2419, 4
        %v2422 = vshll.u32 %v2334, 16
        %v2424 = vrot.slane %v2422, 5
        %v2425 = vsel %vm2397, %v2420, %v2424
        %v2427 = vshrl.u32 %v2335, 16
        %v2429 = vrot.slane %v2427, 4
        %v2430 = vshll.u32 %v2335, 16
        %v2432 = vrot.slane %v2430, 5
        %v2433 = vor.u32 %v2429, %v2432
        %v2434 = vrot.slane %v2433, 4
        %v2436 = vshll.u32 %v2337, 16
        %v2438 = vrot.slane %v2436, 5
        %v2439 = vsel %vm2397, %v2434, %v2438
        %v2441 = vshrl.u32 %v2336, 16
        %v2443 = vrot.slane %v2441, 4
        %v2444 = vshll.u32 %v2336, 16
        %v2446 = vrot.slane %v2444, 5
        %v2447 = vor.u32 %v2443, %v2446
        %v2448 = vrot.slane %v2447, 4
        %v2450 = vshll.u32 %v2338, 16
        %v2452 = vrot.slane %v2450, 5
        %v2453 = vsel %vm2397, %v2448, %v2452
        %v2455 = vshrl.u32 %v2339, 16
        %v2457 = vrot.slane %v2455, 4
        %v2458 = vshll.u32 %v2339, 16
        %v2460 = vrot.slane %v2458, 5
        %v2461 = vor.u32 %v2457, %v2460
        %v2462 = vrot.slane %v2461, 4
        %v2464 = vshll.u32 %v2341, 16
        %v2466 = vrot.slane %v2464, 5
        %v2467 = vsel %vm2397, %v2462, %v2466
        %v2469 = vshrl.u32 %v2340, 16
        %v2471 = vrot.slane %v2469, 4
        %v2472 = vshll.u32 %v2340, 16
        %v2474 = vrot.slane %v2472, 5
        %v2475 = vor.u32 %v2471, %v2474
        %v2476 = vrot.slane %v2475, 4
        %v2478 = vshll.u32 %v2342, 16
        %v2480 = vrot.slane %v2478, 5
        %v2481 = vsel %vm2397, %v2476, %v2480
        %v2483 = vshrl.u32 %v2343, 16
        %v2485 = vrot.slane %v2483, 4
        %v2486 = vshll.u32 %v2343, 16
        %v2488 = vrot.slane %v2486, 5
        %v2489 = vor.u32 %v2485, %v2488
        %v2490 = vrot.slane %v2489, 4
        %v2492 = vshll.u32 %v2345, 16
        %v2494 = vrot.slane %v2492, 5
        %v2495 = vsel %vm2397, %v2490, %v2494
        %v2497 = vshrl.u32 %v2344, 16
        %v2499 = vrot.slane %v2497, 4
        %v2500 = vshll.u32 %v2344, 16
        %v2502 = vrot.slane %v2500, 5
        %v2503 = vor.u32 %v2499, %v2502
        %v2504 = vrot.slane %v2503, 4
        %v2506 = vshll.u32 %v2346, 16
        %v2508 = vrot.slane %v2506, 5
        %v2509 = vsel %vm2397, %v2504, %v2508
        %v2511 = vshrl.u32 %v2347, 16
        %v2513 = vrot.slane %v2511, 4
        %v2514 = vshll.u32 %v2347, 16
        %v2516 = vrot.slane %v2514, 5
        %v2517 = vor.u32 %v2513, %v2516
        %v2518 = vrot.slane %v2517, 4
        %v2520 = vshll.u32 %v2349, 16
        %v2522 = vrot.slane %v2520, 5
        %v2523 = vsel %vm2397, %v2518, %v2522
        %v2525 = vshrl.u32 %v2348, 16
        %v2527 = vrot.slane %v2525, 4
        %v2528 = vshll.u32 %v2348, 16
        %v2530 = vrot.slane %v2528, 5
        %v2531 = vor.u32 %v2527, %v2530
        %v2532 = vrot.slane %v2531, 4
        %v2534 = vshll.u32 %v2350, 16
        %v2536 = vrot.slane %v2534, 5
        %v2537 = vsel %vm2397, %v2532, %v2536
        %v2539 = vshrl.u32 %v2351, 16
        %v2541 = vrot.slane %v2539, 4
        %v2542 = vshll.u32 %v2351, 16
        %v2544 = vrot.slane %v2542, 5
        %v2545 = vor.u32 %v2541, %v2544
        %v2546 = vrot.slane %v2545, 4
        %v2548 = vshll.u32 %v2353, 16
        %v2550 = vrot.slane %v2548, 5
        %v2551 = vsel %vm2397, %v2546, %v2550
        %v2553 = vshrl.u32 %v2352, 16
        %v2555 = vrot.slane %v2553, 4
        %v2556 = vshll.u32 %v2352, 16
        %v2558 = vrot.slane %v2556, 5
        %v2559 = vor.u32 %v2555, %v2558
        %v2560 = vrot.slane %v2559, 4
        %v2562 = vshll.u32 %v2354, 16
        %v2564 = vrot.slane %v2562, 5
        %v2565 = vsel %vm2397, %v2560, %v2564
        %v2567 = vshrl.u32 %v2355, 16
        %v2569 = vrot.slane %v2567, 4
        %v2570 = vshll.u32 %v2355, 16
        %v2572 = vrot.slane %v2570, 5
        %v2573 = vor.u32 %v2569, %v2572
        %v2574 = vrot.slane %v2573, 4
        %v2576 = vshll.u32 %v2357, 16
        %v2578 = vrot.slane %v2576, 5
        %v2579 = vsel %vm2397, %v2574, %v2578
        %v2581 = vshrl.u32 %v2356, 16
        %v2583 = vrot.slane %v2581, 4
        %v2584 = vshll.u32 %v2356, 16
        %v2586 = vrot.slane %v2584, 5
        %v2587 = vor.u32 %v2583, %v2586
        %v2588 = vrot.slane %v2587, 4
        %v2590 = vshll.u32 %v2358, 16
        %v2592 = vrot.slane %v2590, 5
        %v2593 = vsel %vm2397, %v2588, %v2592
        %v2595 = vshrl.u32 %v2359, 16
        %v2597 = vrot.slane %v2595, 4
        %v2598 = vshll.u32 %v2359, 16
        %v2600 = vrot.slane %v2598, 5
        %v2601 = vor.u32 %v2597, %v2600
        %v2602 = vrot.slane %v2601, 4
        %v2604 = vshll.u32 %v2361, 16
        %v2606 = vrot.slane %v2604, 5
        %v2607 = vsel %vm2397, %v2602, %v2606
        %v2609 = vshrl.u32 %v2360, 16
        %v2611 = vrot.slane %v2609, 4
        %v2612 = vshll.u32 %v2360, 16
        %v2614 = vrot.slane %v2612, 5
        %v2615 = vor.u32 %v2611, %v2614
        %v2616 = vrot.slane %v2615, 4
        %v2618 = vshll.u32 %v2362, 16
        %v2620 = vrot.slane %v2618, 5
        %v2621 = vsel %vm2397, %v2616, %v2620
        %v2623 = vshrl.u32 %v2363, 16
        %v2625 = vrot.slane %v2623, 4
        %v2626 = vshll.u32 %v2363, 16
        %v2628 = vrot.slane %v2626, 5
        %v2629 = vor.u32 %v2625, %v2628
        %v2630 = vrot.slane %v2629, 4
        %v2632 = vshll.u32 %v2365, 16
        %v2634 = vrot.slane %v2632, 5
        %v2635 = vsel %vm2397, %v2630, %v2634
        %v2637 = vshrl.u32 %v2364, 16
        %v2639 = vrot.slane %v2637, 4
        %v2640 = vshll.u32 %v2364, 16
        %v2642 = vrot.slane %v2640, 5
        %v2643 = vor.u32 %v2639, %v2642
        %v2644 = vrot.slane %v2643, 4
        %v2646 = vshll.u32 %v2366, 16
        %v2648 = vrot.slane %v2646, 5
        %v2649 = vsel %vm2397, %v2644, %v2648
        %v2651 = vshrl.u32 %v2367, 16
        %v2653 = vrot.slane %v2651, 4
        %v2654 = vshll.u32 %v2367, 16
        %v2656 = vrot.slane %v2654, 5
        %v2657 = vor.u32 %v2653, %v2656
        %v2658 = vrot.slane %v2657, 4
        %v2660 = vshll.u32 %v2369, 16
        %v2662 = vrot.slane %v2660, 5
        %v2663 = vsel %vm2397, %v2658, %v2662
        %v2665 = vshrl.u32 %v2368, 16
        %v2667 = vrot.slane %v2665, 4
        %v2668 = vshll.u32 %v2368, 16
        %v2670 = vrot.slane %v2668, 5
        %v2671 = vor.u32 %v2667, %v2670
        %v2672 = vrot.slane %v2671, 4
        %v2674 = vshll.u32 %v2370, 16
        %v2676 = vrot.slane %v2674, 5
        %v2677 = vsel %vm2397, %v2672, %v2676
        %v2679 = vshrl.u32 %v2371, 16
        %v2681 = vrot.slane %v2679, 4
        %v2682 = vshll.u32 %v2371, 16
        %v2684 = vrot.slane %v2682, 5
        %v2685 = vor.u32 %v2681, %v2684
        %v2686 = vrot.slane %v2685, 4
        %v2688 = vshll.u32 %v2373, 16
        %v2690 = vrot.slane %v2688, 5
        %v2691 = vsel %vm2397, %v2686, %v2690
        %v2693 = vshrl.u32 %v2372, 16
        %v2695 = vrot.slane %v2693, 4
        %v2696 = vshll.u32 %v2372, 16
        %v2698 = vrot.slane %v2696, 5
        %v2699 = vor.u32 %v2695, %v2698
        %v2700 = vrot.slane %v2699, 4
        %v2702 = vshll.u32 %v2374, 16
        %v2704 = vrot.slane %v2702, 5
        %v2705 = vsel %vm2397, %v2700, %v2704
        %v2707 = vshrl.u32 %v2375, 16
        %v2709 = vrot.slane %v2707, 4
        %v2710 = vshll.u32 %v2375, 16
        %v2712 = vrot.slane %v2710, 5
        %v2713 = vor.u32 %v2709, %v2712
        %v2714 = vrot.slane %v2713, 4
        %v2716 = vshll.u32 %v2377, 16
        %v2718 = vrot.slane %v2716, 5
        %v2719 = vsel %vm2397, %v2714, %v2718
        %v2721 = vshrl.u32 %v2376, 16
        %v2723 = vrot.slane %v2721, 4
        %v2724 = vshll.u32 %v2376, 16
        %v2726 = vrot.slane %v2724, 5
        %v2727 = vor.u32 %v2723, %v2726
        %v2728 = vrot.slane %v2727, 4
        %v2730 = vshll.u32 %v2378, 16
        %v2732 = vrot.slane %v2730, 5
        %v2733 = vsel %vm2397, %v2728, %v2732
        %v2735 = vshrl.u32 %v2379, 16
        %v2737 = vrot.slane %v2735, 4
        %v2738 = vshll.u32 %v2379, 16
        %v2740 = vrot.slane %v2738, 5
        %v2741 = vor.u32 %v2737, %v2740
        %v2742 = vrot.slane %v2741, 4
        %v2744 = vshll.u32 %v2381, 16
        %v2746 = vrot.slane %v2744, 5
        %v2747 = vsel %vm2397, %v2742, %v2746
        %v2749 = vshrl.u32 %v2380, 16
        %v2751 = vrot.slane %v2749, 4
        %v2752 = vshll.u32 %v2380, 16
        %v2754 = vrot.slane %v2752, 5
        %v2755 = vor.u32 %v2751, %v2754
        %v2756 = vrot.slane %v2755, 4
        %v2758 = vshll.u32 %v2382, 16
        %v2760 = vrot.slane %v2758, 5
        %v2761 = vsel %vm2397, %v2756, %v2760
        %v2763 = vshrl.u32 %v2383, 16
        %v2765 = vrot.slane %v2763, 4
        %v2766 = vshll.u32 %v2383, 16
        %v2768 = vrot.slane %v2766, 5
        %v2769 = vor.u32 %v2765, %v2768
        %v2770 = vrot.slane %v2769, 4
        %v2772 = vshll.u32 %v2385, 16
        %v2774 = vrot.slane %v2772, 5
        %v2775 = vsel %vm2397, %v2770, %v2774
        %v2777 = vshrl.u32 %v2384, 16
        %v2779 = vrot.slane %v2777, 4
        %v2780 = vshll.u32 %v2384, 16
        %v2782 = vrot.slane %v2780, 5
        %v2783 = vor.u32 %v2779, %v2782
        %v2784 = vrot.slane %v2783, 4
        %v2786 = vshll.u32 %v2386, 16
        %v2788 = vrot.slane %v2786, 5
        %v2789 = vsel %vm2397, %v2784, %v2788
        %v2791 = vshrl.u32 %v2387, 16
        %v2793 = vrot.slane %v2791, 4
        %v2794 = vshll.u32 %v2387, 16
        %v2796 = vrot.slane %v2794, 5
        %v2797 = vor.u32 %v2793, %v2796
        %v2798 = vrot.slane %v2797, 4
        %v2800 = vshll.u32 %v2389, 16
        %v2802 = vrot.slane %v2800, 5
        %v2803 = vsel %vm2397, %v2798, %v2802
        %v2805 = vshrl.u32 %v2388, 16
        %v2807 = vrot.slane %v2805, 4
        %v2808 = vshll.u32 %v2388, 16
        %v2810 = vrot.slane %v2808, 5
        %v2811 = vor.u32 %v2807, %v2810
        %v2812 = vrot.slane %v2811, 4
        %v2814 = vshll.u32 %v2390, 16
        %v2816 = vrot.slane %v2814, 5
        %v2817 = vsel %vm2397, %v2812, %v2816
        %v2819 = vshrl.u32 %v2391, 16
        %v2821 = vrot.slane %v2819, 4
        %v2822 = vshll.u32 %v2391, 16
        %v2824 = vrot.slane %v2822, 5
        %v2825 = vor.u32 %v2821, %v2824
        %v2826 = vrot.slane %v2825, 4
        %v2828 = vshll.u32 %v2393, 16
        %v2830 = vrot.slane %v2828, 5
        %v2831 = vsel %vm2397, %v2826, %v2830
        %v2833 = vshrl.u32 %v2392, 16
        %v2835 = vrot.slane %v2833, 4
        %v2836 = vshll.u32 %v2392, 16
        %v2838 = vrot.slane %v2836, 5
        %v2839 = vor.u32 %v2835, %v2838
        %v2840 = vrot.slane %v2839, 4
        %v2842 = vshll.u32 %v2394, 16
        %v2844 = vrot.slane %v2842, 5
        %v2845 = vsel %vm2397, %v2840, %v2844
        %s2846 = scalar_lea.vmem [#allocation8], 384
        %v2847 = vld [vmem:[%s2846] sm:$0xf]
        %v2848 = vld [vmem:[%s2846 + $0x4] sm:$0xf]
        %v2849 = vld [vmem:[%s2846 + $0x8] sm:$0xf]
        %v2850 = vld [vmem:[%s2846 + $0xc] sm:$0xf]
        %v2851 = vld [vmem:[%s2846 + $0x10] sm:$0xf]
        %v2852 = vld [vmem:[%s2846 + $0x14] sm:$0xf]
        %v2853 = vld [vmem:[%s2846 + $0x18] sm:$0xf]
        %v2854 = vld [vmem:[%s2846 + $0x1c] sm:$0xf]
        %v2855 = vld [vmem:[%s2846 + $0x20] sm:$0xf]
        %v2856 = vld [vmem:[%s2846 + $0x24] sm:$0xf]
        %v2857 = vld [vmem:[%s2846 + $0x28] sm:$0xf]
        %v2858 = vld [vmem:[%s2846 + $0x2c] sm:$0xf]
        %v2859 = vld [vmem:[%s2846 + $0x30] sm:$0xf]
        %v2860 = vld [vmem:[%s2846 + $0x34] sm:$0xf]
        %v2861 = vld [vmem:[%s2846 + $0x38] sm:$0xf]
        %v2862 = vld [vmem:[%s2846 + $0x3c] sm:$0xf]
        %v2863 = vld [vmem:[%s2846 + $0x40] sm:$0xf]
        %v2864 = vld [vmem:[%s2846 + $0x44] sm:$0xf]
        %v2865 = vld [vmem:[%s2846 + $0x48] sm:$0xf]
        %v2866 = vld [vmem:[%s2846 + $0x4c] sm:$0xf]
        %v2867 = vld [vmem:[%s2846 + $0x50] sm:$0xf]
        %v2868 = vld [vmem:[%s2846 + $0x54] sm:$0xf]
        %v2869 = vld [vmem:[%s2846 + $0x58] sm:$0xf]
        %v2870 = vld [vmem:[%s2846 + $0x5c] sm:$0xf]
        %v2871 = vld [vmem:[%s2846 + $0x60] sm:$0xf]
        %v2872 = vld [vmem:[%s2846 + $0x64] sm:$0xf]
        %v2873 = vld [vmem:[%s2846 + $0x68] sm:$0xf]
        %v2874 = vld [vmem:[%s2846 + $0x6c] sm:$0xf]
        %v2875 = vld [vmem:[%s2846 + $0x70] sm:$0xf]
        %v2876 = vld [vmem:[%s2846 + $0x74] sm:$0xf]
        %v2877 = vld [vmem:[%s2846 + $0x78] sm:$0xf]
        %v2878 = vld [vmem:[%s2846 + $0x7c] sm:$0xf]
        %v2879 = vld [vmem:[%s2846 + $0x80] sm:$0xf]
        %v2880 = vld [vmem:[%s2846 + $0x84] sm:$0xf]
        %v2881 = vld [vmem:[%s2846 + $0x88] sm:$0xf]
        %v2882 = vld [vmem:[%s2846 + $0x8c] sm:$0xf]
        %v2883 = vld [vmem:[%s2846 + $0x90] sm:$0xf]
        %v2884 = vld [vmem:[%s2846 + $0x94] sm:$0xf]
        %v2885 = vld [vmem:[%s2846 + $0x98] sm:$0xf]
        %v2886 = vld [vmem:[%s2846 + $0x9c] sm:$0xf]
        %v2887 = vld [vmem:[%s2846 + $0xa0] sm:$0xf]
        %v2888 = vld [vmem:[%s2846 + $0xa4] sm:$0xf]
        %v2889 = vld [vmem:[%s2846 + $0xa8] sm:$0xf]
        %v2890 = vld [vmem:[%s2846 + $0xac] sm:$0xf]
        %v2891 = vld [vmem:[%s2846 + $0xb0] sm:$0xf]
        %v2892 = vld [vmem:[%s2846 + $0xb4] sm:$0xf]
        %v2893 = vld [vmem:[%s2846 + $0xb8] sm:$0xf]
        %v2894 = vld [vmem:[%s2846 + $0xbc] sm:$0xf]
        %v2895 = vunpack.c.l.b16 %v2411
        %v2896 = vunpack.c.h.b16 %v2411
        %v2897 = vunpack.c.l.b16 %v2425
        %v2898 = vunpack.c.l.b16 %v2439
        %v2899 = vunpack.c.h.b16 %v2439
        %v2900 = vunpack.c.l.b16 %v2453
        %v2901 = vunpack.c.l.b16 %v2467
        %v2902 = vunpack.c.h.b16 %v2467
        %v2903 = vunpack.c.l.b16 %v2481
        %v2904 = vunpack.c.l.b16 %v2495
        %v2905 = vunpack.c.h.b16 %v2495
        %v2906 = vunpack.c.l.b16 %v2509
        %v2907 = vunpack.c.l.b16 %v2523
        %v2908 = vunpack.c.h.b16 %v2523
        %v2909 = vunpack.c.l.b16 %v2537
        %v2910 = vunpack.c.l.b16 %v2551
        %v2911 = vunpack.c.h.b16 %v2551
        %v2912 = vunpack.c.l.b16 %v2565
        %v2913 = vunpack.c.l.b16 %v2579
        %v2914 = vunpack.c.h.b16 %v2579
        %v2915 = vunpack.c.l.b16 %v2593
        %v2916 = vunpack.c.l.b16 %v2607
        %v2917 = vunpack.c.h.b16 %v2607
        %v2918 = vunpack.c.l.b16 %v2621
        %v2919 = vunpack.c.l.b16 %v2635
        %v2920 = vunpack.c.h.b16 %v2635
        %v2921 = vunpack.c.l.b16 %v2649
        %v2922 = vunpack.c.l.b16 %v2663
        %v2923 = vunpack.c.h.b16 %v2663
        %v2924 = vunpack.c.l.b16 %v2677
        %v2925 = vunpack.c.l.b16 %v2691
        %v2926 = vunpack.c.h.b16 %v2691
        %v2927 = vunpack.c.l.b16 %v2705
        %v2928 = vunpack.c.l.b16 %v2719
        %v2929 = vunpack.c.h.b16 %v2719
        %v2930 = vunpack.c.l.b16 %v2733
        %v2931 = vunpack.c.l.b16 %v2747
        %v2932 = vunpack.c.h.b16 %v2747
        %v2933 = vunpack.c.l.b16 %v2761
        %v2934 = vunpack.c.l.b16 %v2775
        %v2935 = vunpack.c.h.b16 %v2775
        %v2936 = vunpack.c.l.b16 %v2789
        %v2937 = vunpack.c.l.b16 %v2803
        %v2938 = vunpack.c.h.b16 %v2803
        %v2939 = vunpack.c.l.b16 %v2817
        %v2940 = vunpack.c.l.b16 %v2831
        %v2941 = vunpack.c.h.b16 %v2831
        %v2942 = vunpack.c.l.b16 %v2845
        %v2943 = vpack.c.b16 %v2898, %v2895
        %v2944 = vpack.c.b16 %v2899, %v2896
        %v2945 = vpack.c.b16 %v2900, %v2897
        %v2946 = vpack.c.b16 %v2904, %v2901
        %v2947 = vpack.c.b16 %v2905, %v2902
        %v2948 = vpack.c.b16 %v2906, %v2903
        %v2949 = vpack.c.b16 %v2910, %v2907
        %v2950 = vpack.c.b16 %v2911, %v2908
        %v2951 = vpack.c.b16 %v2912, %v2909
        %v2952 = vpack.c.b16 %v2916, %v2913
        %v2953 = vpack.c.b16 %v2917, %v2914
        %v2954 = vpack.c.b16 %v2918, %v2915
        %v2955 = vpack.c.b16 %v2922, %v2919
        %v2956 = vpack.c.b16 %v2923, %v2920
        %v2957 = vpack.c.b16 %v2924, %v2921
        %v2958 = vpack.c.b16 %v2928, %v2925
        %v2959 = vpack.c.b16 %v2929, %v2926
        %v2960 = vpack.c.b16 %v2930, %v2927
        %v2961 = vpack.c.b16 %v2934, %v2931
        %v2962 = vpack.c.b16 %v2935, %v2932
        %v2963 = vpack.c.b16 %v2936, %v2933
        %v2964 = vpack.c.b16 %v2940, %v2937
        %v2965 = vpack.c.b16 %v2941, %v2938
        %v2966 = vpack.c.b16 %v2942, %v2939
        %v3039 = vunpack.c.l.b16 %v2847
        %v3040 = vunpack.c.l.b16 %v2848
        %v3041 = vunpack.c.l.b16 %v2849
        %v3042 = vunpack.c.l.b16 %v2850
        %v3043 = vunpack.c.l.b16 %v2851
        %v3044 = vunpack.c.l.b16 %v2852
        %v3045 = vunpack.c.l.b16 %v2853
        %v3046 = vunpack.c.l.b16 %v2854
        %v3047 = vunpack.c.l.b16 %v2855
        %v3048 = vunpack.c.l.b16 %v2856
        %v3049 = vunpack.c.l.b16 %v2857
        %v3050 = vunpack.c.l.b16 %v2858
        %v3051 = vunpack.c.l.b16 %v2859
        %v3052 = vunpack.c.l.b16 %v2860
        %v3053 = vunpack.c.l.b16 %v2861
        %v3054 = vunpack.c.l.b16 %v2862
        %v3055 = vunpack.c.l.b16 %v2863
        %v3056 = vunpack.c.l.b16 %v2864
        %v3057 = vunpack.c.l.b16 %v2865
        %v3058 = vunpack.c.l.b16 %v2866
        %v3059 = vunpack.c.l.b16 %v2867
        %v3060 = vunpack.c.l.b16 %v2868
        %v3061 = vunpack.c.l.b16 %v2869
        %v3062 = vunpack.c.l.b16 %v2870
        %v3063 = vunpack.c.l.b16 %v2871
        %v3064 = vunpack.c.l.b16 %v2872
        %v3065 = vunpack.c.l.b16 %v2873
        %v3066 = vunpack.c.l.b16 %v2874
        %v3067 = vunpack.c.l.b16 %v2875
        %v3068 = vunpack.c.l.b16 %v2876
        %v3069 = vunpack.c.l.b16 %v2877
        %v3070 = vunpack.c.l.b16 %v2878
        %v3071 = vunpack.c.l.b16 %v2879
        %v3072 = vunpack.c.l.b16 %v2880
        %v3073 = vunpack.c.l.b16 %v2881
        %v3074 = vunpack.c.l.b16 %v2882
        %v3075 = vunpack.c.l.b16 %v2883
        %v3076 = vunpack.c.l.b16 %v2884
        %v3077 = vunpack.c.l.b16 %v2885
        %v3078 = vunpack.c.l.b16 %v2886
        %v3079 = vunpack.c.l.b16 %v2887
        %v3080 = vunpack.c.l.b16 %v2888
        %v3081 = vunpack.c.l.b16 %v2889
        %v3082 = vunpack.c.l.b16 %v2890
        %v3083 = vunpack.c.l.b16 %v2891
        %v3084 = vunpack.c.l.b16 %v2892
        %v3085 = vunpack.c.l.b16 %v2893
        %v3086 = vunpack.c.l.b16 %v2894
        %v3087 = vpack.c.b16 %v3040, %v3039
        %v3088 = vpack.c.b16 %v3042, %v3041
        %v3089 = vpack.c.b16 %v3044, %v3043
        %v3090 = vpack.c.b16 %v3046, %v3045
        %v3091 = vpack.c.b16 %v3048, %v3047
        %v3092 = vpack.c.b16 %v3050, %v3049
        %v3093 = vpack.c.b16 %v3052, %v3051
        %v3094 = vpack.c.b16 %v3054, %v3053
        %v3095 = vpack.c.b16 %v3056, %v3055
        %v3096 = vpack.c.b16 %v3058, %v3057
        %v3097 = vpack.c.b16 %v3060, %v3059
        %v3098 = vpack.c.b16 %v3062, %v3061
        %v3099 = vpack.c.b16 %v3064, %v3063
        %v3100 = vpack.c.b16 %v3066, %v3065
        %v3101 = vpack.c.b16 %v3068, %v3067
        %v3102 = vpack.c.b16 %v3070, %v3069
        %v3103 = vpack.c.b16 %v3072, %v3071
        %v3104 = vpack.c.b16 %v3074, %v3073
        %v3105 = vpack.c.b16 %v3076, %v3075
        %v3106 = vpack.c.b16 %v3078, %v3077
        %v3107 = vpack.c.b16 %v3080, %v3079
        %v3108 = vpack.c.b16 %v3082, %v3081
        %v3109 = vpack.c.b16 %v3084, %v3083
        %v3110 = vpack.c.b16 %v3086, %v3085
        %3135 = vmatprep.subr.bf16.mxu0 0
        %3136 = vmatpush1.bf16.msra.mxu0 %v3094
        %3137 = vmatprep.subr.bf16.mxu0 0
        %3138 = vmatpush1.bf16.msra.mxu0 %v3093
        %3139 = vmatprep.subr.bf16.mxu0 0
        %3140 = vmatpush1.bf16.msra.mxu0 %v3092
        %3141 = vmatprep.subr.bf16.mxu0 0
        %3142 = vmatpush1.bf16.msra.mxu0 %v3091
        %3143 = vmatprep.subr.bf16.mxu0 0
        %3144 = vmatpush1.bf16.msra.mxu0 %v3090
        %3145 = vmatprep.subr.bf16.mxu0 0
        %3146 = vmatpush1.bf16.msra.mxu0 %v3089
        %3147 = vmatprep.subr.bf16.mxu0 0
        %3148 = vmatpush1.bf16.msra.mxu0 %v3088
        %3149 = vmatprep.subr.bf16.mxu0 0
        %3150 = vmatpush1.bf16.msra.mxu0 %v3087
        %3151 = vmatprep.subr.bf16.mxu0 0
        %3152 = vmatpush2.bf16.msra.mxu0 %v3102
        %3153 = vmatprep.subr.bf16.mxu0 0
        %3154 = vmatpush2.bf16.msra.mxu0 %v3101
        %3155 = vmatprep.subr.bf16.mxu0 0
        %3156 = vmatpush2.bf16.msra.mxu0 %v3100
        %3157 = vmatprep.subr.bf16.mxu0 0
        %3158 = vmatpush2.bf16.msra.mxu0 %v3099
        %3159 = vmatprep.subr.bf16.mxu0 0
        %3160 = vmatpush2.bf16.msra.mxu0 %v3098
        %3161 = vmatprep.subr.bf16.mxu0 0
        %3162 = vmatpush2.bf16.msra.mxu0 %v3097
        %3163 = vmatprep.subr.bf16.mxu0 0
        %3164 = vmatpush2.bf16.msra.mxu0 %v3096
        %3165 = vmatprep.subr.bf16.mxu0 0
        %3166 = vmatpush2.bf16.msra.mxu0 %v3095
        %3167 = vmatprep.mubr.bf16.mxu0 %v2944
        %3168 = vmatmul.mubr.bf16.gmra.mxu0 %v2943
        %v3169 = vpop.f32.mrf.mxu0
        %v3170 = vadd.f32 0.0, %v3169
        %v3171 = vpop.f32.mrf.mxu0
        %v3172 = vpop.f32.mrf.mxu0
        %v3173 = vadd.f32 0.0, %v3172
        %v3174 = vpop.f32.mrf.mxu0
        %3175 = vmatprep.mubr.bf16.mxu0 %v2947
        %3176 = vmatmul.mubr.bf16.gmra.mxu0 %v2946
        %v3177 = vpop.f32.mrf.mxu0
        %v3178 = vadd.f32 0.0, %v3177
        %v3179 = vpop.f32.mrf.mxu0
        %v3180 = vpop.f32.mrf.mxu0
        %v3181 = vadd.f32 0.0, %v3180
        %v3182 = vpop.f32.mrf.mxu0
        %3183 = vmatprep.mubr.bf16.mxu0 %v2950
        %3184 = vmatmul.mubr.bf16.gmra.mxu0 %v2949
        %v3185 = vpop.f32.mrf.mxu0
        %v3186 = vadd.f32 0.0, %v3185
        %v3187 = vpop.f32.mrf.mxu0
        %v3188 = vpop.f32.mrf.mxu0
        %v3189 = vadd.f32 0.0, %v3188
        %v3190 = vpop.f32.mrf.mxu0
        %3191 = vmatprep.mubr.bf16.mxu0 %v2953
        %3192 = vmatmul.mubr.bf16.gmra.mxu0 %v2952
        %v3193 = vpop.f32.mrf.mxu0
        %v3194 = vadd.f32 0.0, %v3193
        %v3195 = vpop.f32.mrf.mxu0
        %v3196 = vpop.f32.mrf.mxu0
        %v3197 = vadd.f32 0.0, %v3196
        %v3198 = vpop.f32.mrf.mxu0
        %3199 = vmatprep.mubr.bf16.mxu0 %v2956
        %3200 = vmatmul.mubr.bf16.gmra.mxu0 %v2955
        %v3201 = vpop.f32.mrf.mxu0
        %v3202 = vadd.f32 0.0, %v3201
        %v3203 = vpop.f32.mrf.mxu0
        %v3204 = vpop.f32.mrf.mxu0
        %v3205 = vadd.f32 0.0, %v3204
        %v3206 = vpop.f32.mrf.mxu0
        %3207 = vmatprep.mubr.bf16.mxu0 %v2959
        %3208 = vmatmul.mubr.bf16.gmra.mxu0 %v2958
        %v3209 = vpop.f32.mrf.mxu0
        %v3210 = vadd.f32 0.0, %v3209
        %v3211 = vpop.f32.mrf.mxu0
        %v3212 = vpop.f32.mrf.mxu0
        %v3213 = vadd.f32 0.0, %v3212
        %v3214 = vpop.f32.mrf.mxu0
        %3215 = vmatprep.mubr.bf16.mxu0 %v2962
        %3216 = vmatmul.mubr.bf16.gmra.mxu0 %v2961
        %v3217 = vpop.f32.mrf.mxu0
        %v3218 = vadd.f32 0.0, %v3217
        %v3219 = vpop.f32.mrf.mxu0
        %v3220 = vpop.f32.mrf.mxu0
        %v3221 = vadd.f32 0.0, %v3220
        %v3222 = vpop.f32.mrf.mxu0
        %3223 = vmatprep.mubr.bf16.mxu0 %v2965
        %3224 = vmatmul.mubr.bf16.gmra.mxu0 %v2964
        %v3225 = vpop.f32.mrf.mxu0
        %v3226 = vadd.f32 0.0, %v3225
        %v3227 = vpop.f32.mrf.mxu0
        %v3228 = vpop.f32.mrf.mxu0
        %v3229 = vadd.f32 0.0, %v3228
        %v3230 = vpop.f32.mrf.mxu0
        %3231 = vdwg.mxu0
        %3232 = vmatprep.subr.bf16.mxu0 0
        %3233 = vmatpush1.bf16.msra.mxu0 %v3110
        %3234 = vmatprep.subr.bf16.mxu0 0
        %3235 = vmatpush1.bf16.msra.mxu0 %v3109
        %3236 = vmatprep.subr.bf16.mxu0 0
        %3237 = vmatpush1.bf16.msra.mxu0 %v3108
        %3238 = vmatprep.subr.bf16.mxu0 0
        %3239 = vmatpush1.bf16.msra.mxu0 %v3107
        %3240 = vmatprep.subr.bf16.mxu0 0
        %3241 = vmatpush1.bf16.msra.mxu0 %v3106
        %3242 = vmatprep.subr.bf16.mxu0 0
        %3243 = vmatpush1.bf16.msra.mxu0 %v3105
        %3244 = vmatprep.subr.bf16.mxu0 0
        %3245 = vmatpush1.bf16.msra.mxu0 %v3104
        %3246 = vmatprep.subr.bf16.mxu0 0
        %3247 = vmatpush1.bf16.msra.mxu0 %v3103
        %3248 = vmatprep.subr.bf16.mxu0 0
        %3249 = vmatpush2.bf16.msra.mxu0 0
        %3250 = vmatprep.subr.bf16.mxu0 0
        %3251 = vmatpush2.bf16.msra.mxu0 0
        %3252 = vmatprep.subr.bf16.mxu0 0
        %3253 = vmatpush2.bf16.msra.mxu0 0
        %3254 = vmatprep.subr.bf16.mxu0 0
        %3255 = vmatpush2.bf16.msra.mxu0 0
        %3256 = vmatprep.subr.bf16.mxu0 0
        %3257 = vmatpush2.bf16.msra.mxu0 0
        %3258 = vmatprep.subr.bf16.mxu0 0
        %3259 = vmatpush2.bf16.msra.mxu0 0
        %3260 = vmatprep.subr.bf16.mxu0 0
        %3261 = vmatpush2.bf16.msra.mxu0 0
        %3262 = vmatprep.subr.bf16.mxu0 0
        %3263 = vmatpush2.bf16.msra.mxu0 0
        %3264 = vmatprep.mubr.bf16.mxu0 0
        %3265 = vmatmul.mubr.bf16.gmra.mxu0 %v2945
        %v3266 = vpop.f32.mrf.mxu0
        %v3267 = vadd.f32 %v3170, %v3266
        %v3268 = vpop.f32.mrf.mxu0
        %v3269 = vpop.f32.mrf.mxu0
        %v3270 = vadd.f32 %v3173, %v3269
        %v3271 = vpop.f32.mrf.mxu0
        %3272 = vmatprep.mubr.bf16.mxu0 0
        %3273 = vmatmul.mubr.bf16.gmra.mxu0 %v2948
        %v3274 = vpop.f32.mrf.mxu0
        %v3275 = vadd.f32 %v3178, %v3274
        %v3276 = vpop.f32.mrf.mxu0
        %v3277 = vpop.f32.mrf.mxu0
        %v3278 = vadd.f32 %v3181, %v3277
        %v3279 = vpop.f32.mrf.mxu0
        %3280 = vmatprep.mubr.bf16.mxu0 0
        %3281 = vmatmul.mubr.bf16.gmra.mxu0 %v2951
        %v3282 = vpop.f32.mrf.mxu0
        %v3283 = vadd.f32 %v3186, %v3282
        %v3284 = vpop.f32.mrf.mxu0
        %v3285 = vpop.f32.mrf.mxu0
        %v3286 = vadd.f32 %v3189, %v3285
        %v3287 = vpop.f32.mrf.mxu0
        %3288 = vmatprep.mubr.bf16.mxu0 0
        %3289 = vmatmul.mubr.bf16.gmra.mxu0 %v2954
        %v3290 = vpop.f32.mrf.mxu0
        %v3291 = vadd.f32 %v3194, %v3290
        %v3292 = vpop.f32.mrf.mxu0
        %v3293 = vpop.f32.mrf.mxu0
        %v3294 = vadd.f32 %v3197, %v3293
        %v3295 = vpop.f32.mrf.mxu0
        %3296 = vmatprep.mubr.bf16.mxu0 0
        %3297 = vmatmul.mubr.bf16.gmra.mxu0 %v2957
        %v3298 = vpop.f32.mrf.mxu0
        %v3299 = vadd.f32 %v3202, %v3298
        %v3300 = vpop.f32.mrf.mxu0
        %v3301 = vpop.f32.mrf.mxu0
        %v3302 = vadd.f32 %v3205, %v3301
        %v3303 = vpop.f32.mrf.mxu0
        %3304 = vmatprep.mubr.bf16.mxu0 0
        %3305 = vmatmul.mubr.bf16.gmra.mxu0 %v2960
        %v3306 = vpop.f32.mrf.mxu0
        %v3307 = vadd.f32 %v3210, %v3306
        %v3308 = vpop.f32.mrf.mxu0
        %v3309 = vpop.f32.mrf.mxu0
        %v3310 = vadd.f32 %v3213, %v3309
        %v3311 = vpop.f32.mrf.mxu0
        %3312 = vmatprep.mubr.bf16.mxu0 0
        %3313 = vmatmul.mubr.bf16.gmra.mxu0 %v2963
        %v3314 = vpop.f32.mrf.mxu0
        %v3315 = vadd.f32 %v3218, %v3314
        %v3316 = vpop.f32.mrf.mxu0
        %v3317 = vpop.f32.mrf.mxu0
        %v3318 = vadd.f32 %v3221, %v3317
        %v3319 = vpop.f32.mrf.mxu0
        %3320 = vmatprep.mubr.bf16.mxu0 0
        %3321 = vmatmul.mubr.bf16.gmra.mxu0 %v2966
        %v3322 = vpop.f32.mrf.mxu0
        %v3323 = vadd.f32 %v3226, %v3322
        %v3324 = vpop.f32.mrf.mxu0
        %v3325 = vpop.f32.mrf.mxu0
        %v3326 = vadd.f32 %v3229, %v3325
        %v3327 = vpop.f32.mrf.mxu0
        %3328 = vdwg.mxu0
        %v3329 = vadd.f32 %v2149, %v3267
        %v3330 = vadd.f32 %v2152, %v3270
        %v3331 = vadd.f32 %v2157, %v3275
        %v3332 = vadd.f32 %v2160, %v3278
        %v3333 = vadd.f32 %v2165, %v3283
        %v3334 = vadd.f32 %v2168, %v3286
        %v3335 = vadd.f32 %v2173, %v3291
        %v3336 = vadd.f32 %v2176, %v3294
        %v3337 = vadd.f32 %v2181, %v3299
        %v3338 = vadd.f32 %v2184, %v3302
        %v3339 = vadd.f32 %v2189, %v3307
        %v3340 = vadd.f32 %v2192, %v3310
        %v3341 = vadd.f32 %v2197, %v3315
        %v3342 = vadd.f32 %v2200, %v3318
        %v3343 = vadd.f32 %v2205, %v3323
        %v3344 = vadd.f32 %v2208, %v3326
        %v3345 = vld [vmem:[%s4] sm:$0x1]
        %v3347 = vlaneseq
        %v3348 = vshrl.u32 %v3347, 7
        %v3349 = vsub.s32 0, %v3348
        %v3350 = vrot.slane %v3345, %v3349
        %v3352 = vadd.f32 %v3329, %v3350
        %v3353 = vadd.f32 %v3330, %v3350
        %v3354 = vadd.f32 %v3331, %v3350
        %v3355 = vadd.f32 %v3332, %v3350
        %v3356 = vadd.f32 %v3333, %v3350
        %v3357 = vadd.f32 %v3334, %v3350
        %v3358 = vadd.f32 %v3335, %v3350
        %v3359 = vadd.f32 %v3336, %v3350
        %v3360 = vadd.f32 %v3337, %v3350
        %v3361 = vadd.f32 %v3338, %v3350
        %v3362 = vadd.f32 %v3339, %v3350
        %v3363 = vadd.f32 %v3340, %v3350
        %v3364 = vadd.f32 %v3341, %v3350
        %v3365 = vadd.f32 %v3342, %v3350
        %v3366 = vadd.f32 %v3343, %v3350
        %v3367 = vadd.f32 %v3344, %v3350
        %v3368 = vmax.f32 %v3352, 0.0
        %v3369 = vmax.f32 %v3353, 0.0
        %v3370 = vmax.f32 %v3354, 0.0
        %v3371 = vmax.f32 %v3355, 0.0
        %v3372 = vmax.f32 %v3356, 0.0
        %v3373 = vmax.f32 %v3357, 0.0
        %v3374 = vmax.f32 %v3358, 0.0
        %v3375 = vmax.f32 %v3359, 0.0
        %v3376 = vmax.f32 %v3360, 0.0
        %v3377 = vmax.f32 %v3361, 0.0
        %v3378 = vmax.f32 %v3362, 0.0
        %v3379 = vmax.f32 %v3363, 0.0
        %v3380 = vmax.f32 %v3364, 0.0
        %v3381 = vmax.f32 %v3365, 0.0
        %v3382 = vmax.f32 %v3366, 0.0
        %v3383 = vmax.f32 %v3367, 0.0
        %v3384 = vpack.c.bf16 %v3369, %v3368
        %v3385 = vpack.c.bf16 %v3371, %v3370
        %v3386 = vpack.c.bf16 %v3373, %v3372
        %v3387 = vpack.c.bf16 %v3375, %v3374
        %v3388 = vpack.c.bf16 %v3377, %v3376
        %v3389 = vpack.c.bf16 %v3379, %v3378
        %v3390 = vpack.c.bf16 %v3381, %v3380
        %v3391 = vpack.c.bf16 %v3383, %v3382
        %v3392 = vld [vmem:[#allocation9] sm:$0xf]
        %v3393 = vld [vmem:[#allocation9 + $0x4] sm:$0xf]
        %v3394 = vld [vmem:[#allocation9 + $0x8] sm:$0xf]
        %v3395 = vld [vmem:[#allocation9 + $0xc] sm:$0xf]
        %v3396 = vld [vmem:[#allocation9 + $0x10] sm:$0xf]
        %v3397 = vld [vmem:[#allocation9 + $0x14] sm:$0xf]
        %v3398 = vld [vmem:[#allocation9 + $0x18] sm:$0xf]
        %v3399 = vld [vmem:[#allocation9 + $0x1c] sm:$0xf]
        %v3400 = vld [vmem:[#allocation9 + $0x20] sm:$0xf]
        %v3401 = vld [vmem:[#allocation9 + $0x24] sm:$0xf]
        %v3402 = vld [vmem:[#allocation9 + $0x28] sm:$0xf]
        %v3403 = vld [vmem:[#allocation9 + $0x2c] sm:$0xf]
        %v3404 = vld [vmem:[#allocation9 + $0x30] sm:$0xf]
        %v3405 = vld [vmem:[#allocation9 + $0x34] sm:$0xf]
        %v3406 = vld [vmem:[#allocation9 + $0x38] sm:$0xf]
        %v3407 = vld [vmem:[#allocation9 + $0x3c] sm:$0xf]
        %v3408 = vld [vmem:[%s299] sm:$0xf]
        %v3409 = vld [vmem:[%s299 + $0x4] sm:$0xf]
        %v3410 = vld [vmem:[%s299 + $0x8] sm:$0xf]
        %v3411 = vld [vmem:[%s299 + $0xc] sm:$0xf]
        %v3412 = vld [vmem:[%s299 + $0x10] sm:$0xf]
        %v3413 = vld [vmem:[%s299 + $0x14] sm:$0xf]
        %v3414 = vld [vmem:[%s299 + $0x18] sm:$0xf]
        %v3415 = vld [vmem:[%s299 + $0x1c] sm:$0xf]
        %v3416 = vld [vmem:[%s299 + $0x20] sm:$0xf]
        %v3417 = vld [vmem:[%s299 + $0x24] sm:$0xf]
        %v3418 = vld [vmem:[%s299 + $0x28] sm:$0xf]
        %v3419 = vld [vmem:[%s299 + $0x2c] sm:$0xf]
        %v3420 = vld [vmem:[%s299 + $0x30] sm:$0xf]
        %v3421 = vld [vmem:[%s299 + $0x34] sm:$0xf]
        %v3422 = vld [vmem:[%s299 + $0x38] sm:$0xf]
        %v3423 = vld [vmem:[%s299 + $0x3c] sm:$0xf]
        %v3424 = vunpack.c.l.bf16 %v3408
        %v3425 = vunpack.c.l.bf16 %v3409
        %v3426 = vunpack.c.l.bf16 %v3410
        %v3427 = vunpack.c.l.bf16 %v3411
        %v3428 = vunpack.c.l.bf16 %v3412
        %v3429 = vunpack.c.l.bf16 %v3413
        %v3430 = vunpack.c.l.bf16 %v3414
        %v3431 = vunpack.c.l.bf16 %v3415
        %v3432 = vunpack.c.l.bf16 %v3416
        %v3433 = vunpack.c.l.bf16 %v3417
        %v3434 = vunpack.c.l.bf16 %v3418
        %v3435 = vunpack.c.l.bf16 %v3419
        %v3436 = vunpack.c.l.bf16 %v3420
        %v3437 = vunpack.c.l.bf16 %v3421
        %v3438 = vunpack.c.l.bf16 %v3422
        %v3439 = vunpack.c.l.bf16 %v3423
        %v3440 = vld [vmem:[%s6] sm:$0x1]
        %v3442 = vlaneseq
        %v3443 = vshrl.u32 %v3442, 7
        %v3444 = vsub.s32 0, %v3443
        %v3445 = vrot.slane %v3440, %v3444
        %v3463 = vunpack.c.l.b16 %v3392
        %v3464 = vunpack.c.l.b16 %v3393
        %v3465 = vunpack.c.l.b16 %v3394
        %v3466 = vunpack.c.l.b16 %v3395
        %v3467 = vunpack.c.l.b16 %v3396
        %v3468 = vunpack.c.l.b16 %v3397
        %v3469 = vunpack.c.l.b16 %v3398
        %v3470 = vunpack.c.l.b16 %v3399
        %v3471 = vunpack.c.l.b16 %v3400
        %v3472 = vunpack.c.l.b16 %v3401
        %v3473 = vunpack.c.l.b16 %v3402
        %v3474 = vunpack.c.l.b16 %v3403
        %v3475 = vunpack.c.l.b16 %v3404
        %v3476 = vunpack.c.l.b16 %v3405
        %v3477 = vunpack.c.l.b16 %v3406
        %v3478 = vunpack.c.l.b16 %v3407
        %v3479 = vpack.c.b16 %v3464, %v3463
        %v3480 = vpack.c.b16 %v3466, %v3465
        %v3481 = vpack.c.b16 %v3468, %v3467
        %v3482 = vpack.c.b16 %v3470, %v3469
        %v3483 = vpack.c.b16 %v3472, %v3471
        %v3484 = vpack.c.b16 %v3474, %v3473
        %v3485 = vpack.c.b16 %v3476, %v3475
        %v3486 = vpack.c.b16 %v3478, %v3477
        %3495 = vmatprep.subr.bf16.mxu0 0
        %3496 = vmatpush1.bf16.msra.mxu0 %v3486
        %3497 = vmatprep.subr.bf16.mxu0 0
        %3498 = vmatpush1.bf16.msra.mxu0 %v3485
        %3499 = vmatprep.subr.bf16.mxu0 0
        %3500 = vmatpush1.bf16.msra.mxu0 %v3484
        %3501 = vmatprep.subr.bf16.mxu0 0
        %3502 = vmatpush1.bf16.msra.mxu0 %v3483
        %3503 = vmatprep.subr.bf16.mxu0 0
        %3504 = vmatpush1.bf16.msra.mxu0 %v3482
        %3505 = vmatprep.subr.bf16.mxu0 0
        %3506 = vmatpush1.bf16.msra.mxu0 %v3481
        %3507 = vmatprep.subr.bf16.mxu0 0
        %3508 = vmatpush1.bf16.msra.mxu0 %v3480
        %3509 = vmatprep.subr.bf16.mxu0 0
        %3510 = vmatpush1.bf16.msra.mxu0 %v3479
        %3511 = vmatprep.subr.bf16.mxu0 0
        %3512 = vmatpush2.bf16.msra.mxu0 0
        %3513 = vmatprep.subr.bf16.mxu0 0
        %3514 = vmatpush2.bf16.msra.mxu0 0
        %3515 = vmatprep.subr.bf16.mxu0 0
        %3516 = vmatpush2.bf16.msra.mxu0 0
        %3517 = vmatprep.subr.bf16.mxu0 0
        %3518 = vmatpush2.bf16.msra.mxu0 0
        %3519 = vmatprep.subr.bf16.mxu0 0
        %3520 = vmatpush2.bf16.msra.mxu0 0
        %3521 = vmatprep.subr.bf16.mxu0 0
        %3522 = vmatpush2.bf16.msra.mxu0 0
        %3523 = vmatprep.subr.bf16.mxu0 0
        %3524 = vmatpush2.bf16.msra.mxu0 0
        %3525 = vmatprep.subr.bf16.mxu0 0
        %3526 = vmatpush2.bf16.msra.mxu0 0
        %3527 = vmatprep.mubr.bf16.mxu0 0
        %3528 = vmatmul.mubr.bf16.gmra.mxu0 %v3384
        %v3529 = vpop.f32.mrf.mxu0
        %v3530 = vadd.f32 %v3445, %v3529
        %v3531 = vpop.f32.mrf.mxu0
        %v3532 = vpop.f32.mrf.mxu0
        %v3533 = vadd.f32 %v3445, %v3532
        %v3534 = vpop.f32.mrf.mxu0
        %3535 = vmatprep.mubr.bf16.mxu0 0
        %3536 = vmatmul.mubr.bf16.gmra.mxu0 %v3385
        %v3537 = vpop.f32.mrf.mxu0
        %v3538 = vadd.f32 %v3445, %v3537
        %v3539 = vpop.f32.mrf.mxu0
        %v3540 = vpop.f32.mrf.mxu0
        %v3541 = vadd.f32 %v3445, %v3540
        %v3542 = vpop.f32.mrf.mxu0
        %3543 = vmatprep.mubr.bf16.mxu0 0
        %3544 = vmatmul.mubr.bf16.gmra.mxu0 %v3386
        %v3545 = vpop.f32.mrf.mxu0
        %v3546 = vadd.f32 %v3445, %v3545
        %v3547 = vpop.f32.mrf.mxu0
        %v3548 = vpop.f32.mrf.mxu0
        %v3549 = vadd.f32 %v3445, %v3548
        %v3550 = vpop.f32.mrf.mxu0
        %3551 = vmatprep.mubr.bf16.mxu0 0
        %3552 = vmatmul.mubr.bf16.gmra.mxu0 %v3387
        %v3553 = vpop.f32.mrf.mxu0
        %v3554 = vadd.f32 %v3445, %v3553
        %v3555 = vpop.f32.mrf.mxu0
        %v3556 = vpop.f32.mrf.mxu0
        %v3557 = vadd.f32 %v3445, %v3556
        %v3558 = vpop.f32.mrf.mxu0
        %3559 = vmatprep.mubr.bf16.mxu0 0
        %3560 = vmatmul.mubr.bf16.gmra.mxu0 %v3388
        %v3561 = vpop.f32.mrf.mxu0
        %v3562 = vadd.f32 %v3445, %v3561
        %v3563 = vpop.f32.mrf.mxu0
        %v3564 = vpop.f32.mrf.mxu0
        %v3565 = vadd.f32 %v3445, %v3564
        %v3566 = vpop.f32.mrf.mxu0
        %3567 = vmatprep.mubr.bf16.mxu0 0
        %3568 = vmatmul.mubr.bf16.gmra.mxu0 %v3389
        %v3569 = vpop.f32.mrf.mxu0
        %v3570 = vadd.f32 %v3445, %v3569
        %v3571 = vpop.f32.mrf.mxu0
        %v3572 = vpop.f32.mrf.mxu0
        %v3573 = vadd.f32 %v3445, %v3572
        %v3574 = vpop.f32.mrf.mxu0
        %3575 = vmatprep.mubr.bf16.mxu0 0
        %3576 = vmatmul.mubr.bf16.gmra.mxu0 %v3390
        %v3577 = vpop.f32.mrf.mxu0
        %v3578 = vadd.f32 %v3445, %v3577
        %v3579 = vpop.f32.mrf.mxu0
        %v3580 = vpop.f32.mrf.mxu0
        %v3581 = vadd.f32 %v3445, %v3580
        %v3582 = vpop.f32.mrf.mxu0
        %3583 = vmatprep.mubr.bf16.mxu0 0
        %3584 = vmatmul.mubr.bf16.gmra.mxu0 %v3391
        %v3585 = vpop.f32.mrf.mxu0
        %v3586 = vadd.f32 %v3445, %v3585
        %v3587 = vpop.f32.mrf.mxu0
        %v3588 = vpop.f32.mrf.mxu0
        %v3589 = vadd.f32 %v3445, %v3588
        %v3590 = vpop.f32.mrf.mxu0
        %3591 = vdwg.mxu0
        %v3592 = vadd.f32 %v3530, %v3424
        %v3593 = vadd.f32 %v3533, %v3425
        %v3594 = vadd.f32 %v3538, %v3426
        %v3595 = vadd.f32 %v3541, %v3427
        %v3596 = vadd.f32 %v3546, %v3428
        %v3597 = vadd.f32 %v3549, %v3429
        %v3598 = vadd.f32 %v3554, %v3430
        %v3599 = vadd.f32 %v3557, %v3431
        %v3600 = vadd.f32 %v3562, %v3432
        %v3601 = vadd.f32 %v3565, %v3433
        %v3602 = vadd.f32 %v3570, %v3434
        %v3603 = vadd.f32 %v3573, %v3435
        %v3604 = vadd.f32 %v3578, %v3436
        %v3605 = vadd.f32 %v3581, %v3437
        %v3606 = vadd.f32 %v3586, %v3438
        %v3607 = vadd.f32 %v3589, %v3439
        %v3608 = vmax.f32 %v3592, 0.0
        %v3609 = vmax.f32 %v3593, 0.0
        %v3610 = vmax.f32 %v3594, 0.0
        %v3611 = vmax.f32 %v3595, 0.0
        %v3612 = vmax.f32 %v3596, 0.0
        %v3613 = vmax.f32 %v3597, 0.0
        %v3614 = vmax.f32 %v3598, 0.0
        %v3615 = vmax.f32 %v3599, 0.0
        %v3616 = vmax.f32 %v3600, 0.0
        %v3617 = vmax.f32 %v3601, 0.0
        %v3618 = vmax.f32 %v3602, 0.0
        %v3619 = vmax.f32 %v3603, 0.0
        %v3620 = vmax.f32 %v3604, 0.0
        %v3621 = vmax.f32 %v3605, 0.0
        %v3622 = vmax.f32 %v3606, 0.0
        %v3623 = vmax.f32 %v3607, 0.0
        %v3624 = vpack.c.bf16 %v3609, %v3608
        %v3625 = vpack.c.bf16 %v3611, %v3610
        %v3626 = vpack.c.bf16 %v3613, %v3612
        %v3627 = vpack.c.bf16 %v3615, %v3614
        %v3628 = vpack.c.bf16 %v3617, %v3616
        %v3629 = vpack.c.bf16 %v3619, %v3618
        %v3630 = vpack.c.bf16 %v3621, %v3620
        %v3631 = vpack.c.bf16 %v3623, %v3622
        %v3640 = vunpack.c.l.b16 %v3624
        %v3641 = vunpack.c.h.b16 %v3624
        %v3642 = vunpack.c.l.b16 %v3625
        %v3643 = vunpack.c.h.b16 %v3625
        %v3644 = vunpack.c.l.b16 %v3626
        %v3645 = vunpack.c.h.b16 %v3626
        %v3646 = vunpack.c.l.b16 %v3627
        %v3647 = vunpack.c.h.b16 %v3627
        %v3648 = vunpack.c.l.b16 %v3628
        %v3649 = vunpack.c.h.b16 %v3628
        %v3650 = vunpack.c.l.b16 %v3629
        %v3651 = vunpack.c.h.b16 %v3629
        %v3652 = vunpack.c.l.b16 %v3630
        %v3653 = vunpack.c.h.b16 %v3630
        %v3654 = vunpack.c.l.b16 %v3631
        %v3655 = vunpack.c.h.b16 %v3631
        %v3656 = vpack.c.b16 %v3640, %v3640
        %v3657 = vpack.c.b16 %v3641, %v3641
        %v3658 = vpack.c.b16 %v3642, %v3642
        %v3659 = vpack.c.b16 %v3643, %v3643
        %v3660 = vpack.c.b16 %v3644, %v3644
        %v3661 = vpack.c.b16 %v3645, %v3645
        %v3662 = vpack.c.b16 %v3646, %v3646
        %v3663 = vpack.c.b16 %v3647, %v3647
        %v3664 = vpack.c.b16 %v3648, %v3648
        %v3665 = vpack.c.b16 %v3649, %v3649
        %v3666 = vpack.c.b16 %v3650, %v3650
        %v3667 = vpack.c.b16 %v3651, %v3651
        %v3668 = vpack.c.b16 %v3652, %v3652
        %v3669 = vpack.c.b16 %v3653, %v3653
        %v3670 = vpack.c.b16 %v3654, %v3654
        %v3671 = vpack.c.b16 %v3655, %v3655
        %3688 = vst [vmem:[%s341] sm:$0xf] %v3656
        %3689 = vst [vmem:[%s341 + $0x4] sm:$0xf] %v3657
        %3690 = vst [vmem:[%s341 + $0x8] sm:$0xf] %v3658
        %3691 = vst [vmem:[%s341 + $0xc] sm:$0xf] %v3659
        %3692 = vst [vmem:[%s341 + $0x10] sm:$0xf] %v3660
        %3693 = vst [vmem:[%s341 + $0x14] sm:$0xf] %v3661
        %3694 = vst [vmem:[%s341 + $0x18] sm:$0xf] %v3662
        %3695 = vst [vmem:[%s341 + $0x1c] sm:$0xf] %v3663
        %3696 = vst [vmem:[%s341 + $0x20] sm:$0xf] %v3664
        %3697 = vst [vmem:[%s341 + $0x24] sm:$0xf] %v3665
        %3698 = vst [vmem:[%s341 + $0x28] sm:$0xf] %v3666
        %3699 = vst [vmem:[%s341 + $0x2c] sm:$0xf] %v3667
        %3700 = vst [vmem:[%s341 + $0x30] sm:$0xf] %v3668
        %3701 = vst [vmem:[%s341 + $0x34] sm:$0xf] %v3669
        %3702 = vst [vmem:[%s341 + $0x38] sm:$0xf] %v3670
        %3703 = vst [vmem:[%s341 + $0x3c] sm:$0xf] %v3671
        %s3704 = sand.u32 %s186, 1
        %s3705 = scalar_lea.sflag [#allocation5], %s3704
        %s3706 = sand.u32 %s186, 1
        %s3707 = smul.addr %s3706, 64
        %s3708 = scalar_lea.vmem [#allocation11], %s3707
        // Predicated region
        $region65: #{tpu_custom_call.1} parent=47 // pred_check
          %p3709 = pneg %p196
        $region66: #{tpu_custom_call.1} parent=47 // pred_check_branch
          %3711 = sbr.rel (%p3709) target = $region68
        $region67: #{tpu_custom_call.1} parent=47 // pred_region
          %s3712 = smul.u32 2, %s26
          %s3714 = ssub.s32 1024, 1024
          %3715 = vsyncadd %s3705, %s3714
          %s3716 = smul.addr %s3712, 8
          %s3717 = smul.addr %s3716, 64
          %s3718 = scalar_lea.hbm %s7, %s3717
          %s3719 = sshll.u32 %s3708, 4
          %s3720 = int_to_ptr.vmem [resolvable:$true] %s3719
          %3725 = dma.vmem_to_hbm [thread:$0]  %s3720, 1024, %s3718, %s3705, 64, 64, 4
        $region68: #{tpu_custom_call.1} parent=47 // pred_fallthru
          _
      $region48: #{tpu_custom_call.1} parent=5 // pred_fallthru
        _
      %p3726 = scmp.le.s32.totalorder 2, %s21
      // Predicated region
      $region69: #{tpu_custom_call.1} parent=5 // pred_check
        %p3727 = pneg %p3726
      $region70: #{tpu_custom_call.1} parent=5 // pred_check_branch
        %3729 = sbr.rel (%p3727) target = $region72
      $region71: #{tpu_custom_call.1} parent=5 // pred_region
        %s3730 = ssub.s32 %s21, 2
        // Predicated region
        $region73: #{tpu_custom_call.1} parent=71 // pred_check
          %p3731 = pneg %p202
        $region74: #{tpu_custom_call.1} parent=71 // pred_check_branch
          %3733 = sbr.rel (%p3731) target = $region76
        $region75: #{tpu_custom_call.1} parent=71 // pred_region
          %s3734 = sand.u32 %s187, 1
          %s3735 = scalar_lea.sflag [#allocation5], %s3734
          %s3736 = sand.u32 %s187, 1
          %s3737 = smul.addr %s3736, 64
          %s3738 = scalar_lea.vmem [#allocation11], %s3737
          %3739 = dma.done %s3735, 1024
        $region76: #{tpu_custom_call.1} parent=71 // pred_fallthru
          _
      $region72: #{tpu_custom_call.1} parent=5 // pred_fallthru
        _
    $region6: #{tpu_custom_call.1} parent=1 // loop_footer
      %s25 = sadd.s32 1, %s21
    $region7: #{tpu_custom_call.1} parent=1 // loop_footer_branch
      %20 = sbr.rel target = $region3
    $region8: #{tpu_custom_call.1} parent=1 // loop_exit
      _
    %3740 = vsyncpa [#allocation4], 1
    %s3741 = scalar_lea.sflag [#allocation4], 1
    %3742 = vsyncpa %s3741, 1
    %3743 = vsyncpa [#allocation7], 1
    %3744 = vsyncpa [#allocation10], 1
    %3745 = vsyncpa [#allocation5], 1
    %s3746 = scalar_lea.sflag [#allocation5], 1
    %3747 = vsyncpa %s3746, 1

</llo_original>
